<compile_context>
chip_gen: v5e
topology: v5e:2x2
jax: 0.10.0
libtpu: 0.0.40
codegen_flags: <defaults>
</compile_context>

<pallas_src>
import functools

import jax
import jax.numpy as jnp
from jax.experimental import pallas as pl
from jax.experimental.pallas import tpu as pltpu


# On v6e/v7x set to jnp.bfloat16 for ~2x MXU throughput and half the operand
# traffic (f32 accumulate via preferred_element_type).  Kept f32 here so the
# output matches the f32 reference within the tight 1e-3 tolerance.
MXU_DTYPE = jnp.float32


# ----------------------------------------------------------------------------
# Kernel 1: conv stage.
#   Optional fused prelude (BN1-affine + swish on the interior, written into a
#   zero-halo VMEM scratch), then the KxK conv as ONE folded MXU matmul per
#   row tile (contraction K*K*C), with per-image BN statistics accumulated
#   from the live result and a single store of each output tile.
# ----------------------------------------------------------------------------
def _conv_stage_kernel(*refs, K, H, W, TH, prelude, pad_out, mxu_dtype):
    if prelude:
        xp_ref, aff_ref, w_ref, z_ref, sum_ref, sq_ref, col_ref, y_ref = refs
    else:
        xp_ref, w_ref, z_ref, sum_ref, sq_ref, col_ref = refs

    P = K // 2
    HP, WP = H + 2 * P, W + 2 * P
    C = xp_ref.shape[-1]
    cout = w_ref.shape[-1]
    KKC = K * K * C

    w_mat = w_ref[...].astype(mxu_dtype)                 # (K*K*C, cout)

    if prelude:
        # Fused BN1-affine + swish, applied to the INTERIOR only and written
        # into a zero-halo VMEM scratch (no iota mask, no swish of padding).
        aff = aff_ref[...]                                # (2, C): [scale; shift]
        scale = aff[0:1, :].reshape(1, 1, C)
        shift = aff[1:2, :].reshape(1, 1, C)
        xin = xp_ref[0, P:P + H, P:P + W, :]              # (H, W, C)
        yv = xin * scale + shift                          # VPU
        yv = yv * jax.nn.sigmoid(yv)                      # swish (EUP)
        zero_row = jnp.zeros((P, WP, C), jnp.float32)
        zero_col = jnp.zeros((HP, P, C), jnp.float32)
        y_ref[0:P, :, :] = zero_row
        y_ref[P + H:HP, :, :] = zero_row
        y_ref[:, 0:P, :] = zero_col
        y_ref[:, P + W:WP, :] = zero_col
        y_ref[P:P + H, P:P + W, :] = yv

        def slab(r0, dh, dw):
            return y_ref[r0 + dh:r0 + dh + TH, dw:dw + W, :]
    else:
        def slab(r0, dh, dw):
            return xp_ref[0, r0 + dh:r0 + dh + TH, dw:dw + W, :]

    if pad_out:
        # Emit the conv result directly in padded layout with a zero halo so
        # the next stage consumes it without a wrapper jnp.pad HBM pass.
        zr = jnp.zeros((P, WP, cout), jnp.float32)
        zc = jnp.zeros((HP, P, cout), jnp.float32)
        z_ref[0, 0:P, :, :] = zr
        z_ref[0, P + H:HP, :, :] = zr
        z_ref[0, :, 0:P, :] = zc
        z_ref[0, :, P + W:WP, :] = zc

    sum_acc = jnp.zeros((1, cout), jnp.float32)
    sq_acc = jnp.zeros((1, cout), jnp.float32)

    # Static loop over row tiles (TH divides H).  Each iteration: build the
    # (TH, W, K*K*C) shifted-slab operand in VMEM, issue ONE matmul, store
    # the tile ONCE, and fold the tile into the BN statistics while live.
    for r in range(H // TH):
        r0 = r * TH
        for dh in range(K):
            for dw in range(K):
                t = dh * K + dw
                col_ref[:, :, t * C:(t + 1) * C] = slab(r0, dh, dw)
        col = col_ref[...].reshape(TH * W, KKC).astype(mxu_dtype)
        z_tile = jnp.dot(col, w_mat, preferred_element_type=jnp.float32)
        sum_acc = sum_acc + jnp.sum(z_tile, axis=0, keepdims=True)
        sq_acc = sq_acc + jnp.sum(z_tile * z_tile, axis=0, keepdims=True)
        if pad_out:
            z_ref[0, P + r0:P + r0 + TH, P:P + W, :] = (
                z_tile.reshape(TH, W, cout))
        else:
            z_ref[0, r0 * W:(r0 + TH) * W, :] = z_tile

    sum_ref[0] = sum_acc
    sq_ref[0] = sq_acc


# ----------------------------------------------------------------------------
# Kernel 2: BN2-apply + residual add (lane-dense elementwise epilogue).
# ----------------------------------------------------------------------------
def _bn_residual_kernel(z_ref, aff_ref, res_ref, out_ref):
    aff = aff_ref[...]                                    # (2, lanes)
    out_ref[0] = z_ref[0] * aff[0:1, :] + aff[1:2, :] + res_ref[0]


# ----------------------------------------------------------------------------
# pallas_call wrappers.
# ----------------------------------------------------------------------------
def _conv_stage(x_pad, w_folded, *, K, H, W, affine=None, pad_out=False,
                mxu_dtype=MXU_DTYPE):
    """Conv (+ optional fused BN-affine+swish prelude). Returns (z, sum, sq)."""
    N, HP, WP, C = x_pad.shape
    KKC, cout = w_folded.shape
    prelude = affine is not None

    # Row-tile height: largest divisor of H keeping the folded (TH*W, K*K*C)
    # operand a few MB (VMEM-friendly on every generation, incl. v7x).
    TH = 1
    for cand in range(1, H + 1):
        if H % cand == 0 and cand * W <= 1024:
            TH = cand

    inputs = [x_pad] + ([affine] if prelude else []) + [w_folded]
    in_specs = [pl.BlockSpec((1, HP, WP, C), lambda n: (n, 0, 0, 0))]
    if prelude:
        in_specs.append(pl.BlockSpec((2, C), lambda n: (0, 0)))
    in_specs.append(pl.BlockSpec((KKC, cout), lambda n: (0, 0)))

    if pad_out:
        z_shape = jax.ShapeDtypeStruct((N, HP, WP, cout), jnp.float32)
        z_spec = pl.BlockSpec((1, HP, WP, cout), lambda n: (n, 0, 0, 0))
    else:
        z_shape = jax.ShapeDtypeStruct((N, H * W, cout), jnp.float32)
        z_spec = pl.BlockSpec((1, H * W, cout), lambda n: (n, 0, 0))

    out_shape = (
        z_shape,
        jax.ShapeDtypeStruct((N, 1, cout), jnp.float32),   # per-image sum
        jax.ShapeDtypeStruct((N, 1, cout), jnp.float32),   # per-image sum sq
    )
    out_specs = (
        z_spec,
        pl.BlockSpec((1, 1, cout), lambda n: (n, 0, 0)),
        pl.BlockSpec((1, 1, cout), lambda n: (n, 0, 0)),
    )

    scratch = [pltpu.VMEM((TH, W, KKC), jnp.float32)]      # folded conv operand
    if prelude:
        scratch.append(pltpu.VMEM((HP, WP, C), jnp.float32))  # zero-halo y

    kernel = functools.partial(_conv_stage_kernel, K=K, H=H, W=W, TH=TH,
                               prelude=prelude, pad_out=pad_out,
                               mxu_dtype=mxu_dtype)
    return pl.pallas_call(
        kernel,
        grid=(N,),
        in_specs=in_specs,
        out_specs=out_specs,
        out_shape=out_shape,
        scratch_shapes=scratch,
        compiler_params=pltpu.CompilerParams(
            dimension_semantics=("parallel",)),
    )(*inputs)


def _bn_residual(z, affine, residual):
    N, L, Cw = z.shape
    big = pl.BlockSpec((1, L, Cw), lambda n: (n, 0, 0))
    return pl.pallas_call(
        _bn_residual_kernel,
        grid=(N,),
        in_specs=[big, pl.BlockSpec((2, Cw), lambda n: (0, 0)), big],
        out_specs=big,
        out_shape=jax.ShapeDtypeStruct((N, L, Cw), jnp.float32),
        compiler_params=pltpu.CompilerParams(
            dimension_semantics=("parallel",)),
    )(z, affine, residual)


def _bn_affine(sum_, sumsq, gamma, beta, count, eps=1e-5):
    """Fold batch stats + gamma/beta into a packed (2, C) [scale; shift].

    NOTE: E[x^2]-E[x]^2 in f32 (clamped at 0) — adequate at 1e-3 tolerance.
    """
    mean = jnp.sum(sum_, axis=(0, 1)) / count
    var = jnp.maximum(jnp.sum(sumsq, axis=(0, 1)) / count - mean * mean, 0.0)
    scale = gamma * jax.lax.rsqrt(var + eps)
    shift = beta - mean * scale
    return jnp.stack([scale, shift], axis=0).astype(jnp.float32)


@functools.partial(jax.jit, static_argnames=("kernel",))
def residual_block_pallas(x_nchw, params, *, kernel):
    """ResidualBlock forward. x_nchw: (N, C, H, W) float32. Returns NCHW."""
    k = kernel
    p = k // 2
    n, c, h, w = x_nchw.shape
    count = n * h * w

    # NCHW -> NHWC exactly once (channels-last inside the kernels).
    x = jnp.transpose(x_nchw, (0, 2, 3, 1)).astype(jnp.float32)
    # TODO(synk): fold this pad into stage 1 (boundary-aware taps); it
    # typically fuses with the transpose so it is not a separate HBM pass.
    x_pad = jnp.pad(x, ((0, 0), (p, p), (p, p), (0, 0)))

    # HWIO conv weights -> folded (K*K*Cin, Cout) matrices (tap-major order
    # matches the in-kernel col build: t = dh*K + dw, channels minor).
    w1 = params["w1"].reshape(k * k * c, -1).astype(jnp.float32)
    w2 = params["w2"].reshape(k * k * c, -1).astype(jnp.float32)
    # NOTE: conv biases b1/b2 are NOT fed to the kernels: under training-mode
    # BatchNorm a per-channel bias cancels exactly (BN(conv+b) == BN(conv)).

    # Stage 1: conv1, emitted directly in zero-halo padded layout (+ stats).
    z1p, s1, q1 = _conv_stage(x_pad, w1, K=k, H=h, W=w, pad_out=True)
    aff1 = _bn_affine(s1, q1, params["g1"], params["be1"], count)

    # Stage 2: BN1-apply + swish + conv2, fused; `y` never leaves VMEM.
    z2, s2, q2 = _conv_stage(z1p, w2, K=k, H=h, W=w, affine=aff1)
    aff2 = _bn_affine(s2, q2, params["g2"], params["be2"], count)

    # Stage 3: BN2-apply + residual add, lane-dense (..., 128) view when the
    # shapes allow it (unmasked full-width stores through the epilogue).
    hwc = h * w * c
    if hwc % 128 == 0 and 128 % c == 0:
        lanes = 128
        z2v = z2.reshape(n, hwc // lanes, lanes)
        resv = x.reshape(n, hwc // lanes, lanes)
        aff2v = jnp.tile(aff2, (1, lanes // c))           # lane l -> channel l % c
    else:
        z2v = z2
        resv = x.reshape(n, h * w, c)
        aff2v = aff2
    out = _bn_residual(z2v, aff2v, resv)
    return jnp.transpose(out.reshape(n, h, w, c), (0, 3, 1, 2))


# ----------------------------------------------------------------------------
# Pure-JAX reference (independent path via lax.conv, WITH conv biases) for the
# correctness check; training-mode BatchNorm (batch stats, biased var, eps=1e-5).
# ----------------------------------------------------------------------------
def residual_block_ref(x_nchw, params):
    x = jnp.transpose(x_nchw, (0, 2, 3, 1)).astype(jnp.float32)

    def conv(a, wt, bias):
        out = jax.lax.conv_general_dilated(
            a, wt, window_strides=(1, 1), padding="SAME",
            dimension_numbers=("NHWC", "HWIO", "NHWC"),
        )
        return out + bias

    def bn(a, g, be):
        mean = jnp.mean(a, axis=(0, 1, 2))
        var = jnp.mean(jnp.square(a - mean), axis=(0, 1, 2))
        return g * (a - mean) / jnp.sqrt(var + 1e-5) + be

    y = bn(conv(x, params["w1"], params["b1"]), params["g1"], params["be1"])
    y = y * jax.nn.sigmoid(y)
    z = bn(conv(y, params["w2"], params["b2"]), params["g2"], params["be2"])
    return jnp.transpose(z + x, (0, 3, 1, 2))


# ----------------------------------------------------------------------------
if __name__ == "__main__":
    N, C, H, W = 2, 8, 16, 16          # in_channels == out_channels, stride = 1
    K = 3

    key = jax.random.PRNGKey(0)
    keys = jax.random.split(key, 9)
    x = jax.random.normal(keys[0], (N, C, H, W), dtype=jnp.float32)

    params = {
        # Conv weights in HWIO layout (K, K, Cin, Cout), deterministic init.
        "w1": 0.1 * jax.random.normal(keys[1], (K, K, C, C), dtype=jnp.float32),
        "b1": 0.05 * jax.random.normal(keys[2], (C,), dtype=jnp.float32),
        "w2": 0.1 * jax.random.normal(keys[3], (K, K, C, C), dtype=jnp.float32),
        "b2": 0.05 * jax.random.normal(keys[4], (C,), dtype=jnp.float32),
        # BatchNorm affine params.
        "g1": 1.0 + 0.1 * jax.random.normal(keys[5], (C,), dtype=jnp.float32),
        "be1": 0.1 * jax.random.normal(keys[6], (C,), dtype=jnp.float32),
        "g2": 1.0 + 0.1 * jax.random.normal(keys[7], (C,), dtype=jnp.float32),
        "be2": 0.1 * jax.random.normal(keys[8], (C,), dtype=jnp.float32),
    }

    out = jax.block_until_ready(residual_block_pallas(x, params, kernel=K))
    ref = jax.block_until_ready(residual_block_ref(x, params))

    assert out.shape == x.shape, (out.shape, x.shape)
    assert jnp.allclose(out, ref, atol=1e-3, rtol=1e-3), (
        float(jnp.max(jnp.abs(out - ref)))
    )
    print("KERNEL_OK")
</pallas_src>

<mosaic_0001>
module attributes {stable_mosaic.version = 11 : i64} {
  func.func @_conv_stage_kernel(%arg0: i32, %arg1: memref<1x18x18x8xf32, #tpu.memory_space<vmem>>, %arg2: memref<72x8xf32, #tpu.memory_space<vmem>>, %arg3: memref<1x18x18x8xf32, #tpu.memory_space<vmem>>, %arg4: memref<1x1x8xf32, #tpu.memory_space<vmem>>, %arg5: memref<1x1x8xf32, #tpu.memory_space<vmem>>, %arg6: memref<16x16x72xf32, #tpu.memory_space<vmem>>) attributes {dimension_semantics = [#tpu.dimension_semantics<parallel>], iteration_bounds = array<i64: 2>, scalar_prefetch = 0 : i64, scratch_operands = 1 : i64, tpu.core_type = #tpu.core_type<tc>, window_params = [{transform_indices = @transform_0, window_bounds = array<i64: 1, 18, 18, 8>}, {pipeline_mode = #tpu.pipeline_mode<synchronous>, transform_indices = @transform_1, window_bounds = array<i64: 72, 8>}, {transform_indices = @transform_2, window_bounds = array<i64: 1, 18, 18, 8>}, {transform_indices = @transform_3, window_bounds = array<i64: 1, 1, 8>}, {transform_indices = @transform_4, window_bounds = array<i64: 1, 1, 8>}]} {
    %c0 = arith.constant 0 : index
    %c0_0 = arith.constant 0 : index
    %0 = vector.load %arg2[%c0, %c0_0] : memref<72x8xf32, #tpu.memory_space<vmem>>, vector<72x8xf32>
    %cst = arith.constant 0.000000e+00 : f32
    %1 = vector.broadcast %cst : f32 to vector<1x18x8xf32>
    %cst_1 = arith.constant 0.000000e+00 : f32
    %2 = vector.broadcast %cst_1 : f32 to vector<18x1x8xf32>
    %c0_2 = arith.constant 0 : index
    %c0_3 = arith.constant 0 : index
    %c0_4 = arith.constant 0 : index
    %c0_5 = arith.constant 0 : index
    %3 = vector.load %arg3[%c0_2, %c0_3, %c0_4, %c0_5] : memref<1x18x18x8xf32, #tpu.memory_space<vmem>>, vector<1x1x18x8xf32>
    %4 = vector.shape_cast %3 : vector<1x1x18x8xf32> to vector<1x18x8xf32>
    %5 = vector.shape_cast %1 : vector<1x18x8xf32> to vector<1x1x18x8xf32>
    tpu.vector_store %arg3[%c0_2, %c0_3, %c0_4, %c0_5], %5 {strides = array<i32>} : memref<1x18x18x8xf32, #tpu.memory_space<vmem>>, vector<1x1x18x8xf32>,
    %c0_6 = arith.constant 0 : index
    %c17 = arith.constant 17 : index
    %c0_7 = arith.constant 0 : index
    %c0_8 = arith.constant 0 : index
    %6 = vector.load %arg3[%c0_6, %c17, %c0_7, %c0_8] : memref<1x18x18x8xf32, #tpu.memory_space<vmem>>, vector<1x1x18x8xf32>
    %7 = vector.shape_cast %6 : vector<1x1x18x8xf32> to vector<1x18x8xf32>
    %8 = vector.shape_cast %1 : vector<1x18x8xf32> to vector<1x1x18x8xf32>
    tpu.vector_store %arg3[%c0_6, %c17, %c0_7, %c0_8], %8 {strides = array<i32>} : memref<1x18x18x8xf32, #tpu.memory_space<vmem>>, vector<1x1x18x8xf32>,
    %c0_9 = arith.constant 0 : index
    %c0_10 = arith.constant 0 : index
    %c0_11 = arith.constant 0 : index
    %c0_12 = arith.constant 0 : index
    %9 = vector.load %arg3[%c0_9, %c0_10, %c0_11, %c0_12] : memref<1x18x18x8xf32, #tpu.memory_space<vmem>>, vector<1x18x1x8xf32>
    %10 = vector.shape_cast %9 : vector<1x18x1x8xf32> to vector<18x1x8xf32>
    %11 = vector.shape_cast %2 : vector<18x1x8xf32> to vector<1x18x1x8xf32>
    tpu.vector_store %arg3[%c0_9, %c0_10, %c0_11, %c0_12], %11 {strides = array<i32>} : memref<1x18x18x8xf32, #tpu.memory_space<vmem>>, vector<1x18x1x8xf32>,
    %c0_13 = arith.constant 0 : index
    %c0_14 = arith.constant 0 : index
    %c17_15 = arith.constant 17 : index
    %c0_16 = arith.constant 0 : index
    %12 = vector.load %arg3[%c0_13, %c0_14, %c17_15, %c0_16] : memref<1x18x18x8xf32, #tpu.memory_space<vmem>>, vector<1x18x1x8xf32>
    %13 = vector.shape_cast %12 : vector<1x18x1x8xf32> to vector<18x1x8xf32>
    %14 = vector.shape_cast %2 : vector<18x1x8xf32> to vector<1x18x1x8xf32>
    tpu.vector_store %arg3[%c0_13, %c0_14, %c17_15, %c0_16], %14 {strides = array<i32>} : memref<1x18x18x8xf32, #tpu.memory_space<vmem>>, vector<1x18x1x8xf32>,
    %cst_17 = arith.constant 0.000000e+00 : f32
    %15 = vector.broadcast %cst_17 : f32 to vector<1x8xf32>
    %cst_18 = arith.constant 0.000000e+00 : f32
    %16 = vector.broadcast %cst_18 : f32 to vector<1x8xf32>
    %c0_19 = arith.constant 0 : index
    %c0_20 = arith.constant 0 : index
    %c0_21 = arith.constant 0 : index
    %c0_22 = arith.constant 0 : index
    %17 = vector.load %arg1[%c0_19, %c0_20, %c0_21, %c0_22] : memref<1x18x18x8xf32, #tpu.memory_space<vmem>>, vector<1x16x16x8xf32>
    %18 = vector.shape_cast %17 : vector<1x16x16x8xf32> to vector<16x16x8xf32>
    %c0_23 = arith.constant 0 : index
    %c0_24 = arith.constant 0 : index
    %c0_25 = arith.constant 0 : index
    %19 = vector.load %arg6[%c0_23, %c0_24, %c0_25] : memref<16x16x72xf32, #tpu.memory_space<vmem>>, vector<16x16x8xf32>
    tpu.vector_store %arg6[%c0_23, %c0_24, %c0_25], %18 {strides = array<i32>} : memref<16x16x72xf32, #tpu.memory_space<vmem>>, vector<16x16x8xf32>,
    %c0_26 = arith.constant 0 : index
    %c0_27 = arith.constant 0 : index
    %c1 = arith.constant 1 : index
    %c0_28 = arith.constant 0 : index
    %20 = vector.load %arg1[%c0_26, %c0_27, %c1, %c0_28] : memref<1x18x18x8xf32, #tpu.memory_space<vmem>>, vector<1x16x16x8xf32>
    %21 = vector.shape_cast %20 : vector<1x16x16x8xf32> to vector<16x16x8xf32>
    %c0_29 = arith.constant 0 : index
    %c0_30 = arith.constant 0 : index
    %c8 = arith.constant 8 : index
    %22 = vector.load %arg6[%c0_29, %c0_30, %c8] : memref<16x16x72xf32, #tpu.memory_space<vmem>>, vector<16x16x8xf32>
    tpu.vector_store %arg6[%c0_29, %c0_30, %c8], %21 {strides = array<i32>} : memref<16x16x72xf32, #tpu.memory_space<vmem>>, vector<16x16x8xf32>,
    %c0_31 = arith.constant 0 : index
    %c0_32 = arith.constant 0 : index
    %c2 = arith.constant 2 : index
    %c0_33 = arith.constant 0 : index
    %23 = vector.load %arg1[%c0_31, %c0_32, %c2, %c0_33] : memref<1x18x18x8xf32, #tpu.memory_space<vmem>>, vector<1x16x16x8xf32>
    %24 = vector.shape_cast %23 : vector<1x16x16x8xf32> to vector<16x16x8xf32>
    %c0_34 = arith.constant 0 : index
    %c0_35 = arith.constant 0 : index
    %c16 = arith.constant 16 : index
    %25 = vector.load %arg6[%c0_34, %c0_35, %c16] : memref<16x16x72xf32, #tpu.memory_space<vmem>>, vector<16x16x8xf32>
    tpu.vector_store %arg6[%c0_34, %c0_35, %c16], %24 {strides = array<i32>} : memref<16x16x72xf32, #tpu.memory_space<vmem>>, vector<16x16x8xf32>,
    %c0_36 = arith.constant 0 : index
    %c1_37 = arith.constant 1 : index
    %c0_38 = arith.constant 0 : index
    %c0_39 = arith.constant 0 : index
    %26 = vector.load %arg1[%c0_36, %c1_37, %c0_38, %c0_39] : memref<1x18x18x8xf32, #tpu.memory_space<vmem>>, vector<1x16x16x8xf32>
    %27 = vector.shape_cast %26 : vector<1x16x16x8xf32> to vector<16x16x8xf32>
    %c0_40 = arith.constant 0 : index
    %c0_41 = arith.constant 0 : index
    %c24 = arith.constant 24 : index
    %28 = vector.load %arg6[%c0_40, %c0_41, %c24] : memref<16x16x72xf32, #tpu.memory_space<vmem>>, vector<16x16x8xf32>
    tpu.vector_store %arg6[%c0_40, %c0_41, %c24], %27 {strides = array<i32>} : memref<16x16x72xf32, #tpu.memory_space<vmem>>, vector<16x16x8xf32>,
    %c0_42 = arith.constant 0 : index
    %c1_43 = arith.constant 1 : index
    %c1_44 = arith.constant 1 : index
    %c0_45 = arith.constant 0 : index
    %29 = vector.load %arg1[%c0_42, %c1_43, %c1_44, %c0_45] : memref<1x18x18x8xf32, #tpu.memory_space<vmem>>, vector<1x16x16x8xf32>
    %30 = vector.shape_cast %29 : vector<1x16x16x8xf32> to vector<16x16x8xf32>
    %c0_46 = arith.constant 0 : index
    %c0_47 = arith.constant 0 : index
    %c32 = arith.constant 32 : index
    %31 = vector.load %arg6[%c0_46, %c0_47, %c32] : memref<16x16x72xf32, #tpu.memory_space<vmem>>, vector<16x16x8xf32>
    tpu.vector_store %arg6[%c0_46, %c0_47, %c32], %30 {strides = array<i32>} : memref<16x16x72xf32, #tpu.memory_space<vmem>>, vector<16x16x8xf32>,
    %c0_48 = arith.constant 0 : index
    %c1_49 = arith.constant 1 : index
    %c2_50 = arith.constant 2 : index
    %c0_51 = arith.constant 0 : index
    %32 = vector.load %arg1[%c0_48, %c1_49, %c2_50, %c0_51] : memref<1x18x18x8xf32, #tpu.memory_space<vmem>>, vector<1x16x16x8xf32>
    %33 = vector.shape_cast %32 : vector<1x16x16x8xf32> to vector<16x16x8xf32>
    %c0_52 = arith.constant 0 : index
    %c0_53 = arith.constant 0 : index
    %c40 = arith.constant 40 : index
    %34 = vector.load %arg6[%c0_52, %c0_53, %c40] : memref<16x16x72xf32, #tpu.memory_space<vmem>>, vector<16x16x8xf32>
    tpu.vector_store %arg6[%c0_52, %c0_53, %c40], %33 {strides = array<i32>} : memref<16x16x72xf32, #tpu.memory_space<vmem>>, vector<16x16x8xf32>,
    %c0_54 = arith.constant 0 : index
    %c2_55 = arith.constant 2 : index
    %c0_56 = arith.constant 0 : index
    %c0_57 = arith.constant 0 : index
    %35 = vector.load %arg1[%c0_54, %c2_55, %c0_56, %c0_57] : memref<1x18x18x8xf32, #tpu.memory_space<vmem>>, vector<1x16x16x8xf32>
    %36 = vector.shape_cast %35 : vector<1x16x16x8xf32> to vector<16x16x8xf32>
    %c0_58 = arith.constant 0 : index
    %c0_59 = arith.constant 0 : index
    %c48 = arith.constant 48 : index
    %37 = vector.load %arg6[%c0_58, %c0_59, %c48] : memref<16x16x72xf32, #tpu.memory_space<vmem>>, vector<16x16x8xf32>
    tpu.vector_store %arg6[%c0_58, %c0_59, %c48], %36 {strides = array<i32>} : memref<16x16x72xf32, #tpu.memory_space<vmem>>, vector<16x16x8xf32>,
    %c0_60 = arith.constant 0 : index
    %c2_61 = arith.constant 2 : index
    %c1_62 = arith.constant 1 : index
    %c0_63 = arith.constant 0 : index
    %38 = vector.load %arg1[%c0_60, %c2_61, %c1_62, %c0_63] : memref<1x18x18x8xf32, #tpu.memory_space<vmem>>, vector<1x16x16x8xf32>
    %39 = vector.shape_cast %38 : vector<1x16x16x8xf32> to vector<16x16x8xf32>
    %c0_64 = arith.constant 0 : index
    %c0_65 = arith.constant 0 : index
    %c56 = arith.constant 56 : index
    %40 = vector.load %arg6[%c0_64, %c0_65, %c56] : memref<16x16x72xf32, #tpu.memory_space<vmem>>, vector<16x16x8xf32>
    tpu.vector_store %arg6[%c0_64, %c0_65, %c56], %39 {strides = array<i32>} : memref<16x16x72xf32, #tpu.memory_space<vmem>>, vector<16x16x8xf32>,
    %c0_66 = arith.constant 0 : index
    %c2_67 = arith.constant 2 : index
    %c2_68 = arith.constant 2 : index
    %c0_69 = arith.constant 0 : index
    %41 = vector.load %arg1[%c0_66, %c2_67, %c2_68, %c0_69] : memref<1x18x18x8xf32, #tpu.memory_space<vmem>>, vector<1x16x16x8xf32>
    %42 = vector.shape_cast %41 : vector<1x16x16x8xf32> to vector<16x16x8xf32>
    %c0_70 = arith.constant 0 : index
    %c0_71 = arith.constant 0 : index
    %c64 = arith.constant 64 : index
    %43 = vector.load %arg6[%c0_70, %c0_71, %c64] : memref<16x16x72xf32, #tpu.memory_space<vmem>>, vector<16x16x8xf32>
    tpu.vector_store %arg6[%c0_70, %c0_71, %c64], %42 {strides = array<i32>} : memref<16x16x72xf32, #tpu.memory_space<vmem>>, vector<16x16x8xf32>,
    %c0_72 = arith.constant 0 : index
    %c0_73 = arith.constant 0 : index
    %c0_74 = arith.constant 0 : index
    %44 = vector.load %arg6[%c0_72, %c0_73, %c0_74] : memref<16x16x72xf32, #tpu.memory_space<vmem>>, vector<16x16x72xf32>
    %45 = vector.shape_cast %44 : vector<16x16x72xf32> to vector<256x72xf32>
    %cst_75 = arith.constant dense<0.000000e+00> : vector<256x8xf32>
    %46 = tpu.matmul %45, %0, %cst_75 {dimension_numbers = #tpu.dot_dimension_numbers<[1], [0], [0], [1], [0, 0, 1, 1], [], []>} : vector<256x72xf32>, vector<72x8xf32>, vector<256x8xf32> -> vector<256x8xf32>
    %cst_76 = arith.constant dense<0.000000e+00> : vector<8xf32>
    %47 = vector.multi_reduction <add>, %46, %cst_76 [0] : vector<256x8xf32> to vector<8xf32>
    %48 = vector.shape_cast %47 : vector<8xf32> to vector<1x8xf32>
    %49 = arith.addf %15, %48 : vector<1x8xf32>
    %50 = arith.mulf %46, %46 : vector<256x8xf32>
    %cst_77 = arith.constant dense<0.000000e+00> : vector<8xf32>
    %51 = vector.multi_reduction <add>, %50, %cst_77 [0] : vector<256x8xf32> to vector<8xf32>
    %52 = vector.shape_cast %51 : vector<8xf32> to vector<1x8xf32>
    %53 = arith.addf %16, %52 : vector<1x8xf32>
    %54 = vector.shape_cast %46 : vector<256x8xf32> to vector<16x16x8xf32>
    %c0_78 = arith.constant 0 : index
    %c1_79 = arith.constant 1 : index
    %c1_80 = arith.constant 1 : index
    %c0_81 = arith.constant 0 : index
    %55 = vector.load %arg3[%c0_78, %c1_79, %c1_80, %c0_81] : memref<1x18x18x8xf32, #tpu.memory_space<vmem>>, vector<1x16x16x8xf32>
    %56 = vector.shape_cast %55 : vector<1x16x16x8xf32> to vector<16x16x8xf32>
    %57 = vector.shape_cast %54 : vector<16x16x8xf32> to vector<1x16x16x8xf32>
    tpu.vector_store %arg3[%c0_78, %c1_79, %c1_80, %c0_81], %57 {strides = array<i32>} : memref<1x18x18x8xf32, #tpu.memory_space<vmem>>, vector<1x16x16x8xf32>,
    %c0_82 = arith.constant 0 : index
    %c0_83 = arith.constant 0 : index
    %c0_84 = arith.constant 0 : index
    %58 = vector.load %arg4[%c0_82, %c0_83, %c0_84] : memref<1x1x8xf32, #tpu.memory_space<vmem>>, vector<1x1x8xf32>
    %59 = vector.shape_cast %58 : vector<1x1x8xf32> to vector<1x8xf32>
    %60 = vector.shape_cast %49 : vector<1x8xf32> to vector<1x1x8xf32>
    tpu.vector_store %arg4[%c0_82, %c0_83, %c0_84], %60 {strides = array<i32>} : memref<1x1x8xf32, #tpu.memory_space<vmem>>, vector<1x1x8xf32>,
    %c0_85 = arith.constant 0 : index
    %c0_86 = arith.constant 0 : index
    %c0_87 = arith.constant 0 : index
    %61 = vector.load %arg5[%c0_85, %c0_86, %c0_87] : memref<1x1x8xf32, #tpu.memory_space<vmem>>, vector<1x1x8xf32>
    %62 = vector.shape_cast %61 : vector<1x1x8xf32> to vector<1x8xf32>
    %63 = vector.shape_cast %53 : vector<1x8xf32> to vector<1x1x8xf32>
    tpu.vector_store %arg5[%c0_85, %c0_86, %c0_87], %63 {strides = array<i32>} : memref<1x1x8xf32, #tpu.memory_space<vmem>>, vector<1x1x8xf32>,
    return
  }
  func.func @transform_0(%arg0: i32) -> (i32, i32, i32, i32) {
    %c0_i32 = arith.constant 0 : i32
    %c0_i32_0 = arith.constant 0 : i32
    %c0_i32_1 = arith.constant 0 : i32
    %c0_i32_2 = arith.constant 0 : i32
    return %arg0, %c0_i32, %c0_i32_0, %c0_i32_1 : i32, i32, i32, i32
  }
  func.func @transform_1(%arg0: i32) -> (i32, i32) {
    %c0_i32 = arith.constant 0 : i32
    %c0_i32_0 = arith.constant 0 : i32
    %c0_i32_1 = arith.constant 0 : i32
    return %c0_i32, %c0_i32_0 : i32, i32
  }
  func.func @transform_2(%arg0: i32) -> (i32, i32, i32, i32) {
    %c0_i32 = arith.constant 0 : i32
    %c0_i32_0 = arith.constant 0 : i32
    %c0_i32_1 = arith.constant 0 : i32
    %c0_i32_2 = arith.constant 0 : i32
    return %arg0, %c0_i32, %c0_i32_0, %c0_i32_1 : i32, i32, i32, i32
  }
  func.func @transform_3(%arg0: i32) -> (i32, i32, i32) {
    %c0_i32 = arith.constant 0 : i32
    %c0_i32_0 = arith.constant 0 : i32
    %c0_i32_1 = arith.constant 0 : i32
    return %arg0, %c0_i32, %c0_i32_0 : i32, i32, i32
  }
  func.func @transform_4(%arg0: i32) -> (i32, i32, i32) {
    %c0_i32 = arith.constant 0 : i32
    %c0_i32_0 = arith.constant 0 : i32
    %c0_i32_1 = arith.constant 0 : i32
    return %arg0, %c0_i32, %c0_i32_0 : i32, i32, i32
  }
}

module attributes {stable_mosaic.version = 11 : i64} {
  func.func @_conv_stage_kernel(%arg0: i32, %arg1: memref<1x18x18x8xf32, #tpu.memory_space<vmem>>, %arg2: memref<2x8xf32, #tpu.memory_space<vmem>>, %arg3: memref<72x8xf32, #tpu.memory_space<vmem>>, %arg4: memref<1x256x8xf32, #tpu.memory_space<vmem>>, %arg5: memref<1x1x8xf32, #tpu.memory_space<vmem>>, %arg6: memref<1x1x8xf32, #tpu.memory_space<vmem>>, %arg7: memref<16x16x72xf32, #tpu.memory_space<vmem>>, %arg8: memref<18x18x8xf32, #tpu.memory_space<vmem>>) attributes {dimension_semantics = [#tpu.dimension_semantics<parallel>], iteration_bounds = array<i64: 2>, scalar_prefetch = 0 : i64, scratch_operands = 2 : i64, tpu.core_type = #tpu.core_type<tc>, window_params = [{transform_indices = @transform_0, window_bounds = array<i64: 1, 18, 18, 8>}, {pipeline_mode = #tpu.pipeline_mode<synchronous>, transform_indices = @transform_1, window_bounds = array<i64: 2, 8>}, {pipeline_mode = #tpu.pipeline_mode<synchronous>, transform_indices = @transform_2, window_bounds = array<i64: 72, 8>}, {transform_indices = @transform_3, window_bounds = array<i64: 1, 256, 8>}, {transform_indices = @transform_4, window_bounds = array<i64: 1, 1, 8>}, {transform_indices = @transform_5, window_bounds = array<i64: 1, 1, 8>}]} {
    %c0 = arith.constant 0 : index
    %c0_0 = arith.constant 0 : index
    %0 = vector.load %arg3[%c0, %c0_0] : memref<72x8xf32, #tpu.memory_space<vmem>>, vector<72x8xf32>
    %c0_1 = arith.constant 0 : index
    %c0_2 = arith.constant 0 : index
    %1 = vector.load %arg2[%c0_1, %c0_2] : memref<2x8xf32, #tpu.memory_space<vmem>>, vector<2x8xf32>
    %2 = vector.extract_strided_slice %1 {offsets = [0, 0], sizes = [1, 8], strides = [1, 1]} : vector<2x8xf32> to vector<1x8xf32>
    %3 = vector.shape_cast %2 : vector<1x8xf32> to vector<1x1x8xf32>
    %4 = vector.extract_strided_slice %1 {offsets = [1, 0], sizes = [1, 8], strides = [1, 1]} : vector<2x8xf32> to vector<1x8xf32>
    %5 = vector.shape_cast %4 : vector<1x8xf32> to vector<1x1x8xf32>
    %c0_3 = arith.constant 0 : index
    %c1 = arith.constant 1 : index
    %c1_4 = arith.constant 1 : index
    %c0_5 = arith.constant 0 : index
    %6 = vector.load %arg1[%c0_3, %c1, %c1_4, %c0_5] : memref<1x18x18x8xf32, #tpu.memory_space<vmem>>, vector<1x16x16x8xf32>
    %7 = vector.shape_cast %6 : vector<1x16x16x8xf32> to vector<16x16x8xf32>
    %8 = vector.broadcast %3 : vector<1x1x8xf32> to vector<16x16x8xf32>
    %9 = arith.mulf %7, %8 : vector<16x16x8xf32>
    %10 = vector.broadcast %5 : vector<1x1x8xf32> to vector<16x16x8xf32>
    %11 = arith.addf %9, %10 : vector<16x16x8xf32>
    %12 = arith.negf %11 : vector<16x16x8xf32>
    %13 = math.exp %12 : vector<16x16x8xf32>
    %cst = arith.constant 1.000000e+00 : f32
    %14 = vector.broadcast %cst : f32 to vector<16x16x8xf32>
    %15 = arith.addf %14, %13 : vector<16x16x8xf32>
    %16 = arith.divf %14, %15 : vector<16x16x8xf32>
    %17 = arith.mulf %11, %16 : vector<16x16x8xf32>
    %cst_6 = arith.constant 0.000000e+00 : f32
    %18 = vector.broadcast %cst_6 : f32 to vector<1x18x8xf32>
    %cst_7 = arith.constant 0.000000e+00 : f32
    %19 = vector.broadcast %cst_7 : f32 to vector<18x1x8xf32>
    %c0_8 = arith.constant 0 : index
    %c0_9 = arith.constant 0 : index
    %c0_10 = arith.constant 0 : index
    %20 = vector.load %arg8[%c0_8, %c0_9, %c0_10] : memref<18x18x8xf32, #tpu.memory_space<vmem>>, vector<1x18x8xf32>
    tpu.vector_store %arg8[%c0_8, %c0_9, %c0_10], %18 {strides = array<i32>} : memref<18x18x8xf32, #tpu.memory_space<vmem>>, vector<1x18x8xf32>,
    %c17 = arith.constant 17 : index
    %c0_11 = arith.constant 0 : index
    %c0_12 = arith.constant 0 : index
    %21 = vector.load %arg8[%c17, %c0_11, %c0_12] : memref<18x18x8xf32, #tpu.memory_space<vmem>>, vector<1x18x8xf32>
    tpu.vector_store %arg8[%c17, %c0_11, %c0_12], %18 {strides = array<i32>} : memref<18x18x8xf32, #tpu.memory_space<vmem>>, vector<1x18x8xf32>,
    %c0_13 = arith.constant 0 : index
    %c0_14 = arith.constant 0 : index
    %c0_15 = arith.constant 0 : index
    %22 = vector.load %arg8[%c0_13, %c0_14, %c0_15] : memref<18x18x8xf32, #tpu.memory_space<vmem>>, vector<18x1x8xf32>
    tpu.vector_store %arg8[%c0_13, %c0_14, %c0_15], %19 {strides = array<i32>} : memref<18x18x8xf32, #tpu.memory_space<vmem>>, vector<18x1x8xf32>,
    %c0_16 = arith.constant 0 : index
    %c17_17 = arith.constant 17 : index
    %c0_18 = arith.constant 0 : index
    %23 = vector.load %arg8[%c0_16, %c17_17, %c0_18] : memref<18x18x8xf32, #tpu.memory_space<vmem>>, vector<18x1x8xf32>
    tpu.vector_store %arg8[%c0_16, %c17_17, %c0_18], %19 {strides = array<i32>} : memref<18x18x8xf32, #tpu.memory_space<vmem>>, vector<18x1x8xf32>,
    %c1_19 = arith.constant 1 : index
    %c1_20 = arith.constant 1 : index
    %c0_21 = arith.constant 0 : index
    %24 = vector.load %arg8[%c1_19, %c1_20, %c0_21] : memref<18x18x8xf32, #tpu.memory_space<vmem>>, vector<16x16x8xf32>
    tpu.vector_store %arg8[%c1_19, %c1_20, %c0_21], %17 {strides = array<i32>} : memref<18x18x8xf32, #tpu.memory_space<vmem>>, vector<16x16x8xf32>,
    %cst_22 = arith.constant 0.000000e+00 : f32
    %25 = vector.broadcast %cst_22 : f32 to vector<1x8xf32>
    %cst_23 = arith.constant 0.000000e+00 : f32
    %26 = vector.broadcast %cst_23 : f32 to vector<1x8xf32>
    %c0_24 = arith.constant 0 : index
    %c0_25 = arith.constant 0 : index
    %c0_26 = arith.constant 0 : index
    %27 = vector.load %arg8[%c0_24, %c0_25, %c0_26] : memref<18x18x8xf32, #tpu.memory_space<vmem>>, vector<16x16x8xf32>
    %c0_27 = arith.constant 0 : index
    %c0_28 = arith.constant 0 : index
    %c0_29 = arith.constant 0 : index
    %28 = vector.load %arg7[%c0_27, %c0_28, %c0_29] : memref<16x16x72xf32, #tpu.memory_space<vmem>>, vector<16x16x8xf32>
    tpu.vector_store %arg7[%c0_27, %c0_28, %c0_29], %27 {strides = array<i32>} : memref<16x16x72xf32, #tpu.memory_space<vmem>>, vector<16x16x8xf32>,
    %c0_30 = arith.constant 0 : index
    %c1_31 = arith.constant 1 : index
    %c0_32 = arith.constant 0 : index
    %29 = vector.load %arg8[%c0_30, %c1_31, %c0_32] : memref<18x18x8xf32, #tpu.memory_space<vmem>>, vector<16x16x8xf32>
    %c0_33 = arith.constant 0 : index
    %c0_34 = arith.constant 0 : index
    %c8 = arith.constant 8 : index
    %30 = vector.load %arg7[%c0_33, %c0_34, %c8] : memref<16x16x72xf32, #tpu.memory_space<vmem>>, vector<16x16x8xf32>
    tpu.vector_store %arg7[%c0_33, %c0_34, %c8], %29 {strides = array<i32>} : memref<16x16x72xf32, #tpu.memory_space<vmem>>, vector<16x16x8xf32>,
    %c0_35 = arith.constant 0 : index
    %c2 = arith.constant 2 : index
    %c0_36 = arith.constant 0 : index
    %31 = vector.load %arg8[%c0_35, %c2, %c0_36] : memref<18x18x8xf32, #tpu.memory_space<vmem>>, vector<16x16x8xf32>
    %c0_37 = arith.constant 0 : index
    %c0_38 = arith.constant 0 : index
    %c16 = arith.constant 16 : index
    %32 = vector.load %arg7[%c0_37, %c0_38, %c16] : memref<16x16x72xf32, #tpu.memory_space<vmem>>, vector<16x16x8xf32>
    tpu.vector_store %arg7[%c0_37, %c0_38, %c16], %31 {strides = array<i32>} : memref<16x16x72xf32, #tpu.memory_space<vmem>>, vector<16x16x8xf32>,
    %c1_39 = arith.constant 1 : index
    %c0_40 = arith.constant 0 : index
    %c0_41 = arith.constant 0 : index
    %33 = vector.load %arg8[%c1_39, %c0_40, %c0_41] : memref<18x18x8xf32, #tpu.memory_space<vmem>>, vector<16x16x8xf32>
    %c0_42 = arith.constant 0 : index
    %c0_43 = arith.constant 0 : index
    %c24 = arith.constant 24 : index
    %34 = vector.load %arg7[%c0_42, %c0_43, %c24] : memref<16x16x72xf32, #tpu.memory_space<vmem>>, vector<16x16x8xf32>
    tpu.vector_store %arg7[%c0_42, %c0_43, %c24], %33 {strides = array<i32>} : memref<16x16x72xf32, #tpu.memory_space<vmem>>, vector<16x16x8xf32>,
    %c1_44 = arith.constant 1 : index
    %c1_45 = arith.constant 1 : index
    %c0_46 = arith.constant 0 : index
    %35 = vector.load %arg8[%c1_44, %c1_45, %c0_46] : memref<18x18x8xf32, #tpu.memory_space<vmem>>, vector<16x16x8xf32>
    %c0_47 = arith.constant 0 : index
    %c0_48 = arith.constant 0 : index
    %c32 = arith.constant 32 : index
    %36 = vector.load %arg7[%c0_47, %c0_48, %c32] : memref<16x16x72xf32, #tpu.memory_space<vmem>>, vector<16x16x8xf32>
    tpu.vector_store %arg7[%c0_47, %c0_48, %c32], %35 {strides = array<i32>} : memref<16x16x72xf32, #tpu.memory_space<vmem>>, vector<16x16x8xf32>,
    %c1_49 = arith.constant 1 : index
    %c2_50 = arith.constant 2 : index
    %c0_51 = arith.constant 0 : index
    %37 = vector.load %arg8[%c1_49, %c2_50, %c0_51] : memref<18x18x8xf32, #tpu.memory_space<vmem>>, vector<16x16x8xf32>
    %c0_52 = arith.constant 0 : index
    %c0_53 = arith.constant 0 : index
    %c40 = arith.constant 40 : index
    %38 = vector.load %arg7[%c0_52, %c0_53, %c40] : memref<16x16x72xf32, #tpu.memory_space<vmem>>, vector<16x16x8xf32>
    tpu.vector_store %arg7[%c0_52, %c0_53, %c40], %37 {strides = array<i32>} : memref<16x16x72xf32, #tpu.memory_space<vmem>>, vector<16x16x8xf32>,
    %c2_54 = arith.constant 2 : index
    %c0_55 = arith.constant 0 : index
    %c0_56 = arith.constant 0 : index
    %39 = vector.load %arg8[%c2_54, %c0_55, %c0_56] : memref<18x18x8xf32, #tpu.memory_space<vmem>>, vector<16x16x8xf32>
    %c0_57 = arith.constant 0 : index
    %c0_58 = arith.constant 0 : index
    %c48 = arith.constant 48 : index
    %40 = vector.load %arg7[%c0_57, %c0_58, %c48] : memref<16x16x72xf32, #tpu.memory_space<vmem>>, vector<16x16x8xf32>
    tpu.vector_store %arg7[%c0_57, %c0_58, %c48], %39 {strides = array<i32>} : memref<16x16x72xf32, #tpu.memory_space<vmem>>, vector<16x16x8xf32>,
    %c2_59 = arith.constant 2 : index
    %c1_60 = arith.constant 1 : index
    %c0_61 = arith.constant 0 : index
    %41 = vector.load %arg8[%c2_59, %c1_60, %c0_61] : memref<18x18x8xf32, #tpu.memory_space<vmem>>, vector<16x16x8xf32>
    %c0_62 = arith.constant 0 : index
    %c0_63 = arith.constant 0 : index
    %c56 = arith.constant 56 : index
    %42 = vector.load %arg7[%c0_62, %c0_63, %c56] : memref<16x16x72xf32, #tpu.memory_space<vmem>>, vector<16x16x8xf32>
    tpu.vector_store %arg7[%c0_62, %c0_63, %c56], %41 {strides = array<i32>} : memref<16x16x72xf32, #tpu.memory_space<vmem>>, vector<16x16x8xf32>,
    %c2_64 = arith.constant 2 : index
    %c2_65 = arith.constant 2 : index
    %c0_66 = arith.constant 0 : index
    %43 = vector.load %arg8[%c2_64, %c2_65, %c0_66] : memref<18x18x8xf32, #tpu.memory_space<vmem>>, vector<16x16x8xf32>
    %c0_67 = arith.constant 0 : index
    %c0_68 = arith.constant 0 : index
    %c64 = arith.constant 64 : index
    %44 = vector.load %arg7[%c0_67, %c0_68, %c64] : memref<16x16x72xf32, #tpu.memory_space<vmem>>, vector<16x16x8xf32>
    tpu.vector_store %arg7[%c0_67, %c0_68, %c64], %43 {strides = array<i32>} : memref<16x16x72xf32, #tpu.memory_space<vmem>>, vector<16x16x8xf32>,
    %c0_69 = arith.constant 0 : index
    %c0_70 = arith.constant 0 : index
    %c0_71 = arith.constant 0 : index
    %45 = vector.load %arg7[%c0_69, %c0_70, %c0_71] : memref<16x16x72xf32, #tpu.memory_space<vmem>>, vector<16x16x72xf32>
    %46 = vector.shape_cast %45 : vector<16x16x72xf32> to vector<256x72xf32>
    %cst_72 = arith.constant dense<0.000000e+00> : vector<256x8xf32>
    %47 = tpu.matmul %46, %0, %cst_72 {dimension_numbers = #tpu.dot_dimension_numbers<[1], [0], [0], [1], [0, 0, 1, 1], [], []>} : vector<256x72xf32>, vector<72x8xf32>, vector<256x8xf32> -> vector<256x8xf32>
    %cst_73 = arith.constant dense<0.000000e+00> : vector<8xf32>
    %48 = vector.multi_reduction <add>, %47, %cst_73 [0] : vector<256x8xf32> to vector<8xf32>
    %49 = vector.shape_cast %48 : vector<8xf32> to vector<1x8xf32>
    %50 = arith.addf %25, %49 : vector<1x8xf32>
    %51 = arith.mulf %47, %47 : vector<256x8xf32>
    %cst_74 = arith.constant dense<0.000000e+00> : vector<8xf32>
    %52 = vector.multi_reduction <add>, %51, %cst_74 [0] : vector<256x8xf32> to vector<8xf32>
    %53 = vector.shape_cast %52 : vector<8xf32> to vector<1x8xf32>
    %54 = arith.addf %26, %53 : vector<1x8xf32>
    %c0_75 = arith.constant 0 : index
    %c0_76 = arith.constant 0 : index
    %c0_77 = arith.constant 0 : index
    %55 = vector.load %arg4[%c0_75, %c0_76, %c0_77] : memref<1x256x8xf32, #tpu.memory_space<vmem>>, vector<1x256x8xf32>
    %56 = vector.shape_cast %55 : vector<1x256x8xf32> to vector<256x8xf32>
    %57 = vector.shape_cast %47 : vector<256x8xf32> to vector<1x256x8xf32>
    tpu.vector_store %arg4[%c0_75, %c0_76, %c0_77], %57 {strides = array<i32>} : memref<1x256x8xf32, #tpu.memory_space<vmem>>, vector<1x256x8xf32>,
    %c0_78 = arith.constant 0 : index
    %c0_79 = arith.constant 0 : index
    %c0_80 = arith.constant 0 : index
    %58 = vector.load %arg5[%c0_78, %c0_79, %c0_80] : memref<1x1x8xf32, #tpu.memory_space<vmem>>, vector<1x1x8xf32>
    %59 = vector.shape_cast %58 : vector<1x1x8xf32> to vector<1x8xf32>
    %60 = vector.shape_cast %50 : vector<1x8xf32> to vector<1x1x8xf32>
    tpu.vector_store %arg5[%c0_78, %c0_79, %c0_80], %60 {strides = array<i32>} : memref<1x1x8xf32, #tpu.memory_space<vmem>>, vector<1x1x8xf32>,
    %c0_81 = arith.constant 0 : index
    %c0_82 = arith.constant 0 : index
    %c0_83 = arith.constant 0 : index
    %61 = vector.load %arg6[%c0_81, %c0_82, %c0_83] : memref<1x1x8xf32, #tpu.memory_space<vmem>>, vector<1x1x8xf32>
    %62 = vector.shape_cast %61 : vector<1x1x8xf32> to vector<1x8xf32>
    %63 = vector.shape_cast %54 : vector<1x8xf32> to vector<1x1x8xf32>
    tpu.vector_store %arg6[%c0_81, %c0_82, %c0_83], %63 {strides = array<i32>} : memref<1x1x8xf32, #tpu.memory_space<vmem>>, vector<1x1x8xf32>,
    return
  }
  func.func @transform_0(%arg0: i32) -> (i32, i32, i32, i32) {
    %c0_i32 = arith.constant 0 : i32
    %c0_i32_0 = arith.constant 0 : i32
    %c0_i32_1 = arith.constant 0 : i32
    %c0_i32_2 = arith.constant 0 : i32
    return %arg0, %c0_i32, %c0_i32_0, %c0_i32_1 : i32, i32, i32, i32
  }
  func.func @transform_1(%arg0: i32) -> (i32, i32) {
    %c0_i32 = arith.constant 0 : i32
    %c0_i32_0 = arith.constant 0 : i32
    %c0_i32_1 = arith.constant 0 : i32
    return %c0_i32, %c0_i32_0 : i32, i32
  }
  func.func @transform_2(%arg0: i32) -> (i32, i32) {
    %c0_i32 = arith.constant 0 : i32
    %c0_i32_0 = arith.constant 0 : i32
    %c0_i32_1 = arith.constant 0 : i32
    return %c0_i32, %c0_i32_0 : i32, i32
  }
  func.func @transform_3(%arg0: i32) -> (i32, i32, i32) {
    %c0_i32 = arith.constant 0 : i32
    %c0_i32_0 = arith.constant 0 : i32
    %c0_i32_1 = arith.constant 0 : i32
    return %arg0, %c0_i32, %c0_i32_0 : i32, i32, i32
  }
  func.func @transform_4(%arg0: i32) -> (i32, i32, i32) {
    %c0_i32 = arith.constant 0 : i32
    %c0_i32_0 = arith.constant 0 : i32
    %c0_i32_1 = arith.constant 0 : i32
    return %arg0, %c0_i32, %c0_i32_0 : i32, i32, i32
  }
  func.func @transform_5(%arg0: i32) -> (i32, i32, i32) {
    %c0_i32 = arith.constant 0 : i32
    %c0_i32_0 = arith.constant 0 : i32
    %c0_i32_1 = arith.constant 0 : i32
    return %arg0, %c0_i32, %c0_i32_0 : i32, i32, i32
  }
}

module attributes {stable_mosaic.version = 11 : i64} {
  func.func @_bn_residual_kernel(%arg0: i32, %arg1: memref<1x16x128xf32, #tpu.memory_space<vmem>>, %arg2: memref<2x128xf32, #tpu.memory_space<vmem>>, %arg3: memref<1x16x128xf32, #tpu.memory_space<vmem>>, %arg4: memref<1x16x128xf32, #tpu.memory_space<vmem>>) attributes {dimension_semantics = [#tpu.dimension_semantics<parallel>], iteration_bounds = array<i64: 2>, scalar_prefetch = 0 : i64, scratch_operands = 0 : i64, tpu.core_type = #tpu.core_type<tc>, window_params = [{transform_indices = @transform_0, window_bounds = array<i64: 1, 16, 128>}, {pipeline_mode = #tpu.pipeline_mode<synchronous>, transform_indices = @transform_1, window_bounds = array<i64: 2, 128>}, {transform_indices = @transform_2, window_bounds = array<i64: 1, 16, 128>}, {transform_indices = @transform_3, window_bounds = array<i64: 1, 16, 128>}]} {
    %c0 = arith.constant 0 : index
    %c0_0 = arith.constant 0 : index
    %0 = vector.load %arg2[%c0, %c0_0] : memref<2x128xf32, #tpu.memory_space<vmem>>, vector<2x128xf32>
    %c0_1 = arith.constant 0 : index
    %c0_2 = arith.constant 0 : index
    %c0_3 = arith.constant 0 : index
    %1 = vector.load %arg1[%c0_1, %c0_2, %c0_3] : memref<1x16x128xf32, #tpu.memory_space<vmem>>, vector<1x16x128xf32>
    %2 = vector.shape_cast %1 : vector<1x16x128xf32> to vector<16x128xf32>
    %3 = vector.extract_strided_slice %0 {offsets = [0, 0], sizes = [1, 128], strides = [1, 1]} : vector<2x128xf32> to vector<1x128xf32>
    %4 = vector.broadcast %3 : vector<1x128xf32> to vector<16x128xf32>
    %5 = arith.mulf %2, %4 : vector<16x128xf32>
    %6 = vector.extract_strided_slice %0 {offsets = [1, 0], sizes = [1, 128], strides = [1, 1]} : vector<2x128xf32> to vector<1x128xf32>
    %7 = vector.broadcast %6 : vector<1x128xf32> to vector<16x128xf32>
    %8 = arith.addf %5, %7 : vector<16x128xf32>
    %c0_4 = arith.constant 0 : index
    %c0_5 = arith.constant 0 : index
    %c0_6 = arith.constant 0 : index
    %9 = vector.load %arg3[%c0_4, %c0_5, %c0_6] : memref<1x16x128xf32, #tpu.memory_space<vmem>>, vector<1x16x128xf32>
    %10 = vector.shape_cast %9 : vector<1x16x128xf32> to vector<16x128xf32>
    %11 = arith.addf %8, %10 : vector<16x128xf32>
    %c0_7 = arith.constant 0 : index
    %c0_8 = arith.constant 0 : index
    %c0_9 = arith.constant 0 : index
    %12 = vector.load %arg4[%c0_7, %c0_8, %c0_9] : memref<1x16x128xf32, #tpu.memory_space<vmem>>, vector<1x16x128xf32>
    %13 = vector.shape_cast %12 : vector<1x16x128xf32> to vector<16x128xf32>
    %14 = vector.shape_cast %11 : vector<16x128xf32> to vector<1x16x128xf32>
    tpu.vector_store %arg4[%c0_7, %c0_8, %c0_9], %14 {strides = array<i32>} : memref<1x16x128xf32, #tpu.memory_space<vmem>>, vector<1x16x128xf32>,
    return
  }
  func.func @transform_0(%arg0: i32) -> (i32, i32, i32) {
    %c0_i32 = arith.constant 0 : i32
    %c0_i32_0 = arith.constant 0 : i32
    %c0_i32_1 = arith.constant 0 : i32
    return %arg0, %c0_i32, %c0_i32_0 : i32, i32, i32
  }
  func.func @transform_1(%arg0: i32) -> (i32, i32) {
    %c0_i32 = arith.constant 0 : i32
    %c0_i32_0 = arith.constant 0 : i32
    %c0_i32_1 = arith.constant 0 : i32
    return %c0_i32, %c0_i32_0 : i32, i32
  }
  func.func @transform_2(%arg0: i32) -> (i32, i32, i32) {
    %c0_i32 = arith.constant 0 : i32
    %c0_i32_0 = arith.constant 0 : i32
    %c0_i32_1 = arith.constant 0 : i32
    return %arg0, %c0_i32, %c0_i32_0 : i32, i32, i32
  }
  func.func @transform_3(%arg0: i32) -> (i32, i32, i32) {
    %c0_i32 = arith.constant 0 : i32
    %c0_i32_0 = arith.constant 0 : i32
    %c0_i32_1 = arith.constant 0 : i32
    return %arg0, %c0_i32, %c0_i32_0 : i32, i32, i32
  }
}

</mosaic_0001>

<llo_original>
// kernel: tile.9
$region0: #{tile.9}
  %s0 = inlined_call_operand.vmem [shape: f32[2,16,8], index: 0, kind: input, shape index: {}]
  %s1 = inlined_call_operand.vmem [shape: f32[2,128], index: 1, kind: output, shape index: {}]
  $region1: #{tile.9} parent=0
    #allocation0 [shape = 'u8[4096]{0}', space=vmem, size = 0x1000, scoped, tag = 'scoped mem for output reshape']
    %s2 = smov 3
    %v3 = vld [vmem:[%s0] ss:$16 sm:%s2]
    %vm4 = vcmask 64512
    %5 = vst.msk [vmem:[#allocation0] sm:$0x3] %vm4, %v3
    %s6 = scalar_lea.vmem %s0, 15
    %s7 = smov 3
    %v8 = vld [vmem:[%s6] ss:$16 sm:%s7]
    %9 = vrot.lane.b32.xlu0 %v8, 120
    %v10 = vpop.permute.xlu0 %9
    %vm11 = vcmask 1048512
    %12 = vst.msk [vmem:[#allocation0] sm:$0x3] %vm11, %v10
    %s13 = scalar_lea.vmem %s0, 14
    %s14 = smov 3
    %v15 = vld [vmem:[%s13] ss:$16 sm:%s14]
    %16 = vrot.lane.b32.xlu0 %v15, 112
    %v17 = vpop.permute.xlu0 %16
    %vm18 = vcmask 982912
    %19 = vst.msk [vmem:[#allocation0] sm:$0x3] %vm18, %v17
    %s20 = scalar_lea.vmem %s0, 13
    %s21 = smov 3
    %v22 = vld [vmem:[%s20] ss:$16 sm:%s21]
    %23 = vrot.lane.b32.xlu0 %v22, 104
    %v24 = vpop.permute.xlu0 %23
    %vm25 = vcmask 917312
    %26 = vst.msk [vmem:[#allocation0] sm:$0x3] %vm25, %v24
    %s27 = scalar_lea.vmem %s0, 12
    %s28 = smov 3
    %v29 = vld [vmem:[%s27] ss:$16 sm:%s28]
    %30 = vrot.lane.b32.xlu0 %v29, 96
    %v31 = vpop.permute.xlu0 %30
    %vm32 = vcmask 851712
    %33 = vst.msk [vmem:[#allocation0] sm:$0x3] %vm32, %v31
    %s34 = scalar_lea.vmem %s0, 11
    %s35 = smov 3
    %v36 = vld [vmem:[%s34] ss:$16 sm:%s35]
    %37 = vrot.lane.b32.xlu0 %v36, 88
    %v38 = vpop.permute.xlu0 %37
    %vm39 = vcmask 786112
    %40 = vst.msk [vmem:[#allocation0] sm:$0x3] %vm39, %v38
    %s41 = scalar_lea.vmem %s0, 10
    %s42 = smov 3
    %v43 = vld [vmem:[%s41] ss:$16 sm:%s42]
    %44 = vrot.lane.b32.xlu0 %v43, 80
    %v45 = vpop.permute.xlu0 %44
    %vm46 = vcmask 720512
    %47 = vst.msk [vmem:[#allocation0] sm:$0x3] %vm46, %v45
    %s48 = scalar_lea.vmem %s0, 9
    %s49 = smov 3
    %v50 = vld [vmem:[%s48] ss:$16 sm:%s49]
    %51 = vrot.lane.b32.xlu0 %v50, 72
    %v52 = vpop.permute.xlu0 %51
    %vm53 = vcmask 654912
    %54 = vst.msk [vmem:[#allocation0] sm:$0x3] %vm53, %v52
    %s55 = scalar_lea.vmem %s0, 8
    %s56 = smov 3
    %v57 = vld [vmem:[%s55] ss:$16 sm:%s56]
    %58 = vrot.lane.b32.xlu0 %v57, 64
    %v59 = vpop.permute.xlu0 %58
    %vm60 = vcmask 589312
    %61 = vst.msk [vmem:[#allocation0] sm:$0x3] %vm60, %v59
    %s62 = scalar_lea.vmem %s0, 7
    %s63 = smov 3
    %v64 = vld [vmem:[%s62] ss:$16 sm:%s63]
    %65 = vrot.lane.b32.xlu0 %v64, 56
    %v66 = vpop.permute.xlu0 %65
    %vm67 = vcmask 523712
    %68 = vst.msk [vmem:[#allocation0] sm:$0x3] %vm67, %v66
    %s69 = scalar_lea.vmem %s0, 6
    %s70 = smov 3
    %v71 = vld [vmem:[%s69] ss:$16 sm:%s70]
    %72 = vrot.lane.b32.xlu0 %v71, 48
    %v73 = vpop.permute.xlu0 %72
    %vm74 = vcmask 458112
    %75 = vst.msk [vmem:[#allocation0] sm:$0x3] %vm74, %v73
    %s76 = scalar_lea.vmem %s0, 5
    %s77 = smov 3
    %v78 = vld [vmem:[%s76] ss:$16 sm:%s77]
    %79 = vrot.lane.b32.xlu0 %v78, 40
    %v80 = vpop.permute.xlu0 %79
    %vm81 = vcmask 392512
    %82 = vst.msk [vmem:[#allocation0] sm:$0x3] %vm81, %v80
    %s83 = scalar_lea.vmem %s0, 4
    %s84 = smov 3
    %v85 = vld [vmem:[%s83] ss:$16 sm:%s84]
    %86 = vrot.lane.b32.xlu0 %v85, 32
    %v87 = vpop.permute.xlu0 %86
    %vm88 = vcmask 326912
    %89 = vst.msk [vmem:[#allocation0] sm:$0x3] %vm88, %v87
    %s90 = scalar_lea.vmem %s0, 3
    %s91 = smov 3
    %v92 = vld [vmem:[%s90] ss:$16 sm:%s91]
    %93 = vrot.lane.b32.xlu0 %v92, 24
    %v94 = vpop.permute.xlu0 %93
    %vm95 = vcmask 261312
    %96 = vst.msk [vmem:[#allocation0] sm:$0x3] %vm95, %v94
    %s97 = scalar_lea.vmem %s0, 2
    %s98 = smov 3
    %v99 = vld [vmem:[%s97] ss:$16 sm:%s98]
    %100 = vrot.lane.b32.xlu0 %v99, 16
    %v101 = vpop.permute.xlu0 %100
    %vm102 = vcmask 195712
    %103 = vst.msk [vmem:[#allocation0] sm:$0x3] %vm102, %v101
    %s104 = scalar_lea.vmem %s0, 1
    %s105 = smov 3
    %v106 = vld [vmem:[%s104] ss:$16 sm:%s105]
    %107 = vrot.lane.b32.xlu0 %v106, 8
    %v108 = vpop.permute.xlu0 %107
    %vm109 = vcmask 130112
    %110 = vst.msk [vmem:[#allocation0] sm:$0x3] %vm109, %v108
    %s112 = ssub.s32 4, 1
    %v113 = vld [vmem:[#allocation0] sm:%s112]
    %s115 = ssub.s32 4, 1
    %116 = vst [vmem:[%s1] sm:%s115] %v113

// kernel: residual_block_pallas.5
$region0: #{residual_block_pallas.5}
  #allocation0 [shape = 'u32[]', space=smem, size = 0x4, offset = 0x4, fixed_abs, tag = 'smem constant byte address 0x4 - core index']
  #allocation1 [shape = 'u32[72,128]{1,0:T(1,128)}', space=vmem, size = 0x9000, scoped, tag = 'internal scratch']
  %s0 = inlined_call_operand.vmem [shape: f32[2,16,128], index: 0, kind: input, shape index: {}]
  %s1 = inlined_call_operand.vmem [shape: f32[2,128], index: 1, kind: input, shape index: {}]
  %s2 = inlined_call_operand.vmem [shape: f32[2,16,128], index: 2, kind: input, shape index: {}]
  %s3 = inlined_call_operand.vmem [shape: f32[2,16,128], index: 3, kind: output, shape index: {}]
  %s4 = sld [smem:[#allocation0]]
  $region45: #{residual_block_pallas.5} parent=0
    _
  %s6 = ssub.s32 1, %s4
  %s7 = scalar_select 0, %s6, %s4
  loop: start=0, step=1, limit=4
  $region2: #{residual_block_pallas.5} parent=0 // loop_pre_header
    _
  $region3: #{residual_block_pallas.5} parent=0 // loop_header
    %s9 = sphi 0, %s13
    %p10 = scmp.ge.s32.totalorder %s9, 4
    %s19 = sphi 0, %s21
    %s22 = sphi 0, %s19
    %s23 = sphi 0, %s22
    %s39 = sphi 0, %s23
    %s43 = sphi 0, %s43
    %s45 = sphi 0, %s43
    %s46 = sphi 0, %s45
    %s60 = sphi 0, %s46
    %s66 = sphi 0, %s68
    %s69 = sphi 0, %s66
    %s70 = sphi 0, %s69
    %s86 = sphi 0, %s70
    %s92 = sphi 0, %s94
    %s95 = sphi 0, %s92
    %s96 = sphi 0, %s95
    %s112 = sphi 0, %s96
  $region4: #{residual_block_pallas.5} parent=0 // loop_header_branch
    %12 = sbr.rel (%p10) target = $region8
  $region5: #{residual_block_pallas.5} parent=0 // loop_body
    %s14 = ssub.s32 %s9, 1
    %s15 = ssub.s32 %s9, 2
    %s16 = sadd.s32 %s9, 1
    %s17 = ssub.s32 %s9, %s16
    %p18 = scmp.eq.s32.totalorder %s17, 0
    %s20 = sadd.s32 %s19, 1
    %s21 = scalar_select %p18, %s19, %s20
    %p24 = pneg %p18
    %p25 = scmp.eq.s32.totalorder %s9, 1
    %p26 = por %p24, %p25
    %p27 = scmp.ne.s32.totalorder %s19, %s22
    %p28 = scmp.eq.s32.totalorder %s9, 0
    %p29 = por %p27, %p28
    %p30 = scmp.ne.s32.totalorder %s19, %s22
    %p31 = scmp.eq.s32.totalorder %s14, 1
    %p32 = por %p30, %p31
    %p33 = scmp.ne.s32.totalorder %s22, %s23
    %p34 = scmp.eq.s32.totalorder %s14, 0
    %p35 = por %p33, %p34
    %p36 = scmp.ne.s32.totalorder %s22, %s23
    %p37 = scmp.eq.s32.totalorder %s15, 1
    %p38 = por %p36, %p37
    %p40 = scmp.ne.s32.totalorder %s23, %s39
    %p41 = scmp.eq.s32.totalorder %s15, 0
    %p42 = por %p40, %p41
    %s44 = sadd.s32 %s43, 1
    %p47 = scmp.eq.s32.totalorder %s9, 1
    %p48 = scmp.ne.s32.totalorder %s43, %s45
    %p49 = scmp.eq.s32.totalorder %s9, 0
    %p50 = por %p48, %p49
    %p51 = scmp.ne.s32.totalorder %s43, %s45
    %p52 = scmp.eq.s32.totalorder %s14, 1
    %p53 = por %p51, %p52
    %p54 = scmp.ne.s32.totalorder %s45, %s46
    %p55 = scmp.eq.s32.totalorder %s14, 0
    %p56 = por %p54, %p55
    %p57 = scmp.ne.s32.totalorder %s45, %s46
    %p58 = scmp.eq.s32.totalorder %s15, 1
    %p59 = por %p57, %p58
    %p61 = scmp.ne.s32.totalorder %s46, %s60
    %p62 = scmp.eq.s32.totalorder %s15, 0
    %p63 = por %p61, %p62
    %s64 = ssub.s32 %s9, %s16
    %p65 = scmp.eq.s32.totalorder %s64, 0
    %s67 = sadd.s32 %s66, 1
    %s68 = scalar_select %p65, %s66, %s67
    %p71 = pneg %p65
    %p72 = scmp.eq.s32.totalorder %s9, 1
    %p73 = por %p71, %p72
    %p74 = scmp.ne.s32.totalorder %s66, %s69
    %p75 = scmp.eq.s32.totalorder %s9, 0
    %p76 = por %p74, %p75
    %p77 = scmp.ne.s32.totalorder %s66, %s69
    %p78 = scmp.eq.s32.totalorder %s14, 1
    %p79 = por %p77, %p78
    %p80 = scmp.ne.s32.totalorder %s69, %s70
    %p81 = scmp.eq.s32.totalorder %s14, 0
    %p82 = por %p80, %p81
    %p83 = scmp.ne.s32.totalorder %s69, %s70
    %p84 = scmp.eq.s32.totalorder %s15, 1
    %p85 = por %p83, %p84
    %p87 = scmp.ne.s32.totalorder %s70, %s86
    %p88 = scmp.eq.s32.totalorder %s15, 0
    %p89 = por %p87, %p88
    %s90 = ssub.s32 %s9, %s16
    %p91 = scmp.eq.s32.totalorder %s90, 0
    %s93 = sadd.s32 %s92, 1
    %s94 = scalar_select %p91, %s92, %s93
    %p97 = pneg %p91
    %p98 = scmp.eq.s32.totalorder %s9, 1
    %p99 = por %p97, %p98
    %p100 = scmp.ne.s32.totalorder %s92, %s95
    %p101 = scmp.eq.s32.totalorder %s9, 0
    %p102 = por %p100, %p101
    %p103 = scmp.ne.s32.totalorder %s92, %s95
    %p104 = scmp.eq.s32.totalorder %s14, 1
    %p105 = por %p103, %p104
    %p106 = scmp.ne.s32.totalorder %s95, %s96
    %p107 = scmp.eq.s32.totalorder %s14, 0
    %p108 = por %p106, %p107
    %p109 = scmp.ne.s32.totalorder %s95, %s96
    %p110 = scmp.eq.s32.totalorder %s15, 1
    %p111 = por %p109, %p110
    %p113 = scmp.ne.s32.totalorder %s96, %s112
    %p114 = scmp.eq.s32.totalorder %s15, 0
    %p115 = por %p113, %p114
    %p116 = scmp.le.s32.totalorder 1, %s9
    %p117 = scmp.lt.s32.totalorder %s9, 3
    %p118 = pnand %p116, %p117
    %p119 = pneg %p118
    // Predicated region
    $region9: #{residual_block_pallas.5} parent=5 // pred_check
      _
    $region10: #{residual_block_pallas.5} parent=5 // pred_check_branch
      %121 = sbr.rel (%p118) target = $region12
    $region11: #{residual_block_pallas.5} parent=5 // pred_region
      %s122 = ssub.s32 %s9, 1
      // Predicated region
      $region13: #{residual_block_pallas.5} parent=11 // pred_check
        %p123 = pneg %p56
      $region14: #{residual_block_pallas.5} parent=11 // pred_check_branch
        %125 = sbr.rel (%p123) target = $region16
      $region15: #{residual_block_pallas.5} parent=11 // pred_region
        _
      $region16: #{residual_block_pallas.5} parent=11 // pred_fallthru
        _
    $region12: #{residual_block_pallas.5} parent=5 // pred_fallthru
      _
    %p126 = scmp.lt.s32.totalorder %s9, 2
    // Predicated region
    $region17: #{residual_block_pallas.5} parent=5 // pred_check
      %p127 = pneg %p126
    $region18: #{residual_block_pallas.5} parent=5 // pred_check_branch
      %129 = sbr.rel (%p127) target = $region20
    $region19: #{residual_block_pallas.5} parent=5 // pred_region
      // Predicated region
      $region21: #{residual_block_pallas.5} parent=19 // pred_check
        %p130 = pneg %p29
      $region22: #{residual_block_pallas.5} parent=19 // pred_check_branch
        %132 = sbr.rel (%p130) target = $region24
      $region23: #{residual_block_pallas.5} parent=19 // pred_region
        %p133 = scmp.lt.s32.totalorder %s9, 1
        %s134 = scalar_select %p133, %s9, 1
        %s135 = smul.addr %s134, 2
        %s136 = smul.addr %s135, 8
        %s137 = scalar_lea.vmem %s0, %s136
      $region24: #{residual_block_pallas.5} parent=19 // pred_fallthru
        _
      // Predicated region
      $region25: #{residual_block_pallas.5} parent=19 // pred_check
        %p138 = pneg %p76
      $region26: #{residual_block_pallas.5} parent=19 // pred_check_branch
        %140 = sbr.rel (%p138) target = $region28
      $region27: #{residual_block_pallas.5} parent=19 // pred_region
        %p141 = scmp.lt.s32.totalorder %s9, 1
        %s142 = scalar_select %p141, %s9, 1
        %s143 = smul.addr %s142, 2
        %s144 = smul.addr %s143, 8
        %s145 = scalar_lea.vmem %s2, %s144
      $region28: #{residual_block_pallas.5} parent=19 // pred_fallthru
        _
    $region20: #{residual_block_pallas.5} parent=5 // pred_fallthru
      _
    %p146 = scmp.le.s32.totalorder 1, %s9
    %p147 = scmp.lt.s32.totalorder %s9, 3
    %p148 = pnand %p146, %p147
    %p149 = pneg %p148
    // Predicated region
    $region29: #{residual_block_pallas.5} parent=5 // pred_check
      _
    $region30: #{residual_block_pallas.5} parent=5 // pred_check_branch
      %151 = sbr.rel (%p148) target = $region32
    $region31: #{residual_block_pallas.5} parent=5 // pred_region
      %s152 = ssub.s32 %s9, 1
      %p153 = scmp.lt.s32.totalorder %s14, 1
      %s154 = scalar_select %p153, %s14, 1
      %s155 = smul.addr %s154, 2
      %s156 = smul.addr %s155, 8
      %s157 = scalar_lea.vmem %s0, %s156
      %p158 = pneg %p35
      %p159 = pneg %p32
      %p160 = pneg %p56
      %p161 = pneg %p53
      %p162 = scmp.lt.s32.totalorder %s14, 1
      %s163 = scalar_select %p162, %s14, 1
      %s164 = smul.addr %s163, 2
      %s165 = smul.addr %s164, 8
      %s166 = scalar_lea.vmem %s2, %s165
      %p167 = pneg %p82
      %p168 = pneg %p79
      %p169 = pneg %p108
      %p170 = pneg %p105
      %p171 = scmp.lt.s32.totalorder %s14, 1
      %s172 = scalar_select %p171, %s14, 1
      %s173 = smul.addr %s172, 2
      %s174 = smul.addr %s173, 8
      %s175 = scalar_lea.vmem %s3, %s174
      %p176 = scmp.lt.s32.totalorder %s14, 1
      %s177 = scalar_select %p176, %s14, 1
      %s178 = smul.addr %s177, 2
      %s179 = smul.addr %s178, 8
      %s180 = scalar_lea.vmem %s0, %s179
      %p181 = scmp.lt.s32.totalorder %s14, 1
      %s182 = scalar_select %p181, %s14, 1
      %s183 = smul.addr %s182, 2
      %s184 = smul.addr %s183, 8
      %s185 = scalar_lea.vmem %s2, %s184
      %p186 = scmp.lt.s32.totalorder %s14, 1
      %s187 = scalar_select %p186, %s14, 1
      %s188 = smul.addr %s187, 2
      %s189 = smul.addr %s188, 8
      %s190 = scalar_lea.vmem %s3, %s189
      %v191 = vld [vmem:[%s1] sm:$0x3]
      %v192 = vld [vmem:[%s180] sm:$0xff]
      %v193 = vld [vmem:[%s180 + $0x8] sm:$0xff]
      %v194 = vperm.slane %v191, 0
      %v195 = vmul.f32 %v192, %v194
      %v196 = vmul.f32 %v193, %v194
      %v197 = vperm.slane %v191, 1
      %v198 = vadd.f32 %v195, %v197
      %v199 = vadd.f32 %v196, %v197
      %v200 = vld [vmem:[%s185] sm:$0xff]
      %v201 = vld [vmem:[%s185 + $0x8] sm:$0xff]
      %v202 = vadd.f32 %v198, %v200
      %v203 = vadd.f32 %v199, %v201
      %204 = vst [vmem:[%s190] sm:$0xff] %v202
      %205 = vst [vmem:[%s190 + $0x8] sm:$0xff] %v203
      %p206 = scmp.lt.s32.totalorder %s14, 1
      %s207 = scalar_select %p206, %s14, 1
      %s208 = smul.addr %s207, 2
      %s209 = smul.addr %s208, 8
      %s210 = scalar_lea.vmem %s3, %s209
      // Predicated region
      $region33: #{residual_block_pallas.5} parent=31 // pred_check
        %p211 = pneg %p105
      $region34: #{residual_block_pallas.5} parent=31 // pred_check_branch
        %213 = sbr.rel (%p211) target = $region36
      $region35: #{residual_block_pallas.5} parent=31 // pred_region
        _
      $region36: #{residual_block_pallas.5} parent=31 // pred_fallthru
        _
    $region32: #{residual_block_pallas.5} parent=5 // pred_fallthru
      _
    %p214 = scmp.le.s32.totalorder 2, %s9
    // Predicated region
    $region37: #{residual_block_pallas.5} parent=5 // pred_check
      %p215 = pneg %p214
    $region38: #{residual_block_pallas.5} parent=5 // pred_check_branch
      %217 = sbr.rel (%p215) target = $region40
    $region39: #{residual_block_pallas.5} parent=5 // pred_region
      %s218 = ssub.s32 %s9, 2
      // Predicated region
      $region41: #{residual_block_pallas.5} parent=39 // pred_check
        %p219 = pneg %p111
      $region42: #{residual_block_pallas.5} parent=39 // pred_check_branch
        %221 = sbr.rel (%p219) target = $region44
      $region43: #{residual_block_pallas.5} parent=39 // pred_region
        %p222 = scmp.lt.s32.totalorder %s15, 1
        %s223 = scalar_select %p222, %s15, 1
        %s224 = smul.addr %s223, 2
        %s225 = smul.addr %s224, 8
        %s226 = scalar_lea.vmem %s3, %s225
      $region44: #{residual_block_pallas.5} parent=39 // pred_fallthru
        _
    $region40: #{residual_block_pallas.5} parent=5 // pred_fallthru
      _
  $region6: #{residual_block_pallas.5} parent=0 // loop_footer
    %s13 = sadd.s32 1, %s9
  $region7: #{residual_block_pallas.5} parent=0 // loop_footer_branch
    %8 = sbr.rel target = $region3
  $region8: #{residual_block_pallas.5} parent=0 // loop_exit
    _

// kernel: residual_block_pallas.4
$region0: #{residual_block_pallas.4}
  #allocation0 [shape = 'u32[]', space=smem, size = 0x4, offset = 0x4, fixed_abs, tag = 'smem constant byte address 0x4 - core index']
  #allocation1 [shape = 'u32[72,128]{1,0:T(1,128)}', space=vmem, size = 0x9000, scoped, tag = 'internal scratch']
  #allocation2 [shape = 'f32[16,16,72]{2,1,0:T(8,128)}', space=vmem, size = 0x20000, scoped, tag = 'scratch operand']
  #allocation3 [shape = 'f32[18,18,8]{2,1,0:T(8,128)}', space=vmem, size = 0x36000, scoped, tag = 'scratch operand']
  %s0 = inlined_call_operand.vmem [shape: f32[2,18,18,8], index: 0, kind: input, shape index: {}]
  %s1 = inlined_call_operand.vmem [shape: f32[2,8], index: 1, kind: input, shape index: {}]
  %s2 = inlined_call_operand.vmem [shape: f32[72,8], index: 2, kind: input, shape index: {}]
  %s3 = inlined_call_operand.vmem [shape: f32[2,256,8], index: 3, kind: output, shape index: {0}]
  %s4 = inlined_call_operand.vmem [shape: f32[2,1,8], index: 4, kind: output, shape index: {1}]
  %s5 = inlined_call_operand.vmem [shape: f32[2,1,8], index: 5, kind: output, shape index: {2}]
  %6 = xla_tuple %s3, %s4, %s5
  %s7 = sld [smem:[#allocation0]]
  $region61: #{residual_block_pallas.4} parent=0
    _
  %s9 = ssub.s32 1, %s7
  %s10 = scalar_select 0, %s9, %s7
  loop: start=0, step=1, limit=4
  $region2: #{residual_block_pallas.4} parent=0 // loop_pre_header
    _
  $region3: #{residual_block_pallas.4} parent=0 // loop_header
    %s12 = sphi 0, %s16
    %p13 = scmp.ge.s32.totalorder %s12, 4
    %s22 = sphi 0, %s24
    %s25 = sphi 0, %s22
    %s26 = sphi 0, %s25
    %s42 = sphi 0, %s26
    %s46 = sphi 0, %s46
    %s48 = sphi 0, %s46
    %s49 = sphi 0, %s48
    %s63 = sphi 0, %s49
    %s67 = sphi 0, %s67
    %s69 = sphi 0, %s67
    %s70 = sphi 0, %s69
    %s84 = sphi 0, %s70
    %s90 = sphi 0, %s92
    %s93 = sphi 0, %s90
    %s94 = sphi 0, %s93
    %s110 = sphi 0, %s94
    %s116 = sphi 0, %s118
    %s119 = sphi 0, %s116
    %s120 = sphi 0, %s119
    %s136 = sphi 0, %s120
    %s142 = sphi 0, %s144
    %s145 = sphi 0, %s142
    %s146 = sphi 0, %s145
    %s162 = sphi 0, %s146
  $region4: #{residual_block_pallas.4} parent=0 // loop_header_branch
    %15 = sbr.rel (%p13) target = $region8
  $region5: #{residual_block_pallas.4} parent=0 // loop_body
    %s17 = ssub.s32 %s12, 1
    %s18 = ssub.s32 %s12, 2
    %s19 = sadd.s32 %s12, 1
    %s20 = ssub.s32 %s12, %s19
    %p21 = scmp.eq.s32.totalorder %s20, 0
    %s23 = sadd.s32 %s22, 1
    %s24 = scalar_select %p21, %s22, %s23
    %p27 = pneg %p21
    %p28 = scmp.eq.s32.totalorder %s12, 1
    %p29 = por %p27, %p28
    %p30 = scmp.ne.s32.totalorder %s22, %s25
    %p31 = scmp.eq.s32.totalorder %s12, 0
    %p32 = por %p30, %p31
    %p33 = scmp.ne.s32.totalorder %s22, %s25
    %p34 = scmp.eq.s32.totalorder %s17, 1
    %p35 = por %p33, %p34
    %p36 = scmp.ne.s32.totalorder %s25, %s26
    %p37 = scmp.eq.s32.totalorder %s17, 0
    %p38 = por %p36, %p37
    %p39 = scmp.ne.s32.totalorder %s25, %s26
    %p40 = scmp.eq.s32.totalorder %s18, 1
    %p41 = por %p39, %p40
    %p43 = scmp.ne.s32.totalorder %s26, %s42
    %p44 = scmp.eq.s32.totalorder %s18, 0
    %p45 = por %p43, %p44
    %s47 = sadd.s32 %s46, 1
    %p50 = scmp.eq.s32.totalorder %s12, 1
    %p51 = scmp.ne.s32.totalorder %s46, %s48
    %p52 = scmp.eq.s32.totalorder %s12, 0
    %p53 = por %p51, %p52
    %p54 = scmp.ne.s32.totalorder %s46, %s48
    %p55 = scmp.eq.s32.totalorder %s17, 1
    %p56 = por %p54, %p55
    %p57 = scmp.ne.s32.totalorder %s48, %s49
    %p58 = scmp.eq.s32.totalorder %s17, 0
    %p59 = por %p57, %p58
    %p60 = scmp.ne.s32.totalorder %s48, %s49
    %p61 = scmp.eq.s32.totalorder %s18, 1
    %p62 = por %p60, %p61
    %p64 = scmp.ne.s32.totalorder %s49, %s63
    %p65 = scmp.eq.s32.totalorder %s18, 0
    %p66 = por %p64, %p65
    %s68 = sadd.s32 %s67, 1
    %p71 = scmp.eq.s32.totalorder %s12, 1
    %p72 = scmp.ne.s32.totalorder %s67, %s69
    %p73 = scmp.eq.s32.totalorder %s12, 0
    %p74 = por %p72, %p73
    %p75 = scmp.ne.s32.totalorder %s67, %s69
    %p76 = scmp.eq.s32.totalorder %s17, 1
    %p77 = por %p75, %p76
    %p78 = scmp.ne.s32.totalorder %s69, %s70
    %p79 = scmp.eq.s32.totalorder %s17, 0
    %p80 = por %p78, %p79
    %p81 = scmp.ne.s32.totalorder %s69, %s70
    %p82 = scmp.eq.s32.totalorder %s18, 1
    %p83 = por %p81, %p82
    %p85 = scmp.ne.s32.totalorder %s70, %s84
    %p86 = scmp.eq.s32.totalorder %s18, 0
    %p87 = por %p85, %p86
    %s88 = ssub.s32 %s12, %s19
    %p89 = scmp.eq.s32.totalorder %s88, 0
    %s91 = sadd.s32 %s90, 1
    %s92 = scalar_select %p89, %s90, %s91
    %p95 = pneg %p89
    %p96 = scmp.eq.s32.totalorder %s12, 1
    %p97 = por %p95, %p96
    %p98 = scmp.ne.s32.totalorder %s90, %s93
    %p99 = scmp.eq.s32.totalorder %s12, 0
    %p100 = por %p98, %p99
    %p101 = scmp.ne.s32.totalorder %s90, %s93
    %p102 = scmp.eq.s32.totalorder %s17, 1
    %p103 = por %p101, %p102
    %p104 = scmp.ne.s32.totalorder %s93, %s94
    %p105 = scmp.eq.s32.totalorder %s17, 0
    %p106 = por %p104, %p105
    %p107 = scmp.ne.s32.totalorder %s93, %s94
    %p108 = scmp.eq.s32.totalorder %s18, 1
    %p109 = por %p107, %p108
    %p111 = scmp.ne.s32.totalorder %s94, %s110
    %p112 = scmp.eq.s32.totalorder %s18, 0
    %p113 = por %p111, %p112
    %s114 = ssub.s32 %s12, %s19
    %p115 = scmp.eq.s32.totalorder %s114, 0
    %s117 = sadd.s32 %s116, 1
    %s118 = scalar_select %p115, %s116, %s117
    %p121 = pneg %p115
    %p122 = scmp.eq.s32.totalorder %s12, 1
    %p123 = por %p121, %p122
    %p124 = scmp.ne.s32.totalorder %s116, %s119
    %p125 = scmp.eq.s32.totalorder %s12, 0
    %p126 = por %p124, %p125
    %p127 = scmp.ne.s32.totalorder %s116, %s119
    %p128 = scmp.eq.s32.totalorder %s17, 1
    %p129 = por %p127, %p128
    %p130 = scmp.ne.s32.totalorder %s119, %s120
    %p131 = scmp.eq.s32.totalorder %s17, 0
    %p132 = por %p130, %p131
    %p133 = scmp.ne.s32.totalorder %s119, %s120
    %p134 = scmp.eq.s32.totalorder %s18, 1
    %p135 = por %p133, %p134
    %p137 = scmp.ne.s32.totalorder %s120, %s136
    %p138 = scmp.eq.s32.totalorder %s18, 0
    %p139 = por %p137, %p138
    %s140 = ssub.s32 %s12, %s19
    %p141 = scmp.eq.s32.totalorder %s140, 0
    %s143 = sadd.s32 %s142, 1
    %s144 = scalar_select %p141, %s142, %s143
    %p147 = pneg %p141
    %p148 = scmp.eq.s32.totalorder %s12, 1
    %p149 = por %p147, %p148
    %p150 = scmp.ne.s32.totalorder %s142, %s145
    %p151 = scmp.eq.s32.totalorder %s12, 0
    %p152 = por %p150, %p151
    %p153 = scmp.ne.s32.totalorder %s142, %s145
    %p154 = scmp.eq.s32.totalorder %s17, 1
    %p155 = por %p153, %p154
    %p156 = scmp.ne.s32.totalorder %s145, %s146
    %p157 = scmp.eq.s32.totalorder %s17, 0
    %p158 = por %p156, %p157
    %p159 = scmp.ne.s32.totalorder %s145, %s146
    %p160 = scmp.eq.s32.totalorder %s18, 1
    %p161 = por %p159, %p160
    %p163 = scmp.ne.s32.totalorder %s146, %s162
    %p164 = scmp.eq.s32.totalorder %s18, 0
    %p165 = por %p163, %p164
    %p166 = scmp.le.s32.totalorder 1, %s12
    %p167 = scmp.lt.s32.totalorder %s12, 3
    %p168 = pnand %p166, %p167
    %p169 = pneg %p168
    // Predicated region
    $region9: #{residual_block_pallas.4} parent=5 // pred_check
      _
    $region10: #{residual_block_pallas.4} parent=5 // pred_check_branch
      %171 = sbr.rel (%p168) target = $region12
    $region11: #{residual_block_pallas.4} parent=5 // pred_region
      %s172 = ssub.s32 %s12, 1
      // Predicated region
      $region13: #{residual_block_pallas.4} parent=11 // pred_check
        %p173 = pneg %p59
      $region14: #{residual_block_pallas.4} parent=11 // pred_check_branch
        %175 = sbr.rel (%p173) target = $region16
      $region15: #{residual_block_pallas.4} parent=11 // pred_region
        _
      $region16: #{residual_block_pallas.4} parent=11 // pred_fallthru
        _
      // Predicated region
      $region17: #{residual_block_pallas.4} parent=11 // pred_check
        %p176 = pneg %p80
      $region18: #{residual_block_pallas.4} parent=11 // pred_check_branch
        %178 = sbr.rel (%p176) target = $region20
      $region19: #{residual_block_pallas.4} parent=11 // pred_region
        _
      $region20: #{residual_block_pallas.4} parent=11 // pred_fallthru
        _
    $region12: #{residual_block_pallas.4} parent=5 // pred_fallthru
      _
    %p179 = scmp.lt.s32.totalorder %s12, 2
    // Predicated region
    $region21: #{residual_block_pallas.4} parent=5 // pred_check
      %p180 = pneg %p179
    $region22: #{residual_block_pallas.4} parent=5 // pred_check_branch
      %182 = sbr.rel (%p180) target = $region24
    $region23: #{residual_block_pallas.4} parent=5 // pred_region
      // Predicated region
      $region25: #{residual_block_pallas.4} parent=23 // pred_check
        %p183 = pneg %p32
      $region26: #{residual_block_pallas.4} parent=23 // pred_check_branch
        %185 = sbr.rel (%p183) target = $region28
      $region27: #{residual_block_pallas.4} parent=23 // pred_region
        %p186 = scmp.lt.s32.totalorder %s12, 1
        %s187 = scalar_select %p186, %s12, 1
        %s188 = smul.addr %s187, 54
        %s189 = smul.addr %s188, 8
        %s190 = scalar_lea.vmem %s0, %s189
      $region28: #{residual_block_pallas.4} parent=23 // pred_fallthru
        _
    $region24: #{residual_block_pallas.4} parent=5 // pred_fallthru
      _
    %p191 = scmp.le.s32.totalorder 1, %s12
    %p192 = scmp.lt.s32.totalorder %s12, 3
    %p193 = pnand %p191, %p192
    %p194 = pneg %p193
    // Predicated region
    $region29: #{residual_block_pallas.4} parent=5 // pred_check
      _
    $region30: #{residual_block_pallas.4} parent=5 // pred_check_branch
      %196 = sbr.rel (%p193) target = $region32
    $region31: #{residual_block_pallas.4} parent=5 // pred_region
      %s197 = ssub.s32 %s12, 1
      %p198 = scmp.lt.s32.totalorder %s17, 1
      %s199 = scalar_select %p198, %s17, 1
      %s200 = smul.addr %s199, 54
      %s201 = smul.addr %s200, 8
      %s202 = scalar_lea.vmem %s0, %s201
      %p203 = pneg %p38
      %p204 = pneg %p35
      %p205 = pneg %p59
      %p206 = pneg %p56
      %p207 = pneg %p80
      %p208 = pneg %p77
      %p209 = pneg %p106
      %p210 = pneg %p103
      %p211 = scmp.lt.s32.totalorder %s17, 1
      %s212 = scalar_select %p211, %s17, 1
      %s213 = smul.addr %s212, 32
      %s214 = smul.addr %s213, 8
      %s215 = scalar_lea.vmem %s3, %s214
      %p216 = pneg %p132
      %p217 = pneg %p129
      %p218 = scmp.lt.s32.totalorder %s17, 1
      %s219 = scalar_select %p218, %s17, 1
      %s220 = scalar_lea.vmem %s4, %s219
      %p221 = pneg %p158
      %p222 = pneg %p155
      %p223 = scmp.lt.s32.totalorder %s17, 1
      %s224 = scalar_select %p223, %s17, 1
      %s225 = scalar_lea.vmem %s5, %s224
      %p226 = scmp.lt.s32.totalorder %s17, 1
      %s227 = scalar_select %p226, %s17, 1
      %s228 = smul.addr %s227, 54
      %s229 = smul.addr %s228, 8
      %s230 = scalar_lea.vmem %s0, %s229
      %p231 = scmp.lt.s32.totalorder %s17, 1
      %s232 = scalar_select %p231, %s17, 1
      %s233 = smul.addr %s232, 32
      %s234 = smul.addr %s233, 8
      %s235 = scalar_lea.vmem %s3, %s234
      %p236 = scmp.lt.s32.totalorder %s17, 1
      %s237 = scalar_select %p236, %s17, 1
      %s238 = scalar_lea.vmem %s4, %s237
      %p239 = scmp.lt.s32.totalorder %s17, 1
      %s240 = scalar_select %p239, %s17, 1
      %s241 = scalar_lea.vmem %s5, %s240
      %v242 = vld [vmem:[%s2] sm:$0xff]
      %v243 = vld [vmem:[%s2 + $0x8] sm:$0xff]
      %v244 = vld [vmem:[%s2 + $0x10] sm:$0xff]
      %v245 = vld [vmem:[%s2 + $0x18] sm:$0xff]
      %v246 = vld [vmem:[%s2 + $0x20] sm:$0xff]
      %v247 = vld [vmem:[%s2 + $0x28] sm:$0xff]
      %v248 = vld [vmem:[%s2 + $0x30] sm:$0xff]
      %v249 = vld [vmem:[%s2 + $0x38] sm:$0xff]
      %v250 = vld [vmem:[%s2 + $0x40] sm:$0xff]
      %v251 = vld [vmem:[%s1] sm:$0x3]
      %s252 = scalar_lea.vmem %s230, 24
      %v253 = vld [vmem:[%s252 + $0x1] sm:$0xff]
      %v254 = vld [vmem:[%s252 + $0x9] sm:$0xff]
      %v255 = vld [vmem:[%s252 + $0x19] sm:$0xff]
      %v256 = vld [vmem:[%s252 + $0x21] sm:$0xff]
      %v257 = vld [vmem:[%s252 + $0x31] sm:$0xff]
      %v258 = vld [vmem:[%s252 + $0x39] sm:$0xff]
      %v259 = vld [vmem:[%s252 + $0x49] sm:$0xff]
      %v260 = vld [vmem:[%s252 + $0x51] sm:$0xff]
      %v261 = vld [vmem:[%s252 + $0x61] sm:$0xff]
      %v262 = vld [vmem:[%s252 + $0x69] sm:$0xff]
      %v263 = vld [vmem:[%s252 + $0x79] sm:$0xff]
      %v264 = vld [vmem:[%s252 + $0x81] sm:$0xff]
      %v265 = vld [vmem:[%s252 + $0x91] sm:$0xff]
      %v266 = vld [vmem:[%s252 + $0x99] sm:$0xff]
      %v267 = vld [vmem:[%s252 + $0xa9] sm:$0xff]
      %v268 = vld [vmem:[%s252 + $0xb1] sm:$0xff]
      %v269 = vld [vmem:[%s252 + $0xc1] sm:$0xff]
      %v270 = vld [vmem:[%s252 + $0xc9] sm:$0xff]
      %v271 = vld [vmem:[%s252 + $0xd9] sm:$0xff]
      %v272 = vld [vmem:[%s252 + $0xe1] sm:$0xff]
      %v273 = vld [vmem:[%s252 + $0xf1] sm:$0xff]
      %v274 = vld [vmem:[%s252 + $0xf9] sm:$0xff]
      %v275 = vld [vmem:[%s252 + $0x109] sm:$0xff]
      %v276 = vld [vmem:[%s252 + $0x111] sm:$0xff]
      %v277 = vld [vmem:[%s252 + $0x121] sm:$0xff]
      %v278 = vld [vmem:[%s252 + $0x129] sm:$0xff]
      %v279 = vld [vmem:[%s252 + $0x139] sm:$0xff]
      %v280 = vld [vmem:[%s252 + $0x141] sm:$0xff]
      %v281 = vld [vmem:[%s252 + $0x151] sm:$0xff]
      %v282 = vld [vmem:[%s252 + $0x159] sm:$0xff]
      %v283 = vld [vmem:[%s252 + $0x169] sm:$0xff]
      %v284 = vld [vmem:[%s252 + $0x171] sm:$0xff]
      %v285 = vperm.slane %v251, 0
      %v286 = vmul.f32 %v253, %v285
      %v287 = vmul.f32 %v254, %v285
      %v288 = vmul.f32 %v255, %v285
      %v289 = vmul.f32 %v256, %v285
      %v290 = vmul.f32 %v257, %v285
      %v291 = vmul.f32 %v258, %v285
      %v292 = vmul.f32 %v259, %v285
      %v293 = vmul.f32 %v260, %v285
      %v294 = vmul.f32 %v261, %v285
      %v295 = vmul.f32 %v262, %v285
      %v296 = vmul.f32 %v263, %v285
      %v297 = vmul.f32 %v264, %v285
      %v298 = vmul.f32 %v265, %v285
      %v299 = vmul.f32 %v266, %v285
      %v300 = vmul.f32 %v267, %v285
      %v301 = vmul.f32 %v268, %v285
      %v302 = vmul.f32 %v269, %v285
      %v303 = vmul.f32 %v270, %v285
      %v304 = vmul.f32 %v271, %v285
      %v305 = vmul.f32 %v272, %v285
      %v306 = vmul.f32 %v273, %v285
      %v307 = vmul.f32 %v274, %v285
      %v308 = vmul.f32 %v275, %v285
      %v309 = vmul.f32 %v276, %v285
      %v310 = vmul.f32 %v277, %v285
      %v311 = vmul.f32 %v278, %v285
      %v312 = vmul.f32 %v279, %v285
      %v313 = vmul.f32 %v280, %v285
      %v314 = vmul.f32 %v281, %v285
      %v315 = vmul.f32 %v282, %v285
      %v316 = vmul.f32 %v283, %v285
      %v317 = vmul.f32 %v284, %v285
      %v318 = vperm.slane %v251, 1
      %v319 = vadd.f32 %v286, %v318
      %v320 = vadd.f32 %v287, %v318
      %v321 = vadd.f32 %v288, %v318
      %v322 = vadd.f32 %v289, %v318
      %v323 = vadd.f32 %v290, %v318
      %v324 = vadd.f32 %v291, %v318
      %v325 = vadd.f32 %v292, %v318
      %v326 = vadd.f32 %v293, %v318
      %v327 = vadd.f32 %v294, %v318
      %v328 = vadd.f32 %v295, %v318
      %v329 = vadd.f32 %v296, %v318
      %v330 = vadd.f32 %v297, %v318
      %v331 = vadd.f32 %v298, %v318
      %v332 = vadd.f32 %v299, %v318
      %v333 = vadd.f32 %v300, %v318
      %v334 = vadd.f32 %v301, %v318
      %v335 = vadd.f32 %v302, %v318
      %v336 = vadd.f32 %v303, %v318
      %v337 = vadd.f32 %v304, %v318
      %v338 = vadd.f32 %v305, %v318
      %v339 = vadd.f32 %v306, %v318
      %v340 = vadd.f32 %v307, %v318
      %v341 = vadd.f32 %v308, %v318
      %v342 = vadd.f32 %v309, %v318
      %v343 = vadd.f32 %v310, %v318
      %v344 = vadd.f32 %v311, %v318
      %v345 = vadd.f32 %v312, %v318
      %v346 = vadd.f32 %v313, %v318
      %v347 = vadd.f32 %v314, %v318
      %v348 = vadd.f32 %v315, %v318
      %v349 = vadd.f32 %v316, %v318
      %v350 = vadd.f32 %v317, %v318
      %v351 = vxor.u32 %v319, 2147483648
      %v352 = vxor.u32 %v320, 2147483648
      %v353 = vxor.u32 %v321, 2147483648
      %v354 = vxor.u32 %v322, 2147483648
      %v355 = vxor.u32 %v323, 2147483648
      %v356 = vxor.u32 %v324, 2147483648
      %v357 = vxor.u32 %v325, 2147483648
      %v358 = vxor.u32 %v326, 2147483648
      %v359 = vxor.u32 %v327, 2147483648
      %v360 = vxor.u32 %v328, 2147483648
      %v361 = vxor.u32 %v329, 2147483648
      %v362 = vxor.u32 %v330, 2147483648
      %v363 = vxor.u32 %v331, 2147483648
      %v364 = vxor.u32 %v332, 2147483648
      %v365 = vxor.u32 %v333, 2147483648
      %v366 = vxor.u32 %v334, 2147483648
      %v367 = vxor.u32 %v335, 2147483648
      %v368 = vxor.u32 %v336, 2147483648
      %v369 = vxor.u32 %v337, 2147483648
      %v370 = vxor.u32 %v338, 2147483648
      %v371 = vxor.u32 %v339, 2147483648
      %v372 = vxor.u32 %v340, 2147483648
      %v373 = vxor.u32 %v341, 2147483648
      %v374 = vxor.u32 %v342, 2147483648
      %v375 = vxor.u32 %v343, 2147483648
      %v376 = vxor.u32 %v344, 2147483648
      %v377 = vxor.u32 %v345, 2147483648
      %v378 = vxor.u32 %v346, 2147483648
      %v379 = vxor.u32 %v347, 2147483648
      %v380 = vxor.u32 %v348, 2147483648
      %v381 = vxor.u32 %v349, 2147483648
      %v382 = vxor.u32 %v350, 2147483648
      %v383 = vmul.f32 %v351, 1.442695
      %v384 = vpow.pop %v383
      %v385 = vmul.f32 %v352, 1.442695
      %v386 = vpow.pop %v385
      %v387 = vmul.f32 %v353, 1.442695
      %v388 = vpow.pop %v387
      %v389 = vmul.f32 %v354, 1.442695
      %v390 = vpow.pop %v389
      %v391 = vmul.f32 %v355, 1.442695
      %v392 = vpow.pop %v391
      %v393 = vmul.f32 %v356, 1.442695
      %v394 = vpow.pop %v393
      %v395 = vmul.f32 %v357, 1.442695
      %v396 = vpow.pop %v395
      %v397 = vmul.f32 %v358, 1.442695
      %v398 = vpow.pop %v397
      %v399 = vmul.f32 %v359, 1.442695
      %v400 = vpow.pop %v399
      %v401 = vmul.f32 %v360, 1.442695
      %v402 = vpow.pop %v401
      %v403 = vmul.f32 %v361, 1.442695
      %v404 = vpow.pop %v403
      %v405 = vmul.f32 %v362, 1.442695
      %v406 = vpow.pop %v405
      %v407 = vmul.f32 %v363, 1.442695
      %v408 = vpow.pop %v407
      %v409 = vmul.f32 %v364, 1.442695
      %v410 = vpow.pop %v409
      %v411 = vmul.f32 %v365, 1.442695
      %v412 = vpow.pop %v411
      %v413 = vmul.f32 %v366, 1.442695
      %v414 = vpow.pop %v413
      %v415 = vmul.f32 %v367, 1.442695
      %v416 = vpow.pop %v415
      %v417 = vmul.f32 %v368, 1.442695
      %v418 = vpow.pop %v417
      %v419 = vmul.f32 %v369, 1.442695
      %v420 = vpow.pop %v419
      %v421 = vmul.f32 %v370, 1.442695
      %v422 = vpow.pop %v421
      %v423 = vmul.f32 %v371, 1.442695
      %v424 = vpow.pop %v423
      %v425 = vmul.f32 %v372, 1.442695
      %v426 = vpow.pop %v425
      %v427 = vmul.f32 %v373, 1.442695
      %v428 = vpow.pop %v427
      %v429 = vmul.f32 %v374, 1.442695
      %v430 = vpow.pop %v429
      %v431 = vmul.f32 %v375, 1.442695
      %v432 = vpow.pop %v431
      %v433 = vmul.f32 %v376, 1.442695
      %v434 = vpow.pop %v433
      %v435 = vmul.f32 %v377, 1.442695
      %v436 = vpow.pop %v435
      %v437 = vmul.f32 %v378, 1.442695
      %v438 = vpow.pop %v437
      %v439 = vmul.f32 %v379, 1.442695
      %v440 = vpow.pop %v439
      %v441 = vmul.f32 %v380, 1.442695
      %v442 = vpow.pop %v441
      %v443 = vmul.f32 %v381, 1.442695
      %v444 = vpow.pop %v443
      %v445 = vmul.f32 %v382, 1.442695
      %v446 = vpow.pop %v445
      %v447 = vadd.f32 %v384, 1.0
      %v448 = vadd.f32 %v386, 1.0
      %v449 = vadd.f32 %v388, 1.0
      %v450 = vadd.f32 %v390, 1.0
      %v451 = vadd.f32 %v392, 1.0
      %v452 = vadd.f32 %v394, 1.0
      %v453 = vadd.f32 %v396, 1.0
      %v454 = vadd.f32 %v398, 1.0
      %v455 = vadd.f32 %v400, 1.0
      %v456 = vadd.f32 %v402, 1.0
      %v457 = vadd.f32 %v404, 1.0
      %v458 = vadd.f32 %v406, 1.0
      %v459 = vadd.f32 %v408, 1.0
      %v460 = vadd.f32 %v410, 1.0
      %v461 = vadd.f32 %v412, 1.0
      %v462 = vadd.f32 %v414, 1.0
      %v463 = vadd.f32 %v416, 1.0
      %v464 = vadd.f32 %v418, 1.0
      %v465 = vadd.f32 %v420, 1.0
      %v466 = vadd.f32 %v422, 1.0
      %v467 = vadd.f32 %v424, 1.0
      %v468 = vadd.f32 %v426, 1.0
      %v469 = vadd.f32 %v428, 1.0
      %v470 = vadd.f32 %v430, 1.0
      %v471 = vadd.f32 %v432, 1.0
      %v472 = vadd.f32 %v434, 1.0
      %v473 = vadd.f32 %v436, 1.0
      %v474 = vadd.f32 %v438, 1.0
      %v475 = vadd.f32 %v440, 1.0
      %v476 = vadd.f32 %v442, 1.0
      %v477 = vadd.f32 %v444, 1.0
      %v478 = vadd.f32 %v446, 1.0
      %v479 = vrcp.pop %v447
      %v480 = vmul.f32 %v447, %v479
      %v481 = vsub.f32 1.0, %v480
      %v482 = vmul.f32 %v479, %v481
      %v483 = vadd.f32 %v479, %v482
      %vm484 = vweird.f32 %v447
      %vm485 = vweird.f32 %v479
      %vm486 = vmor %vm484, %vm485
      %v487 = vsel %vm486, %v479, %v483
      %v488 = vand.u32 2147483647, %v447
      %vm489 = vcmp.eq.f32.partialorder %v488, 8.507059e+37
      %v490 = vand.u32 %v447, 2147483648
      %v491 = vor.u32 1.1754944e-38, %v490
      %v492 = vsel %vm489, %v491, %v487
      %v493 = vmul.f32 1.0, %v492
      %v494 = vrcp.pop %v448
      %v495 = vmul.f32 %v448, %v494
      %v496 = vsub.f32 1.0, %v495
      %v497 = vmul.f32 %v494, %v496
      %v498 = vadd.f32 %v494, %v497
      %vm499 = vweird.f32 %v448
      %vm500 = vweird.f32 %v494
      %vm501 = vmor %vm499, %vm500
      %v502 = vsel %vm501, %v494, %v498
      %v503 = vand.u32 2147483647, %v448
      %vm504 = vcmp.eq.f32.partialorder %v503, 8.507059e+37
      %v505 = vand.u32 %v448, 2147483648
      %v506 = vor.u32 1.1754944e-38, %v505
      %v507 = vsel %vm504, %v506, %v502
      %v508 = vmul.f32 1.0, %v507
      %v509 = vrcp.pop %v449
      %v510 = vmul.f32 %v449, %v509
      %v511 = vsub.f32 1.0, %v510
      %v512 = vmul.f32 %v509, %v511
      %v513 = vadd.f32 %v509, %v512
      %vm514 = vweird.f32 %v449
      %vm515 = vweird.f32 %v509
      %vm516 = vmor %vm514, %vm515
      %v517 = vsel %vm516, %v509, %v513
      %v518 = vand.u32 2147483647, %v449
      %vm519 = vcmp.eq.f32.partialorder %v518, 8.507059e+37
      %v520 = vand.u32 %v449, 2147483648
      %v521 = vor.u32 1.1754944e-38, %v520
      %v522 = vsel %vm519, %v521, %v517
      %v523 = vmul.f32 1.0, %v522
      %v524 = vrcp.pop %v450
      %v525 = vmul.f32 %v450, %v524
      %v526 = vsub.f32 1.0, %v525
      %v527 = vmul.f32 %v524, %v526
      %v528 = vadd.f32 %v524, %v527
      %vm529 = vweird.f32 %v450
      %vm530 = vweird.f32 %v524
      %vm531 = vmor %vm529, %vm530
      %v532 = vsel %vm531, %v524, %v528
      %v533 = vand.u32 2147483647, %v450
      %vm534 = vcmp.eq.f32.partialorder %v533, 8.507059e+37
      %v535 = vand.u32 %v450, 2147483648
      %v536 = vor.u32 1.1754944e-38, %v535
      %v537 = vsel %vm534, %v536, %v532
      %v538 = vmul.f32 1.0, %v537
      %v539 = vrcp.pop %v451
      %v540 = vmul.f32 %v451, %v539
      %v541 = vsub.f32 1.0, %v540
      %v542 = vmul.f32 %v539, %v541
      %v543 = vadd.f32 %v539, %v542
      %vm544 = vweird.f32 %v451
      %vm545 = vweird.f32 %v539
      %vm546 = vmor %vm544, %vm545
      %v547 = vsel %vm546, %v539, %v543
      %v548 = vand.u32 2147483647, %v451
      %vm549 = vcmp.eq.f32.partialorder %v548, 8.507059e+37
      %v550 = vand.u32 %v451, 2147483648
      %v551 = vor.u32 1.1754944e-38, %v550
      %v552 = vsel %vm549, %v551, %v547
      %v553 = vmul.f32 1.0, %v552
      %v554 = vrcp.pop %v452
      %v555 = vmul.f32 %v452, %v554
      %v556 = vsub.f32 1.0, %v555
      %v557 = vmul.f32 %v554, %v556
      %v558 = vadd.f32 %v554, %v557
      %vm559 = vweird.f32 %v452
      %vm560 = vweird.f32 %v554
      %vm561 = vmor %vm559, %vm560
      %v562 = vsel %vm561, %v554, %v558
      %v563 = vand.u32 2147483647, %v452
      %vm564 = vcmp.eq.f32.partialorder %v563, 8.507059e+37
      %v565 = vand.u32 %v452, 2147483648
      %v566 = vor.u32 1.1754944e-38, %v565
      %v567 = vsel %vm564, %v566, %v562
      %v568 = vmul.f32 1.0, %v567
      %v569 = vrcp.pop %v453
      %v570 = vmul.f32 %v453, %v569
      %v571 = vsub.f32 1.0, %v570
      %v572 = vmul.f32 %v569, %v571
      %v573 = vadd.f32 %v569, %v572
      %vm574 = vweird.f32 %v453
      %vm575 = vweird.f32 %v569
      %vm576 = vmor %vm574, %vm575
      %v577 = vsel %vm576, %v569, %v573
      %v578 = vand.u32 2147483647, %v453
      %vm579 = vcmp.eq.f32.partialorder %v578, 8.507059e+37
      %v580 = vand.u32 %v453, 2147483648
      %v581 = vor.u32 1.1754944e-38, %v580
      %v582 = vsel %vm579, %v581, %v577
      %v583 = vmul.f32 1.0, %v582
      %v584 = vrcp.pop %v454
      %v585 = vmul.f32 %v454, %v584
      %v586 = vsub.f32 1.0, %v585
      %v587 = vmul.f32 %v584, %v586
      %v588 = vadd.f32 %v584, %v587
      %vm589 = vweird.f32 %v454
      %vm590 = vweird.f32 %v584
      %vm591 = vmor %vm589, %vm590
      %v592 = vsel %vm591, %v584, %v588
      %v593 = vand.u32 2147483647, %v454
      %vm594 = vcmp.eq.f32.partialorder %v593, 8.507059e+37
      %v595 = vand.u32 %v454, 2147483648
      %v596 = vor.u32 1.1754944e-38, %v595
      %v597 = vsel %vm594, %v596, %v592
      %v598 = vmul.f32 1.0, %v597
      %v599 = vrcp.pop %v455
      %v600 = vmul.f32 %v455, %v599
      %v601 = vsub.f32 1.0, %v600
      %v602 = vmul.f32 %v599, %v601
      %v603 = vadd.f32 %v599, %v602
      %vm604 = vweird.f32 %v455
      %vm605 = vweird.f32 %v599
      %vm606 = vmor %vm604, %vm605
      %v607 = vsel %vm606, %v599, %v603
      %v608 = vand.u32 2147483647, %v455
      %vm609 = vcmp.eq.f32.partialorder %v608, 8.507059e+37
      %v610 = vand.u32 %v455, 2147483648
      %v611 = vor.u32 1.1754944e-38, %v610
      %v612 = vsel %vm609, %v611, %v607
      %v613 = vmul.f32 1.0, %v612
      %v614 = vrcp.pop %v456
      %v615 = vmul.f32 %v456, %v614
      %v616 = vsub.f32 1.0, %v615
      %v617 = vmul.f32 %v614, %v616
      %v618 = vadd.f32 %v614, %v617
      %vm619 = vweird.f32 %v456
      %vm620 = vweird.f32 %v614
      %vm621 = vmor %vm619, %vm620
      %v622 = vsel %vm621, %v614, %v618
      %v623 = vand.u32 2147483647, %v456
      %vm624 = vcmp.eq.f32.partialorder %v623, 8.507059e+37
      %v625 = vand.u32 %v456, 2147483648
      %v626 = vor.u32 1.1754944e-38, %v625
      %v627 = vsel %vm624, %v626, %v622
      %v628 = vmul.f32 1.0, %v627
      %v629 = vrcp.pop %v457
      %v630 = vmul.f32 %v457, %v629
      %v631 = vsub.f32 1.0, %v630
      %v632 = vmul.f32 %v629, %v631
      %v633 = vadd.f32 %v629, %v632
      %vm634 = vweird.f32 %v457
      %vm635 = vweird.f32 %v629
      %vm636 = vmor %vm634, %vm635
      %v637 = vsel %vm636, %v629, %v633
      %v638 = vand.u32 2147483647, %v457
      %vm639 = vcmp.eq.f32.partialorder %v638, 8.507059e+37
      %v640 = vand.u32 %v457, 2147483648
      %v641 = vor.u32 1.1754944e-38, %v640
      %v642 = vsel %vm639, %v641, %v637
      %v643 = vmul.f32 1.0, %v642
      %v644 = vrcp.pop %v458
      %v645 = vmul.f32 %v458, %v644
      %v646 = vsub.f32 1.0, %v645
      %v647 = vmul.f32 %v644, %v646
      %v648 = vadd.f32 %v644, %v647
      %vm649 = vweird.f32 %v458
      %vm650 = vweird.f32 %v644
      %vm651 = vmor %vm649, %vm650
      %v652 = vsel %vm651, %v644, %v648
      %v653 = vand.u32 2147483647, %v458
      %vm654 = vcmp.eq.f32.partialorder %v653, 8.507059e+37
      %v655 = vand.u32 %v458, 2147483648
      %v656 = vor.u32 1.1754944e-38, %v655
      %v657 = vsel %vm654, %v656, %v652
      %v658 = vmul.f32 1.0, %v657
      %v659 = vrcp.pop %v459
      %v660 = vmul.f32 %v459, %v659
      %v661 = vsub.f32 1.0, %v660
      %v662 = vmul.f32 %v659, %v661
      %v663 = vadd.f32 %v659, %v662
      %vm664 = vweird.f32 %v459
      %vm665 = vweird.f32 %v659
      %vm666 = vmor %vm664, %vm665
      %v667 = vsel %vm666, %v659, %v663
      %v668 = vand.u32 2147483647, %v459
      %vm669 = vcmp.eq.f32.partialorder %v668, 8.507059e+37
      %v670 = vand.u32 %v459, 2147483648
      %v671 = vor.u32 1.1754944e-38, %v670
      %v672 = vsel %vm669, %v671, %v667
      %v673 = vmul.f32 1.0, %v672
      %v674 = vrcp.pop %v460
      %v675 = vmul.f32 %v460, %v674
      %v676 = vsub.f32 1.0, %v675
      %v677 = vmul.f32 %v674, %v676
      %v678 = vadd.f32 %v674, %v677
      %vm679 = vweird.f32 %v460
      %vm680 = vweird.f32 %v674
      %vm681 = vmor %vm679, %vm680
      %v682 = vsel %vm681, %v674, %v678
      %v683 = vand.u32 2147483647, %v460
      %vm684 = vcmp.eq.f32.partialorder %v683, 8.507059e+37
      %v685 = vand.u32 %v460, 2147483648
      %v686 = vor.u32 1.1754944e-38, %v685
      %v687 = vsel %vm684, %v686, %v682
      %v688 = vmul.f32 1.0, %v687
      %v689 = vrcp.pop %v461
      %v690 = vmul.f32 %v461, %v689
      %v691 = vsub.f32 1.0, %v690
      %v692 = vmul.f32 %v689, %v691
      %v693 = vadd.f32 %v689, %v692
      %vm694 = vweird.f32 %v461
      %vm695 = vweird.f32 %v689
      %vm696 = vmor %vm694, %vm695
      %v697 = vsel %vm696, %v689, %v693
      %v698 = vand.u32 2147483647, %v461
      %vm699 = vcmp.eq.f32.partialorder %v698, 8.507059e+37
      %v700 = vand.u32 %v461, 2147483648
      %v701 = vor.u32 1.1754944e-38, %v700
      %v702 = vsel %vm699, %v701, %v697
      %v703 = vmul.f32 1.0, %v702
      %v704 = vrcp.pop %v462
      %v705 = vmul.f32 %v462, %v704
      %v706 = vsub.f32 1.0, %v705
      %v707 = vmul.f32 %v704, %v706
      %v708 = vadd.f32 %v704, %v707
      %vm709 = vweird.f32 %v462
      %vm710 = vweird.f32 %v704
      %vm711 = vmor %vm709, %vm710
      %v712 = vsel %vm711, %v704, %v708
      %v713 = vand.u32 2147483647, %v462
      %vm714 = vcmp.eq.f32.partialorder %v713, 8.507059e+37
      %v715 = vand.u32 %v462, 2147483648
      %v716 = vor.u32 1.1754944e-38, %v715
      %v717 = vsel %vm714, %v716, %v712
      %v718 = vmul.f32 1.0, %v717
      %v719 = vrcp.pop %v463
      %v720 = vmul.f32 %v463, %v719
      %v721 = vsub.f32 1.0, %v720
      %v722 = vmul.f32 %v719, %v721
      %v723 = vadd.f32 %v719, %v722
      %vm724 = vweird.f32 %v463
      %vm725 = vweird.f32 %v719
      %vm726 = vmor %vm724, %vm725
      %v727 = vsel %vm726, %v719, %v723
      %v728 = vand.u32 2147483647, %v463
      %vm729 = vcmp.eq.f32.partialorder %v728, 8.507059e+37
      %v730 = vand.u32 %v463, 2147483648
      %v731 = vor.u32 1.1754944e-38, %v730
      %v732 = vsel %vm729, %v731, %v727
      %v733 = vmul.f32 1.0, %v732
      %v734 = vrcp.pop %v464
      %v735 = vmul.f32 %v464, %v734
      %v736 = vsub.f32 1.0, %v735
      %v737 = vmul.f32 %v734, %v736
      %v738 = vadd.f32 %v734, %v737
      %vm739 = vweird.f32 %v464
      %vm740 = vweird.f32 %v734
      %vm741 = vmor %vm739, %vm740
      %v742 = vsel %vm741, %v734, %v738
      %v743 = vand.u32 2147483647, %v464
      %vm744 = vcmp.eq.f32.partialorder %v743, 8.507059e+37
      %v745 = vand.u32 %v464, 2147483648
      %v746 = vor.u32 1.1754944e-38, %v745
      %v747 = vsel %vm744, %v746, %v742
      %v748 = vmul.f32 1.0, %v747
      %v749 = vrcp.pop %v465
      %v750 = vmul.f32 %v465, %v749
      %v751 = vsub.f32 1.0, %v750
      %v752 = vmul.f32 %v749, %v751
      %v753 = vadd.f32 %v749, %v752
      %vm754 = vweird.f32 %v465
      %vm755 = vweird.f32 %v749
      %vm756 = vmor %vm754, %vm755
      %v757 = vsel %vm756, %v749, %v753
      %v758 = vand.u32 2147483647, %v465
      %vm759 = vcmp.eq.f32.partialorder %v758, 8.507059e+37
      %v760 = vand.u32 %v465, 2147483648
      %v761 = vor.u32 1.1754944e-38, %v760
      %v762 = vsel %vm759, %v761, %v757
      %v763 = vmul.f32 1.0, %v762
      %v764 = vrcp.pop %v466
      %v765 = vmul.f32 %v466, %v764
      %v766 = vsub.f32 1.0, %v765
      %v767 = vmul.f32 %v764, %v766
      %v768 = vadd.f32 %v764, %v767
      %vm769 = vweird.f32 %v466
      %vm770 = vweird.f32 %v764
      %vm771 = vmor %vm769, %vm770
      %v772 = vsel %vm771, %v764, %v768
      %v773 = vand.u32 2147483647, %v466
      %vm774 = vcmp.eq.f32.partialorder %v773, 8.507059e+37
      %v775 = vand.u32 %v466, 2147483648
      %v776 = vor.u32 1.1754944e-38, %v775
      %v777 = vsel %vm774, %v776, %v772
      %v778 = vmul.f32 1.0, %v777
      %v779 = vrcp.pop %v467
      %v780 = vmul.f32 %v467, %v779
      %v781 = vsub.f32 1.0, %v780
      %v782 = vmul.f32 %v779, %v781
      %v783 = vadd.f32 %v779, %v782
      %vm784 = vweird.f32 %v467
      %vm785 = vweird.f32 %v779
      %vm786 = vmor %vm784, %vm785
      %v787 = vsel %vm786, %v779, %v783
      %v788 = vand.u32 2147483647, %v467
      %vm789 = vcmp.eq.f32.partialorder %v788, 8.507059e+37
      %v790 = vand.u32 %v467, 2147483648
      %v791 = vor.u32 1.1754944e-38, %v790
      %v792 = vsel %vm789, %v791, %v787
      %v793 = vmul.f32 1.0, %v792
      %v794 = vrcp.pop %v468
      %v795 = vmul.f32 %v468, %v794
      %v796 = vsub.f32 1.0, %v795
      %v797 = vmul.f32 %v794, %v796
      %v798 = vadd.f32 %v794, %v797
      %vm799 = vweird.f32 %v468
      %vm800 = vweird.f32 %v794
      %vm801 = vmor %vm799, %vm800
      %v802 = vsel %vm801, %v794, %v798
      %v803 = vand.u32 2147483647, %v468
      %vm804 = vcmp.eq.f32.partialorder %v803, 8.507059e+37
      %v805 = vand.u32 %v468, 2147483648
      %v806 = vor.u32 1.1754944e-38, %v805
      %v807 = vsel %vm804, %v806, %v802
      %v808 = vmul.f32 1.0, %v807
      %v809 = vrcp.pop %v469
      %v810 = vmul.f32 %v469, %v809
      %v811 = vsub.f32 1.0, %v810
      %v812 = vmul.f32 %v809, %v811
      %v813 = vadd.f32 %v809, %v812
      %vm814 = vweird.f32 %v469
      %vm815 = vweird.f32 %v809
      %vm816 = vmor %vm814, %vm815
      %v817 = vsel %vm816, %v809, %v813
      %v818 = vand.u32 2147483647, %v469
      %vm819 = vcmp.eq.f32.partialorder %v818, 8.507059e+37
      %v820 = vand.u32 %v469, 2147483648
      %v821 = vor.u32 1.1754944e-38, %v820
      %v822 = vsel %vm819, %v821, %v817
      %v823 = vmul.f32 1.0, %v822
      %v824 = vrcp.pop %v470
      %v825 = vmul.f32 %v470, %v824
      %v826 = vsub.f32 1.0, %v825
      %v827 = vmul.f32 %v824, %v826
      %v828 = vadd.f32 %v824, %v827
      %vm829 = vweird.f32 %v470
      %vm830 = vweird.f32 %v824
      %vm831 = vmor %vm829, %vm830
      %v832 = vsel %vm831, %v824, %v828
      %v833 = vand.u32 2147483647, %v470
      %vm834 = vcmp.eq.f32.partialorder %v833, 8.507059e+37
      %v835 = vand.u32 %v470, 2147483648
      %v836 = vor.u32 1.1754944e-38, %v835
      %v837 = vsel %vm834, %v836, %v832
      %v838 = vmul.f32 1.0, %v837
      %v839 = vrcp.pop %v471
      %v840 = vmul.f32 %v471, %v839
      %v841 = vsub.f32 1.0, %v840
      %v842 = vmul.f32 %v839, %v841
      %v843 = vadd.f32 %v839, %v842
      %vm844 = vweird.f32 %v471
      %vm845 = vweird.f32 %v839
      %vm846 = vmor %vm844, %vm845
      %v847 = vsel %vm846, %v839, %v843
      %v848 = vand.u32 2147483647, %v471
      %vm849 = vcmp.eq.f32.partialorder %v848, 8.507059e+37
      %v850 = vand.u32 %v471, 2147483648
      %v851 = vor.u32 1.1754944e-38, %v850
      %v852 = vsel %vm849, %v851, %v847
      %v853 = vmul.f32 1.0, %v852
      %v854 = vrcp.pop %v472
      %v855 = vmul.f32 %v472, %v854
      %v856 = vsub.f32 1.0, %v855
      %v857 = vmul.f32 %v854, %v856
      %v858 = vadd.f32 %v854, %v857
      %vm859 = vweird.f32 %v472
      %vm860 = vweird.f32 %v854
      %vm861 = vmor %vm859, %vm860
      %v862 = vsel %vm861, %v854, %v858
      %v863 = vand.u32 2147483647, %v472
      %vm864 = vcmp.eq.f32.partialorder %v863, 8.507059e+37
      %v865 = vand.u32 %v472, 2147483648
      %v866 = vor.u32 1.1754944e-38, %v865
      %v867 = vsel %vm864, %v866, %v862
      %v868 = vmul.f32 1.0, %v867
      %v869 = vrcp.pop %v473
      %v870 = vmul.f32 %v473, %v869
      %v871 = vsub.f32 1.0, %v870
      %v872 = vmul.f32 %v869, %v871
      %v873 = vadd.f32 %v869, %v872
      %vm874 = vweird.f32 %v473
      %vm875 = vweird.f32 %v869
      %vm876 = vmor %vm874, %vm875
      %v877 = vsel %vm876, %v869, %v873
      %v878 = vand.u32 2147483647, %v473
      %vm879 = vcmp.eq.f32.partialorder %v878, 8.507059e+37
      %v880 = vand.u32 %v473, 2147483648
      %v881 = vor.u32 1.1754944e-38, %v880
      %v882 = vsel %vm879, %v881, %v877
      %v883 = vmul.f32 1.0, %v882
      %v884 = vrcp.pop %v474
      %v885 = vmul.f32 %v474, %v884
      %v886 = vsub.f32 1.0, %v885
      %v887 = vmul.f32 %v884, %v886
      %v888 = vadd.f32 %v884, %v887
      %vm889 = vweird.f32 %v474
      %vm890 = vweird.f32 %v884
      %vm891 = vmor %vm889, %vm890
      %v892 = vsel %vm891, %v884, %v888
      %v893 = vand.u32 2147483647, %v474
      %vm894 = vcmp.eq.f32.partialorder %v893, 8.507059e+37
      %v895 = vand.u32 %v474, 2147483648
      %v896 = vor.u32 1.1754944e-38, %v895
      %v897 = vsel %vm894, %v896, %v892
      %v898 = vmul.f32 1.0, %v897
      %v899 = vrcp.pop %v475
      %v900 = vmul.f32 %v475, %v899
      %v901 = vsub.f32 1.0, %v900
      %v902 = vmul.f32 %v899, %v901
      %v903 = vadd.f32 %v899, %v902
      %vm904 = vweird.f32 %v475
      %vm905 = vweird.f32 %v899
      %vm906 = vmor %vm904, %vm905
      %v907 = vsel %vm906, %v899, %v903
      %v908 = vand.u32 2147483647, %v475
      %vm909 = vcmp.eq.f32.partialorder %v908, 8.507059e+37
      %v910 = vand.u32 %v475, 2147483648
      %v911 = vor.u32 1.1754944e-38, %v910
      %v912 = vsel %vm909, %v911, %v907
      %v913 = vmul.f32 1.0, %v912
      %v914 = vrcp.pop %v476
      %v915 = vmul.f32 %v476, %v914
      %v916 = vsub.f32 1.0, %v915
      %v917 = vmul.f32 %v914, %v916
      %v918 = vadd.f32 %v914, %v917
      %vm919 = vweird.f32 %v476
      %vm920 = vweird.f32 %v914
      %vm921 = vmor %vm919, %vm920
      %v922 = vsel %vm921, %v914, %v918
      %v923 = vand.u32 2147483647, %v476
      %vm924 = vcmp.eq.f32.partialorder %v923, 8.507059e+37
      %v925 = vand.u32 %v476, 2147483648
      %v926 = vor.u32 1.1754944e-38, %v925
      %v927 = vsel %vm924, %v926, %v922
      %v928 = vmul.f32 1.0, %v927
      %v929 = vrcp.pop %v477
      %v930 = vmul.f32 %v477, %v929
      %v931 = vsub.f32 1.0, %v930
      %v932 = vmul.f32 %v929, %v931
      %v933 = vadd.f32 %v929, %v932
      %vm934 = vweird.f32 %v477
      %vm935 = vweird.f32 %v929
      %vm936 = vmor %vm934, %vm935
      %v937 = vsel %vm936, %v929, %v933
      %v938 = vand.u32 2147483647, %v477
      %vm939 = vcmp.eq.f32.partialorder %v938, 8.507059e+37
      %v940 = vand.u32 %v477, 2147483648
      %v941 = vor.u32 1.1754944e-38, %v940
      %v942 = vsel %vm939, %v941, %v937
      %v943 = vmul.f32 1.0, %v942
      %v944 = vrcp.pop %v478
      %v945 = vmul.f32 %v478, %v944
      %v946 = vsub.f32 1.0, %v945
      %v947 = vmul.f32 %v944, %v946
      %v948 = vadd.f32 %v944, %v947
      %vm949 = vweird.f32 %v478
      %vm950 = vweird.f32 %v944
      %vm951 = vmor %vm949, %vm950
      %v952 = vsel %vm951, %v944, %v948
      %v953 = vand.u32 2147483647, %v478
      %vm954 = vcmp.eq.f32.partialorder %v953, 8.507059e+37
      %v955 = vand.u32 %v478, 2147483648
      %v956 = vor.u32 1.1754944e-38, %v955
      %v957 = vsel %vm954, %v956, %v952
      %v958 = vmul.f32 1.0, %v957
      %v959 = vmul.f32 %v319, %v493
      %v960 = vmul.f32 %v320, %v508
      %v961 = vmul.f32 %v321, %v523
      %v962 = vmul.f32 %v322, %v538
      %v963 = vmul.f32 %v323, %v553
      %v964 = vmul.f32 %v324, %v568
      %v965 = vmul.f32 %v325, %v583
      %v966 = vmul.f32 %v326, %v598
      %v967 = vmul.f32 %v327, %v613
      %v968 = vmul.f32 %v328, %v628
      %v969 = vmul.f32 %v329, %v643
      %v970 = vmul.f32 %v330, %v658
      %v971 = vmul.f32 %v331, %v673
      %v972 = vmul.f32 %v332, %v688
      %v973 = vmul.f32 %v333, %v703
      %v974 = vmul.f32 %v334, %v718
      %v975 = vmul.f32 %v335, %v733
      %v976 = vmul.f32 %v336, %v748
      %v977 = vmul.f32 %v337, %v763
      %v978 = vmul.f32 %v338, %v778
      %v979 = vmul.f32 %v339, %v793
      %v980 = vmul.f32 %v340, %v808
      %v981 = vmul.f32 %v341, %v823
      %v982 = vmul.f32 %v342, %v838
      %v983 = vmul.f32 %v343, %v853
      %v984 = vmul.f32 %v344, %v868
      %v985 = vmul.f32 %v345, %v883
      %v986 = vmul.f32 %v346, %v898
      %v987 = vmul.f32 %v347, %v913
      %v988 = vmul.f32 %v348, %v928
      %v989 = vmul.f32 %v349, %v943
      %v990 = vmul.f32 %v350, %v958
      %vm991 = vcmask 64512
      %992 = vst.msk [vmem:[#allocation3] sm:$0xff] %vm991, 0.0
      %993 = vst.msk [vmem:[#allocation3 + $0x8] sm:$0xff] %vm991, 0.0
      %vm994 = vcmask 58368
      %995 = vst.msk [vmem:[#allocation3 + $0x10] sm:$0x3] %vm994, 0.0
      %s996 = scalar_lea.vmem [#allocation3], 408
      %997 = vst.msk [vmem:[%s996] sm:$0xff] %vm991, 0.0
      %998 = vst.msk [vmem:[%s996 + $0x8] sm:$0xff] %vm991, 0.0
      %999 = vst.msk [vmem:[%s996 + $0x10] sm:$0x3] %vm994, 0.0
      %vm1000 = vcmask 57344
      %1001 = vst.msk [vmem:[#allocation3] sm:$0x1] %vm1000, 0.0
      %1002 = vst.msk [vmem:[#allocation3 + $0x18] sm:$0x1] %vm1000, 0.0
      %1003 = vst.msk [vmem:[#allocation3 + $0x30] sm:$0x1] %vm1000, 0.0
      %1004 = vst.msk [vmem:[#allocation3 + $0x48] sm:$0x1] %vm1000, 0.0
      %1005 = vst.msk [vmem:[#allocation3 + $0x60] sm:$0x1] %vm1000, 0.0
      %1006 = vst.msk [vmem:[#allocation3 + $0x78] sm:$0x1] %vm1000, 0.0
      %1007 = vst.msk [vmem:[#allocation3 + $0x90] sm:$0x1] %vm1000, 0.0
      %1008 = vst.msk [vmem:[#allocation3 + $0xa8] sm:$0x1] %vm1000, 0.0
      %1009 = vst.msk [vmem:[#allocation3 + $0xc0] sm:$0x1] %vm1000, 0.0
      %1010 = vst.msk [vmem:[#allocation3 + $0xd8] sm:$0x1] %vm1000, 0.0
      %1011 = vst.msk [vmem:[#allocation3 + $0xf0] sm:$0x1] %vm1000, 0.0
      %1012 = vst.msk [vmem:[#allocation3 + $0x108] sm:$0x1] %vm1000, 0.0
      %1013 = vst.msk [vmem:[#allocation3 + $0x120] sm:$0x1] %vm1000, 0.0
      %1014 = vst.msk [vmem:[#allocation3 + $0x138] sm:$0x1] %vm1000, 0.0
      %1015 = vst.msk [vmem:[#allocation3 + $0x150] sm:$0x1] %vm1000, 0.0
      %1016 = vst.msk [vmem:[#allocation3 + $0x168] sm:$0x1] %vm1000, 0.0
      %1017 = vst.msk [vmem:[#allocation3 + $0x180] sm:$0x1] %vm1000, 0.0
      %1018 = vst.msk [vmem:[#allocation3 + $0x198] sm:$0x1] %vm1000, 0.0
      %1019 = vst.msk [vmem:[#allocation3 + $0x11] sm:$0x1] %vm1000, 0.0
      %1020 = vst.msk [vmem:[#allocation3 + $0x29] sm:$0x1] %vm1000, 0.0
      %1021 = vst.msk [vmem:[#allocation3 + $0x41] sm:$0x1] %vm1000, 0.0
      %1022 = vst.msk [vmem:[#allocation3 + $0x59] sm:$0x1] %vm1000, 0.0
      %1023 = vst.msk [vmem:[#allocation3 + $0x71] sm:$0x1] %vm1000, 0.0
      %1024 = vst.msk [vmem:[#allocation3 + $0x89] sm:$0x1] %vm1000, 0.0
      %1025 = vst.msk [vmem:[#allocation3 + $0xa1] sm:$0x1] %vm1000, 0.0
      %1026 = vst.msk [vmem:[#allocation3 + $0xb9] sm:$0x1] %vm1000, 0.0
      %1027 = vst.msk [vmem:[#allocation3 + $0xd1] sm:$0x1] %vm1000, 0.0
      %1028 = vst.msk [vmem:[#allocation3 + $0xe9] sm:$0x1] %vm1000, 0.0
      %1029 = vst.msk [vmem:[#allocation3 + $0x101] sm:$0x1] %vm1000, 0.0
      %1030 = vst.msk [vmem:[#allocation3 + $0x119] sm:$0x1] %vm1000, 0.0
      %1031 = vst.msk [vmem:[#allocation3 + $0x131] sm:$0x1] %vm1000, 0.0
      %1032 = vst.msk [vmem:[#allocation3 + $0x149] sm:$0x1] %vm1000, 0.0
      %1033 = vst.msk [vmem:[#allocation3 + $0x161] sm:$0x1] %vm1000, 0.0
      %1034 = vst.msk [vmem:[#allocation3 + $0x179] sm:$0x1] %vm1000, 0.0
      %1035 = vst.msk [vmem:[#allocation3 + $0x191] sm:$0x1] %vm1000, 0.0
      %1036 = vst.msk [vmem:[#allocation3 + $0x1a9] sm:$0x1] %vm1000, 0.0
      %s1037 = scalar_lea.vmem [#allocation3], 24
      %1038 = vst.msk [vmem:[%s1037 + $0x1] sm:$0xff] %vm991, %v959
      %1039 = vst.msk [vmem:[%s1037 + $0x9] sm:$0xff] %vm991, %v960
      %1040 = vst.msk [vmem:[%s1037 + $0x19] sm:$0xff] %vm991, %v961
      %1041 = vst.msk [vmem:[%s1037 + $0x21] sm:$0xff] %vm991, %v962
      %1042 = vst.msk [vmem:[%s1037 + $0x31] sm:$0xff] %vm991, %v963
      %1043 = vst.msk [vmem:[%s1037 + $0x39] sm:$0xff] %vm991, %v964
      %1044 = vst.msk [vmem:[%s1037 + $0x49] sm:$0xff] %vm991, %v965
      %1045 = vst.msk [vmem:[%s1037 + $0x51] sm:$0xff] %vm991, %v966
      %1046 = vst.msk [vmem:[%s1037 + $0x61] sm:$0xff] %vm991, %v967
      %1047 = vst.msk [vmem:[%s1037 + $0x69] sm:$0xff] %vm991, %v968
      %1048 = vst.msk [vmem:[%s1037 + $0x79] sm:$0xff] %vm991, %v969
      %1049 = vst.msk [vmem:[%s1037 + $0x81] sm:$0xff] %vm991, %v970
      %1050 = vst.msk [vmem:[%s1037 + $0x91] sm:$0xff] %vm991, %v971
      %1051 = vst.msk [vmem:[%s1037 + $0x99] sm:$0xff] %vm991, %v972
      %1052 = vst.msk [vmem:[%s1037 + $0xa9] sm:$0xff] %vm991, %v973
      %1053 = vst.msk [vmem:[%s1037 + $0xb1] sm:$0xff] %vm991, %v974
      %1054 = vst.msk [vmem:[%s1037 + $0xc1] sm:$0xff] %vm991, %v975
      %1055 = vst.msk [vmem:[%s1037 + $0xc9] sm:$0xff] %vm991, %v976
      %1056 = vst.msk [vmem:[%s1037 + $0xd9] sm:$0xff] %vm991, %v977
      %1057 = vst.msk [vmem:[%s1037 + $0xe1] sm:$0xff] %vm991, %v978
      %1058 = vst.msk [vmem:[%s1037 + $0xf1] sm:$0xff] %vm991, %v979
      %1059 = vst.msk [vmem:[%s1037 + $0xf9] sm:$0xff] %vm991, %v980
      %1060 = vst.msk [vmem:[%s1037 + $0x109] sm:$0xff] %vm991, %v981
      %1061 = vst.msk [vmem:[%s1037 + $0x111] sm:$0xff] %vm991, %v982
      %1062 = vst.msk [vmem:[%s1037 + $0x121] sm:$0xff] %vm991, %v983
      %1063 = vst.msk [vmem:[%s1037 + $0x129] sm:$0xff] %vm991, %v984
      %1064 = vst.msk [vmem:[%s1037 + $0x139] sm:$0xff] %vm991, %v985
      %1065 = vst.msk [vmem:[%s1037 + $0x141] sm:$0xff] %vm991, %v986
      %1066 = vst.msk [vmem:[%s1037 + $0x151] sm:$0xff] %vm991, %v987
      %1067 = vst.msk [vmem:[%s1037 + $0x159] sm:$0xff] %vm991, %v988
      %1068 = vst.msk [vmem:[%s1037 + $0x169] sm:$0xff] %vm991, %v989
      %1069 = vst.msk [vmem:[%s1037 + $0x171] sm:$0xff] %vm991, %v990
      %v1070 = vld [vmem:[#allocation3] sm:$0xff]
      %v1071 = vld [vmem:[#allocation3 + $0x8] sm:$0xff]
      %v1072 = vld [vmem:[#allocation3 + $0x18] sm:$0xff]
      %v1073 = vld [vmem:[#allocation3 + $0x20] sm:$0xff]
      %v1074 = vld [vmem:[#allocation3 + $0x30] sm:$0xff]
      %v1075 = vld [vmem:[#allocation3 + $0x38] sm:$0xff]
      %v1076 = vld [vmem:[#allocation3 + $0x48] sm:$0xff]
      %v1077 = vld [vmem:[#allocation3 + $0x50] sm:$0xff]
      %v1078 = vld [vmem:[#allocation3 + $0x60] sm:$0xff]
      %v1079 = vld [vmem:[#allocation3 + $0x68] sm:$0xff]
      %v1080 = vld [vmem:[#allocation3 + $0x78] sm:$0xff]
      %v1081 = vld [vmem:[#allocation3 + $0x80] sm:$0xff]
      %v1082 = vld [vmem:[#allocation3 + $0x90] sm:$0xff]
      %v1083 = vld [vmem:[#allocation3 + $0x98] sm:$0xff]
      %v1084 = vld [vmem:[#allocation3 + $0xa8] sm:$0xff]
      %v1085 = vld [vmem:[#allocation3 + $0xb0] sm:$0xff]
      %v1086 = vld [vmem:[#allocation3 + $0xc0] sm:$0xff]
      %v1087 = vld [vmem:[#allocation3 + $0xc8] sm:$0xff]
      %v1088 = vld [vmem:[#allocation3 + $0xd8] sm:$0xff]
      %v1089 = vld [vmem:[#allocation3 + $0xe0] sm:$0xff]
      %v1090 = vld [vmem:[#allocation3 + $0xf0] sm:$0xff]
      %v1091 = vld [vmem:[#allocation3 + $0xf8] sm:$0xff]
      %v1092 = vld [vmem:[#allocation3 + $0x108] sm:$0xff]
      %v1093 = vld [vmem:[#allocation3 + $0x110] sm:$0xff]
      %v1094 = vld [vmem:[#allocation3 + $0x120] sm:$0xff]
      %v1095 = vld [vmem:[#allocation3 + $0x128] sm:$0xff]
      %v1096 = vld [vmem:[#allocation3 + $0x138] sm:$0xff]
      %v1097 = vld [vmem:[#allocation3 + $0x140] sm:$0xff]
      %v1098 = vld [vmem:[#allocation3 + $0x150] sm:$0xff]
      %v1099 = vld [vmem:[#allocation3 + $0x158] sm:$0xff]
      %v1100 = vld [vmem:[#allocation3 + $0x168] sm:$0xff]
      %v1101 = vld [vmem:[#allocation3 + $0x170] sm:$0xff]
      %1102 = vst.msk [vmem:[#allocation2] sm:$0xff] %vm991, %v1070
      %1103 = vst.msk [vmem:[#allocation2 + $0x8] sm:$0xff] %vm991, %v1071
      %1104 = vst.msk [vmem:[#allocation2 + $0x10] sm:$0xff] %vm991, %v1072
      %1105 = vst.msk [vmem:[#allocation2 + $0x18] sm:$0xff] %vm991, %v1073
      %1106 = vst.msk [vmem:[#allocation2 + $0x20] sm:$0xff] %vm991, %v1074
      %1107 = vst.msk [vmem:[#allocation2 + $0x28] sm:$0xff] %vm991, %v1075
      %1108 = vst.msk [vmem:[#allocation2 + $0x30] sm:$0xff] %vm991, %v1076
      %1109 = vst.msk [vmem:[#allocation2 + $0x38] sm:$0xff] %vm991, %v1077
      %1110 = vst.msk [vmem:[#allocation2 + $0x40] sm:$0xff] %vm991, %v1078
      %1111 = vst.msk [vmem:[#allocation2 + $0x48] sm:$0xff] %vm991, %v1079
      %1112 = vst.msk [vmem:[#allocation2 + $0x50] sm:$0xff] %vm991, %v1080
      %1113 = vst.msk [vmem:[#allocation2 + $0x58] sm:$0xff] %vm991, %v1081
      %1114 = vst.msk [vmem:[#allocation2 + $0x60] sm:$0xff] %vm991, %v1082
      %1115 = vst.msk [vmem:[#allocation2 + $0x68] sm:$0xff] %vm991, %v1083
      %1116 = vst.msk [vmem:[#allocation2 + $0x70] sm:$0xff] %vm991, %v1084
      %1117 = vst.msk [vmem:[#allocation2 + $0x78] sm:$0xff] %vm991, %v1085
      %1118 = vst.msk [vmem:[#allocation2 + $0x80] sm:$0xff] %vm991, %v1086
      %1119 = vst.msk [vmem:[#allocation2 + $0x88] sm:$0xff] %vm991, %v1087
      %1120 = vst.msk [vmem:[#allocation2 + $0x90] sm:$0xff] %vm991, %v1088
      %1121 = vst.msk [vmem:[#allocation2 + $0x98] sm:$0xff] %vm991, %v1089
      %1122 = vst.msk [vmem:[#allocation2 + $0xa0] sm:$0xff] %vm991, %v1090
      %1123 = vst.msk [vmem:[#allocation2 + $0xa8] sm:$0xff] %vm991, %v1091
      %1124 = vst.msk [vmem:[#allocation2 + $0xb0] sm:$0xff] %vm991, %v1092
      %1125 = vst.msk [vmem:[#allocation2 + $0xb8] sm:$0xff] %vm991, %v1093
      %1126 = vst.msk [vmem:[#allocation2 + $0xc0] sm:$0xff] %vm991, %v1094
      %1127 = vst.msk [vmem:[#allocation2 + $0xc8] sm:$0xff] %vm991, %v1095
      %1128 = vst.msk [vmem:[#allocation2 + $0xd0] sm:$0xff] %vm991, %v1096
      %1129 = vst.msk [vmem:[#allocation2 + $0xd8] sm:$0xff] %vm991, %v1097
      %1130 = vst.msk [vmem:[#allocation2 + $0xe0] sm:$0xff] %vm991, %v1098
      %1131 = vst.msk [vmem:[#allocation2 + $0xe8] sm:$0xff] %vm991, %v1099
      %1132 = vst.msk [vmem:[#allocation2 + $0xf0] sm:$0xff] %vm991, %v1100
      %1133 = vst.msk [vmem:[#allocation2 + $0xf8] sm:$0xff] %vm991, %v1101
      %v1134 = vld [vmem:[#allocation3 + $0x1] sm:$0xff]
      %v1135 = vld [vmem:[#allocation3 + $0x9] sm:$0xff]
      %v1136 = vld [vmem:[#allocation3 + $0x19] sm:$0xff]
      %v1137 = vld [vmem:[#allocation3 + $0x21] sm:$0xff]
      %v1138 = vld [vmem:[#allocation3 + $0x31] sm:$0xff]
      %v1139 = vld [vmem:[#allocation3 + $0x39] sm:$0xff]
      %v1140 = vld [vmem:[#allocation3 + $0x49] sm:$0xff]
      %v1141 = vld [vmem:[#allocation3 + $0x51] sm:$0xff]
      %v1142 = vld [vmem:[#allocation3 + $0x61] sm:$0xff]
      %v1143 = vld [vmem:[#allocation3 + $0x69] sm:$0xff]
      %v1144 = vld [vmem:[#allocation3 + $0x79] sm:$0xff]
      %v1145 = vld [vmem:[#allocation3 + $0x81] sm:$0xff]
      %v1146 = vld [vmem:[#allocation3 + $0x91] sm:$0xff]
      %v1147 = vld [vmem:[#allocation3 + $0x99] sm:$0xff]
      %v1148 = vld [vmem:[#allocation3 + $0xa9] sm:$0xff]
      %v1149 = vld [vmem:[#allocation3 + $0xb1] sm:$0xff]
      %v1150 = vld [vmem:[#allocation3 + $0xc1] sm:$0xff]
      %v1151 = vld [vmem:[#allocation3 + $0xc9] sm:$0xff]
      %v1152 = vld [vmem:[#allocation3 + $0xd9] sm:$0xff]
      %v1153 = vld [vmem:[#allocation3 + $0xe1] sm:$0xff]
      %v1154 = vld [vmem:[#allocation3 + $0xf1] sm:$0xff]
      %v1155 = vld [vmem:[#allocation3 + $0xf9] sm:$0xff]
      %v1156 = vld [vmem:[#allocation3 + $0x109] sm:$0xff]
      %v1157 = vld [vmem:[#allocation3 + $0x111] sm:$0xff]
      %v1158 = vld [vmem:[#allocation3 + $0x121] sm:$0xff]
      %v1159 = vld [vmem:[#allocation3 + $0x129] sm:$0xff]
      %v1160 = vld [vmem:[#allocation3 + $0x139] sm:$0xff]
      %v1161 = vld [vmem:[#allocation3 + $0x141] sm:$0xff]
      %v1162 = vld [vmem:[#allocation3 + $0x151] sm:$0xff]
      %v1163 = vld [vmem:[#allocation3 + $0x159] sm:$0xff]
      %v1164 = vld [vmem:[#allocation3 + $0x169] sm:$0xff]
      %v1165 = vld [vmem:[#allocation3 + $0x171] sm:$0xff]
      %1198 = vrot.lane.b32.xlu0 %v1134, 8
      %v1199 = vpop.permute.xlu0 %1198
      %1200 = vrot.lane.b32.xlu0 %v1135, 8
      %v1201 = vpop.permute.xlu0 %1200
      %1202 = vrot.lane.b32.xlu0 %v1136, 8
      %v1203 = vpop.permute.xlu0 %1202
      %1204 = vrot.lane.b32.xlu0 %v1137, 8
      %v1205 = vpop.permute.xlu0 %1204
      %1206 = vrot.lane.b32.xlu0 %v1138, 8
      %v1207 = vpop.permute.xlu0 %1206
      %1208 = vrot.lane.b32.xlu0 %v1139, 8
      %v1209 = vpop.permute.xlu0 %1208
      %1210 = vrot.lane.b32.xlu0 %v1140, 8
      %v1211 = vpop.permute.xlu0 %1210
      %1212 = vrot.lane.b32.xlu0 %v1141, 8
      %v1213 = vpop.permute.xlu0 %1212
      %1214 = vrot.lane.b32.xlu0 %v1142, 8
      %v1215 = vpop.permute.xlu0 %1214
      %1216 = vrot.lane.b32.xlu0 %v1143, 8
      %v1217 = vpop.permute.xlu0 %1216
      %1218 = vrot.lane.b32.xlu0 %v1144, 8
      %v1219 = vpop.permute.xlu0 %1218
      %1220 = vrot.lane.b32.xlu0 %v1145, 8
      %v1221 = vpop.permute.xlu0 %1220
      %1222 = vrot.lane.b32.xlu0 %v1146, 8
      %v1223 = vpop.permute.xlu0 %1222
      %1224 = vrot.lane.b32.xlu0 %v1147, 8
      %v1225 = vpop.permute.xlu0 %1224
      %1226 = vrot.lane.b32.xlu0 %v1148, 8
      %v1227 = vpop.permute.xlu0 %1226
      %1228 = vrot.lane.b32.xlu0 %v1149, 8
      %v1229 = vpop.permute.xlu0 %1228
      %1230 = vrot.lane.b32.xlu0 %v1150, 8
      %v1231 = vpop.permute.xlu0 %1230
      %1232 = vrot.lane.b32.xlu0 %v1151, 8
      %v1233 = vpop.permute.xlu0 %1232
      %1234 = vrot.lane.b32.xlu0 %v1152, 8
      %v1235 = vpop.permute.xlu0 %1234
      %1236 = vrot.lane.b32.xlu0 %v1153, 8
      %v1237 = vpop.permute.xlu0 %1236
      %1238 = vrot.lane.b32.xlu0 %v1154, 8
      %v1239 = vpop.permute.xlu0 %1238
      %1240 = vrot.lane.b32.xlu0 %v1155, 8
      %v1241 = vpop.permute.xlu0 %1240
      %1242 = vrot.lane.b32.xlu0 %v1156, 8
      %v1243 = vpop.permute.xlu0 %1242
      %1244 = vrot.lane.b32.xlu0 %v1157, 8
      %v1245 = vpop.permute.xlu0 %1244
      %1246 = vrot.lane.b32.xlu0 %v1158, 8
      %v1247 = vpop.permute.xlu0 %1246
      %1248 = vrot.lane.b32.xlu0 %v1159, 8
      %v1249 = vpop.permute.xlu0 %1248
      %1250 = vrot.lane.b32.xlu0 %v1160, 8
      %v1251 = vpop.permute.xlu0 %1250
      %1252 = vrot.lane.b32.xlu0 %v1161, 8
      %v1253 = vpop.permute.xlu0 %1252
      %1254 = vrot.lane.b32.xlu0 %v1162, 8
      %v1255 = vpop.permute.xlu0 %1254
      %1256 = vrot.lane.b32.xlu0 %v1163, 8
      %v1257 = vpop.permute.xlu0 %1256
      %1258 = vrot.lane.b32.xlu0 %v1164, 8
      %v1259 = vpop.permute.xlu0 %1258
      %1260 = vrot.lane.b32.xlu0 %v1165, 8
      %v1261 = vpop.permute.xlu0 %1260
      %vm1294 = vcmask 130112
      %1295 = vst.msk [vmem:[#allocation2] sm:$0xff] %vm1294, %v1199
      %1296 = vst.msk [vmem:[#allocation2 + $0x8] sm:$0xff] %vm1294, %v1201
      %1297 = vst.msk [vmem:[#allocation2 + $0x10] sm:$0xff] %vm1294, %v1203
      %1298 = vst.msk [vmem:[#allocation2 + $0x18] sm:$0xff] %vm1294, %v1205
      %1299 = vst.msk [vmem:[#allocation2 + $0x20] sm:$0xff] %vm1294, %v1207
      %1300 = vst.msk [vmem:[#allocation2 + $0x28] sm:$0xff] %vm1294, %v1209
      %1301 = vst.msk [vmem:[#allocation2 + $0x30] sm:$0xff] %vm1294, %v1211
      %1302 = vst.msk [vmem:[#allocation2 + $0x38] sm:$0xff] %vm1294, %v1213
      %1303 = vst.msk [vmem:[#allocation2 + $0x40] sm:$0xff] %vm1294, %v1215
      %1304 = vst.msk [vmem:[#allocation2 + $0x48] sm:$0xff] %vm1294, %v1217
      %1305 = vst.msk [vmem:[#allocation2 + $0x50] sm:$0xff] %vm1294, %v1219
      %1306 = vst.msk [vmem:[#allocation2 + $0x58] sm:$0xff] %vm1294, %v1221
      %1307 = vst.msk [vmem:[#allocation2 + $0x60] sm:$0xff] %vm1294, %v1223
      %1308 = vst.msk [vmem:[#allocation2 + $0x68] sm:$0xff] %vm1294, %v1225
      %1309 = vst.msk [vmem:[#allocation2 + $0x70] sm:$0xff] %vm1294, %v1227
      %1310 = vst.msk [vmem:[#allocation2 + $0x78] sm:$0xff] %vm1294, %v1229
      %1311 = vst.msk [vmem:[#allocation2 + $0x80] sm:$0xff] %vm1294, %v1231
      %1312 = vst.msk [vmem:[#allocation2 + $0x88] sm:$0xff] %vm1294, %v1233
      %1313 = vst.msk [vmem:[#allocation2 + $0x90] sm:$0xff] %vm1294, %v1235
      %1314 = vst.msk [vmem:[#allocation2 + $0x98] sm:$0xff] %vm1294, %v1237
      %1315 = vst.msk [vmem:[#allocation2 + $0xa0] sm:$0xff] %vm1294, %v1239
      %1316 = vst.msk [vmem:[#allocation2 + $0xa8] sm:$0xff] %vm1294, %v1241
      %1317 = vst.msk [vmem:[#allocation2 + $0xb0] sm:$0xff] %vm1294, %v1243
      %1318 = vst.msk [vmem:[#allocation2 + $0xb8] sm:$0xff] %vm1294, %v1245
      %1319 = vst.msk [vmem:[#allocation2 + $0xc0] sm:$0xff] %vm1294, %v1247
      %1320 = vst.msk [vmem:[#allocation2 + $0xc8] sm:$0xff] %vm1294, %v1249
      %1321 = vst.msk [vmem:[#allocation2 + $0xd0] sm:$0xff] %vm1294, %v1251
      %1322 = vst.msk [vmem:[#allocation2 + $0xd8] sm:$0xff] %vm1294, %v1253
      %1323 = vst.msk [vmem:[#allocation2 + $0xe0] sm:$0xff] %vm1294, %v1255
      %1324 = vst.msk [vmem:[#allocation2 + $0xe8] sm:$0xff] %vm1294, %v1257
      %1325 = vst.msk [vmem:[#allocation2 + $0xf0] sm:$0xff] %vm1294, %v1259
      %1326 = vst.msk [vmem:[#allocation2 + $0xf8] sm:$0xff] %vm1294, %v1261
      %v1327 = vld [vmem:[#allocation3 + $0x2] sm:$0xff]
      %v1328 = vld [vmem:[#allocation3 + $0xa] sm:$0xff]
      %v1329 = vld [vmem:[#allocation3 + $0x1a] sm:$0xff]
      %v1330 = vld [vmem:[#allocation3 + $0x22] sm:$0xff]
      %v1331 = vld [vmem:[#allocation3 + $0x32] sm:$0xff]
      %v1332 = vld [vmem:[#allocation3 + $0x3a] sm:$0xff]
      %v1333 = vld [vmem:[#allocation3 + $0x4a] sm:$0xff]
      %v1334 = vld [vmem:[#allocation3 + $0x52] sm:$0xff]
      %v1335 = vld [vmem:[#allocation3 + $0x62] sm:$0xff]
      %v1336 = vld [vmem:[#allocation3 + $0x6a] sm:$0xff]
      %v1337 = vld [vmem:[#allocation3 + $0x7a] sm:$0xff]
      %v1338 = vld [vmem:[#allocation3 + $0x82] sm:$0xff]
      %v1339 = vld [vmem:[#allocation3 + $0x92] sm:$0xff]
      %v1340 = vld [vmem:[#allocation3 + $0x9a] sm:$0xff]
      %v1341 = vld [vmem:[#allocation3 + $0xaa] sm:$0xff]
      %v1342 = vld [vmem:[#allocation3 + $0xb2] sm:$0xff]
      %v1343 = vld [vmem:[#allocation3 + $0xc2] sm:$0xff]
      %v1344 = vld [vmem:[#allocation3 + $0xca] sm:$0xff]
      %v1345 = vld [vmem:[#allocation3 + $0xda] sm:$0xff]
      %v1346 = vld [vmem:[#allocation3 + $0xe2] sm:$0xff]
      %v1347 = vld [vmem:[#allocation3 + $0xf2] sm:$0xff]
      %v1348 = vld [vmem:[#allocation3 + $0xfa] sm:$0xff]
      %v1349 = vld [vmem:[#allocation3 + $0x10a] sm:$0xff]
      %v1350 = vld [vmem:[#allocation3 + $0x112] sm:$0xff]
      %v1351 = vld [vmem:[#allocation3 + $0x122] sm:$0xff]
      %v1352 = vld [vmem:[#allocation3 + $0x12a] sm:$0xff]
      %v1353 = vld [vmem:[#allocation3 + $0x13a] sm:$0xff]
      %v1354 = vld [vmem:[#allocation3 + $0x142] sm:$0xff]
      %v1355 = vld [vmem:[#allocation3 + $0x152] sm:$0xff]
      %v1356 = vld [vmem:[#allocation3 + $0x15a] sm:$0xff]
      %v1357 = vld [vmem:[#allocation3 + $0x16a] sm:$0xff]
      %v1358 = vld [vmem:[#allocation3 + $0x172] sm:$0xff]
      %1391 = vrot.lane.b32.xlu0 %v1327, 16
      %v1392 = vpop.permute.xlu0 %1391
      %1393 = vrot.lane.b32.xlu0 %v1328, 16
      %v1394 = vpop.permute.xlu0 %1393
      %1395 = vrot.lane.b32.xlu0 %v1329, 16
      %v1396 = vpop.permute.xlu0 %1395
      %1397 = vrot.lane.b32.xlu0 %v1330, 16
      %v1398 = vpop.permute.xlu0 %1397
      %1399 = vrot.lane.b32.xlu0 %v1331, 16
      %v1400 = vpop.permute.xlu0 %1399
      %1401 = vrot.lane.b32.xlu0 %v1332, 16
      %v1402 = vpop.permute.xlu0 %1401
      %1403 = vrot.lane.b32.xlu0 %v1333, 16
      %v1404 = vpop.permute.xlu0 %1403
      %1405 = vrot.lane.b32.xlu0 %v1334, 16
      %v1406 = vpop.permute.xlu0 %1405
      %1407 = vrot.lane.b32.xlu0 %v1335, 16
      %v1408 = vpop.permute.xlu0 %1407
      %1409 = vrot.lane.b32.xlu0 %v1336, 16
      %v1410 = vpop.permute.xlu0 %1409
      %1411 = vrot.lane.b32.xlu0 %v1337, 16
      %v1412 = vpop.permute.xlu0 %1411
      %1413 = vrot.lane.b32.xlu0 %v1338, 16
      %v1414 = vpop.permute.xlu0 %1413
      %1415 = vrot.lane.b32.xlu0 %v1339, 16
      %v1416 = vpop.permute.xlu0 %1415
      %1417 = vrot.lane.b32.xlu0 %v1340, 16
      %v1418 = vpop.permute.xlu0 %1417
      %1419 = vrot.lane.b32.xlu0 %v1341, 16
      %v1420 = vpop.permute.xlu0 %1419
      %1421 = vrot.lane.b32.xlu0 %v1342, 16
      %v1422 = vpop.permute.xlu0 %1421
      %1423 = vrot.lane.b32.xlu0 %v1343, 16
      %v1424 = vpop.permute.xlu0 %1423
      %1425 = vrot.lane.b32.xlu0 %v1344, 16
      %v1426 = vpop.permute.xlu0 %1425
      %1427 = vrot.lane.b32.xlu0 %v1345, 16
      %v1428 = vpop.permute.xlu0 %1427
      %1429 = vrot.lane.b32.xlu0 %v1346, 16
      %v1430 = vpop.permute.xlu0 %1429
      %1431 = vrot.lane.b32.xlu0 %v1347, 16
      %v1432 = vpop.permute.xlu0 %1431
      %1433 = vrot.lane.b32.xlu0 %v1348, 16
      %v1434 = vpop.permute.xlu0 %1433
      %1435 = vrot.lane.b32.xlu0 %v1349, 16
      %v1436 = vpop.permute.xlu0 %1435
      %1437 = vrot.lane.b32.xlu0 %v1350, 16
      %v1438 = vpop.permute.xlu0 %1437
      %1439 = vrot.lane.b32.xlu0 %v1351, 16
      %v1440 = vpop.permute.xlu0 %1439
      %1441 = vrot.lane.b32.xlu0 %v1352, 16
      %v1442 = vpop.permute.xlu0 %1441
      %1443 = vrot.lane.b32.xlu0 %v1353, 16
      %v1444 = vpop.permute.xlu0 %1443
      %1445 = vrot.lane.b32.xlu0 %v1354, 16
      %v1446 = vpop.permute.xlu0 %1445
      %1447 = vrot.lane.b32.xlu0 %v1355, 16
      %v1448 = vpop.permute.xlu0 %1447
      %1449 = vrot.lane.b32.xlu0 %v1356, 16
      %v1450 = vpop.permute.xlu0 %1449
      %1451 = vrot.lane.b32.xlu0 %v1357, 16
      %v1452 = vpop.permute.xlu0 %1451
      %1453 = vrot.lane.b32.xlu0 %v1358, 16
      %v1454 = vpop.permute.xlu0 %1453
      %vm1487 = vcmask 195712
      %1488 = vst.msk [vmem:[#allocation2] sm:$0xff] %vm1487, %v1392
      %1489 = vst.msk [vmem:[#allocation2 + $0x8] sm:$0xff] %vm1487, %v1394
      %1490 = vst.msk [vmem:[#allocation2 + $0x10] sm:$0xff] %vm1487, %v1396
      %1491 = vst.msk [vmem:[#allocation2 + $0x18] sm:$0xff] %vm1487, %v1398
      %1492 = vst.msk [vmem:[#allocation2 + $0x20] sm:$0xff] %vm1487, %v1400
      %1493 = vst.msk [vmem:[#allocation2 + $0x28] sm:$0xff] %vm1487, %v1402
      %1494 = vst.msk [vmem:[#allocation2 + $0x30] sm:$0xff] %vm1487, %v1404
      %1495 = vst.msk [vmem:[#allocation2 + $0x38] sm:$0xff] %vm1487, %v1406
      %1496 = vst.msk [vmem:[#allocation2 + $0x40] sm:$0xff] %vm1487, %v1408
      %1497 = vst.msk [vmem:[#allocation2 + $0x48] sm:$0xff] %vm1487, %v1410
      %1498 = vst.msk [vmem:[#allocation2 + $0x50] sm:$0xff] %vm1487, %v1412
      %1499 = vst.msk [vmem:[#allocation2 + $0x58] sm:$0xff] %vm1487, %v1414
      %1500 = vst.msk [vmem:[#allocation2 + $0x60] sm:$0xff] %vm1487, %v1416
      %1501 = vst.msk [vmem:[#allocation2 + $0x68] sm:$0xff] %vm1487, %v1418
      %1502 = vst.msk [vmem:[#allocation2 + $0x70] sm:$0xff] %vm1487, %v1420
      %1503 = vst.msk [vmem:[#allocation2 + $0x78] sm:$0xff] %vm1487, %v1422
      %1504 = vst.msk [vmem:[#allocation2 + $0x80] sm:$0xff] %vm1487, %v1424
      %1505 = vst.msk [vmem:[#allocation2 + $0x88] sm:$0xff] %vm1487, %v1426
      %1506 = vst.msk [vmem:[#allocation2 + $0x90] sm:$0xff] %vm1487, %v1428
      %1507 = vst.msk [vmem:[#allocation2 + $0x98] sm:$0xff] %vm1487, %v1430
      %1508 = vst.msk [vmem:[#allocation2 + $0xa0] sm:$0xff] %vm1487, %v1432
      %1509 = vst.msk [vmem:[#allocation2 + $0xa8] sm:$0xff] %vm1487, %v1434
      %1510 = vst.msk [vmem:[#allocation2 + $0xb0] sm:$0xff] %vm1487, %v1436
      %1511 = vst.msk [vmem:[#allocation2 + $0xb8] sm:$0xff] %vm1487, %v1438
      %1512 = vst.msk [vmem:[#allocation2 + $0xc0] sm:$0xff] %vm1487, %v1440
      %1513 = vst.msk [vmem:[#allocation2 + $0xc8] sm:$0xff] %vm1487, %v1442
      %1514 = vst.msk [vmem:[#allocation2 + $0xd0] sm:$0xff] %vm1487, %v1444
      %1515 = vst.msk [vmem:[#allocation2 + $0xd8] sm:$0xff] %vm1487, %v1446
      %1516 = vst.msk [vmem:[#allocation2 + $0xe0] sm:$0xff] %vm1487, %v1448
      %1517 = vst.msk [vmem:[#allocation2 + $0xe8] sm:$0xff] %vm1487, %v1450
      %1518 = vst.msk [vmem:[#allocation2 + $0xf0] sm:$0xff] %vm1487, %v1452
      %1519 = vst.msk [vmem:[#allocation2 + $0xf8] sm:$0xff] %vm1487, %v1454
      %v1520 = vld [vmem:[%s1037] sm:$0xff]
      %v1521 = vld [vmem:[%s1037 + $0x8] sm:$0xff]
      %v1522 = vld [vmem:[%s1037 + $0x18] sm:$0xff]
      %v1523 = vld [vmem:[%s1037 + $0x20] sm:$0xff]
      %v1524 = vld [vmem:[%s1037 + $0x30] sm:$0xff]
      %v1525 = vld [vmem:[%s1037 + $0x38] sm:$0xff]
      %v1526 = vld [vmem:[%s1037 + $0x48] sm:$0xff]
      %v1527 = vld [vmem:[%s1037 + $0x50] sm:$0xff]
      %v1528 = vld [vmem:[%s1037 + $0x60] sm:$0xff]
      %v1529 = vld [vmem:[%s1037 + $0x68] sm:$0xff]
      %v1530 = vld [vmem:[%s1037 + $0x78] sm:$0xff]
      %v1531 = vld [vmem:[%s1037 + $0x80] sm:$0xff]
      %v1532 = vld [vmem:[%s1037 + $0x90] sm:$0xff]
      %v1533 = vld [vmem:[%s1037 + $0x98] sm:$0xff]
      %v1534 = vld [vmem:[%s1037 + $0xa8] sm:$0xff]
      %v1535 = vld [vmem:[%s1037 + $0xb0] sm:$0xff]
      %v1536 = vld [vmem:[%s1037 + $0xc0] sm:$0xff]
      %v1537 = vld [vmem:[%s1037 + $0xc8] sm:$0xff]
      %v1538 = vld [vmem:[%s1037 + $0xd8] sm:$0xff]
      %v1539 = vld [vmem:[%s1037 + $0xe0] sm:$0xff]
      %v1540 = vld [vmem:[%s1037 + $0xf0] sm:$0xff]
      %v1541 = vld [vmem:[%s1037 + $0xf8] sm:$0xff]
      %v1542 = vld [vmem:[%s1037 + $0x108] sm:$0xff]
      %v1543 = vld [vmem:[%s1037 + $0x110] sm:$0xff]
      %v1544 = vld [vmem:[%s1037 + $0x120] sm:$0xff]
      %v1545 = vld [vmem:[%s1037 + $0x128] sm:$0xff]
      %v1546 = vld [vmem:[%s1037 + $0x138] sm:$0xff]
      %v1547 = vld [vmem:[%s1037 + $0x140] sm:$0xff]
      %v1548 = vld [vmem:[%s1037 + $0x150] sm:$0xff]
      %v1549 = vld [vmem:[%s1037 + $0x158] sm:$0xff]
      %v1550 = vld [vmem:[%s1037 + $0x168] sm:$0xff]
      %v1551 = vld [vmem:[%s1037 + $0x170] sm:$0xff]
      %1584 = vrot.lane.b32.xlu0 %v1520, 24
      %v1585 = vpop.permute.xlu0 %1584
      %1586 = vrot.lane.b32.xlu0 %v1521, 24
      %v1587 = vpop.permute.xlu0 %1586
      %1588 = vrot.lane.b32.xlu0 %v1522, 24
      %v1589 = vpop.permute.xlu0 %1588
      %1590 = vrot.lane.b32.xlu0 %v1523, 24
      %v1591 = vpop.permute.xlu0 %1590
      %1592 = vrot.lane.b32.xlu0 %v1524, 24
      %v1593 = vpop.permute.xlu0 %1592
      %1594 = vrot.lane.b32.xlu0 %v1525, 24
      %v1595 = vpop.permute.xlu0 %1594
      %1596 = vrot.lane.b32.xlu0 %v1526, 24
      %v1597 = vpop.permute.xlu0 %1596
      %1598 = vrot.lane.b32.xlu0 %v1527, 24
      %v1599 = vpop.permute.xlu0 %1598
      %1600 = vrot.lane.b32.xlu0 %v1528, 24
      %v1601 = vpop.permute.xlu0 %1600
      %1602 = vrot.lane.b32.xlu0 %v1529, 24
      %v1603 = vpop.permute.xlu0 %1602
      %1604 = vrot.lane.b32.xlu0 %v1530, 24
      %v1605 = vpop.permute.xlu0 %1604
      %1606 = vrot.lane.b32.xlu0 %v1531, 24
      %v1607 = vpop.permute.xlu0 %1606
      %1608 = vrot.lane.b32.xlu0 %v1532, 24
      %v1609 = vpop.permute.xlu0 %1608
      %1610 = vrot.lane.b32.xlu0 %v1533, 24
      %v1611 = vpop.permute.xlu0 %1610
      %1612 = vrot.lane.b32.xlu0 %v1534, 24
      %v1613 = vpop.permute.xlu0 %1612
      %1614 = vrot.lane.b32.xlu0 %v1535, 24
      %v1615 = vpop.permute.xlu0 %1614
      %1616 = vrot.lane.b32.xlu0 %v1536, 24
      %v1617 = vpop.permute.xlu0 %1616
      %1618 = vrot.lane.b32.xlu0 %v1537, 24
      %v1619 = vpop.permute.xlu0 %1618
      %1620 = vrot.lane.b32.xlu0 %v1538, 24
      %v1621 = vpop.permute.xlu0 %1620
      %1622 = vrot.lane.b32.xlu0 %v1539, 24
      %v1623 = vpop.permute.xlu0 %1622
      %1624 = vrot.lane.b32.xlu0 %v1540, 24
      %v1625 = vpop.permute.xlu0 %1624
      %1626 = vrot.lane.b32.xlu0 %v1541, 24
      %v1627 = vpop.permute.xlu0 %1626
      %1628 = vrot.lane.b32.xlu0 %v1542, 24
      %v1629 = vpop.permute.xlu0 %1628
      %1630 = vrot.lane.b32.xlu0 %v1543, 24
      %v1631 = vpop.permute.xlu0 %1630
      %1632 = vrot.lane.b32.xlu0 %v1544, 24
      %v1633 = vpop.permute.xlu0 %1632
      %1634 = vrot.lane.b32.xlu0 %v1545, 24
      %v1635 = vpop.permute.xlu0 %1634
      %1636 = vrot.lane.b32.xlu0 %v1546, 24
      %v1637 = vpop.permute.xlu0 %1636
      %1638 = vrot.lane.b32.xlu0 %v1547, 24
      %v1639 = vpop.permute.xlu0 %1638
      %1640 = vrot.lane.b32.xlu0 %v1548, 24
      %v1641 = vpop.permute.xlu0 %1640
      %1642 = vrot.lane.b32.xlu0 %v1549, 24
      %v1643 = vpop.permute.xlu0 %1642
      %1644 = vrot.lane.b32.xlu0 %v1550, 24
      %v1645 = vpop.permute.xlu0 %1644
      %1646 = vrot.lane.b32.xlu0 %v1551, 24
      %v1647 = vpop.permute.xlu0 %1646
      %vm1680 = vcmask 261312
      %1681 = vst.msk [vmem:[#allocation2] sm:$0xff] %vm1680, %v1585
      %1682 = vst.msk [vmem:[#allocation2 + $0x8] sm:$0xff] %vm1680, %v1587
      %1683 = vst.msk [vmem:[#allocation2 + $0x10] sm:$0xff] %vm1680, %v1589
      %1684 = vst.msk [vmem:[#allocation2 + $0x18] sm:$0xff] %vm1680, %v1591
      %1685 = vst.msk [vmem:[#allocation2 + $0x20] sm:$0xff] %vm1680, %v1593
      %1686 = vst.msk [vmem:[#allocation2 + $0x28] sm:$0xff] %vm1680, %v1595
      %1687 = vst.msk [vmem:[#allocation2 + $0x30] sm:$0xff] %vm1680, %v1597
      %1688 = vst.msk [vmem:[#allocation2 + $0x38] sm:$0xff] %vm1680, %v1599
      %1689 = vst.msk [vmem:[#allocation2 + $0x40] sm:$0xff] %vm1680, %v1601
      %1690 = vst.msk [vmem:[#allocation2 + $0x48] sm:$0xff] %vm1680, %v1603
      %1691 = vst.msk [vmem:[#allocation2 + $0x50] sm:$0xff] %vm1680, %v1605
      %1692 = vst.msk [vmem:[#allocation2 + $0x58] sm:$0xff] %vm1680, %v1607
      %1693 = vst.msk [vmem:[#allocation2 + $0x60] sm:$0xff] %vm1680, %v1609
      %1694 = vst.msk [vmem:[#allocation2 + $0x68] sm:$0xff] %vm1680, %v1611
      %1695 = vst.msk [vmem:[#allocation2 + $0x70] sm:$0xff] %vm1680, %v1613
      %1696 = vst.msk [vmem:[#allocation2 + $0x78] sm:$0xff] %vm1680, %v1615
      %1697 = vst.msk [vmem:[#allocation2 + $0x80] sm:$0xff] %vm1680, %v1617
      %1698 = vst.msk [vmem:[#allocation2 + $0x88] sm:$0xff] %vm1680, %v1619
      %1699 = vst.msk [vmem:[#allocation2 + $0x90] sm:$0xff] %vm1680, %v1621
      %1700 = vst.msk [vmem:[#allocation2 + $0x98] sm:$0xff] %vm1680, %v1623
      %1701 = vst.msk [vmem:[#allocation2 + $0xa0] sm:$0xff] %vm1680, %v1625
      %1702 = vst.msk [vmem:[#allocation2 + $0xa8] sm:$0xff] %vm1680, %v1627
      %1703 = vst.msk [vmem:[#allocation2 + $0xb0] sm:$0xff] %vm1680, %v1629
      %1704 = vst.msk [vmem:[#allocation2 + $0xb8] sm:$0xff] %vm1680, %v1631
      %1705 = vst.msk [vmem:[#allocation2 + $0xc0] sm:$0xff] %vm1680, %v1633
      %1706 = vst.msk [vmem:[#allocation2 + $0xc8] sm:$0xff] %vm1680, %v1635
      %1707 = vst.msk [vmem:[#allocation2 + $0xd0] sm:$0xff] %vm1680, %v1637
      %1708 = vst.msk [vmem:[#allocation2 + $0xd8] sm:$0xff] %vm1680, %v1639
      %1709 = vst.msk [vmem:[#allocation2 + $0xe0] sm:$0xff] %vm1680, %v1641
      %1710 = vst.msk [vmem:[#allocation2 + $0xe8] sm:$0xff] %vm1680, %v1643
      %1711 = vst.msk [vmem:[#allocation2 + $0xf0] sm:$0xff] %vm1680, %v1645
      %1712 = vst.msk [vmem:[#allocation2 + $0xf8] sm:$0xff] %vm1680, %v1647
      %v1713 = vld [vmem:[%s1037 + $0x1] sm:$0xff]
      %v1714 = vld [vmem:[%s1037 + $0x9] sm:$0xff]
      %v1715 = vld [vmem:[%s1037 + $0x19] sm:$0xff]
      %v1716 = vld [vmem:[%s1037 + $0x21] sm:$0xff]
      %v1717 = vld [vmem:[%s1037 + $0x31] sm:$0xff]
      %v1718 = vld [vmem:[%s1037 + $0x39] sm:$0xff]
      %v1719 = vld [vmem:[%s1037 + $0x49] sm:$0xff]
      %v1720 = vld [vmem:[%s1037 + $0x51] sm:$0xff]
      %v1721 = vld [vmem:[%s1037 + $0x61] sm:$0xff]
      %v1722 = vld [vmem:[%s1037 + $0x69] sm:$0xff]
      %v1723 = vld [vmem:[%s1037 + $0x79] sm:$0xff]
      %v1724 = vld [vmem:[%s1037 + $0x81] sm:$0xff]
      %v1725 = vld [vmem:[%s1037 + $0x91] sm:$0xff]
      %v1726 = vld [vmem:[%s1037 + $0x99] sm:$0xff]
      %v1727 = vld [vmem:[%s1037 + $0xa9] sm:$0xff]
      %v1728 = vld [vmem:[%s1037 + $0xb1] sm:$0xff]
      %v1729 = vld [vmem:[%s1037 + $0xc1] sm:$0xff]
      %v1730 = vld [vmem:[%s1037 + $0xc9] sm:$0xff]
      %v1731 = vld [vmem:[%s1037 + $0xd9] sm:$0xff]
      %v1732 = vld [vmem:[%s1037 + $0xe1] sm:$0xff]
      %v1733 = vld [vmem:[%s1037 + $0xf1] sm:$0xff]
      %v1734 = vld [vmem:[%s1037 + $0xf9] sm:$0xff]
      %v1735 = vld [vmem:[%s1037 + $0x109] sm:$0xff]
      %v1736 = vld [vmem:[%s1037 + $0x111] sm:$0xff]
      %v1737 = vld [vmem:[%s1037 + $0x121] sm:$0xff]
      %v1738 = vld [vmem:[%s1037 + $0x129] sm:$0xff]
      %v1739 = vld [vmem:[%s1037 + $0x139] sm:$0xff]
      %v1740 = vld [vmem:[%s1037 + $0x141] sm:$0xff]
      %v1741 = vld [vmem:[%s1037 + $0x151] sm:$0xff]
      %v1742 = vld [vmem:[%s1037 + $0x159] sm:$0xff]
      %v1743 = vld [vmem:[%s1037 + $0x169] sm:$0xff]
      %v1744 = vld [vmem:[%s1037 + $0x171] sm:$0xff]
      %1777 = vrot.lane.b32.xlu0 %v1713, 32
      %v1778 = vpop.permute.xlu0 %1777
      %1779 = vrot.lane.b32.xlu0 %v1714, 32
      %v1780 = vpop.permute.xlu0 %1779
      %1781 = vrot.lane.b32.xlu0 %v1715, 32
      %v1782 = vpop.permute.xlu0 %1781
      %1783 = vrot.lane.b32.xlu0 %v1716, 32
      %v1784 = vpop.permute.xlu0 %1783
      %1785 = vrot.lane.b32.xlu0 %v1717, 32
      %v1786 = vpop.permute.xlu0 %1785
      %1787 = vrot.lane.b32.xlu0 %v1718, 32
      %v1788 = vpop.permute.xlu0 %1787
      %1789 = vrot.lane.b32.xlu0 %v1719, 32
      %v1790 = vpop.permute.xlu0 %1789
      %1791 = vrot.lane.b32.xlu0 %v1720, 32
      %v1792 = vpop.permute.xlu0 %1791
      %1793 = vrot.lane.b32.xlu0 %v1721, 32
      %v1794 = vpop.permute.xlu0 %1793
      %1795 = vrot.lane.b32.xlu0 %v1722, 32
      %v1796 = vpop.permute.xlu0 %1795
      %1797 = vrot.lane.b32.xlu0 %v1723, 32
      %v1798 = vpop.permute.xlu0 %1797
      %1799 = vrot.lane.b32.xlu0 %v1724, 32
      %v1800 = vpop.permute.xlu0 %1799
      %1801 = vrot.lane.b32.xlu0 %v1725, 32
      %v1802 = vpop.permute.xlu0 %1801
      %1803 = vrot.lane.b32.xlu0 %v1726, 32
      %v1804 = vpop.permute.xlu0 %1803
      %1805 = vrot.lane.b32.xlu0 %v1727, 32
      %v1806 = vpop.permute.xlu0 %1805
      %1807 = vrot.lane.b32.xlu0 %v1728, 32
      %v1808 = vpop.permute.xlu0 %1807
      %1809 = vrot.lane.b32.xlu0 %v1729, 32
      %v1810 = vpop.permute.xlu0 %1809
      %1811 = vrot.lane.b32.xlu0 %v1730, 32
      %v1812 = vpop.permute.xlu0 %1811
      %1813 = vrot.lane.b32.xlu0 %v1731, 32
      %v1814 = vpop.permute.xlu0 %1813
      %1815 = vrot.lane.b32.xlu0 %v1732, 32
      %v1816 = vpop.permute.xlu0 %1815
      %1817 = vrot.lane.b32.xlu0 %v1733, 32
      %v1818 = vpop.permute.xlu0 %1817
      %1819 = vrot.lane.b32.xlu0 %v1734, 32
      %v1820 = vpop.permute.xlu0 %1819
      %1821 = vrot.lane.b32.xlu0 %v1735, 32
      %v1822 = vpop.permute.xlu0 %1821
      %1823 = vrot.lane.b32.xlu0 %v1736, 32
      %v1824 = vpop.permute.xlu0 %1823
      %1825 = vrot.lane.b32.xlu0 %v1737, 32
      %v1826 = vpop.permute.xlu0 %1825
      %1827 = vrot.lane.b32.xlu0 %v1738, 32
      %v1828 = vpop.permute.xlu0 %1827
      %1829 = vrot.lane.b32.xlu0 %v1739, 32
      %v1830 = vpop.permute.xlu0 %1829
      %1831 = vrot.lane.b32.xlu0 %v1740, 32
      %v1832 = vpop.permute.xlu0 %1831
      %1833 = vrot.lane.b32.xlu0 %v1741, 32
      %v1834 = vpop.permute.xlu0 %1833
      %1835 = vrot.lane.b32.xlu0 %v1742, 32
      %v1836 = vpop.permute.xlu0 %1835
      %1837 = vrot.lane.b32.xlu0 %v1743, 32
      %v1838 = vpop.permute.xlu0 %1837
      %1839 = vrot.lane.b32.xlu0 %v1744, 32
      %v1840 = vpop.permute.xlu0 %1839
      %vm1873 = vcmask 326912
      %1874 = vst.msk [vmem:[#allocation2] sm:$0xff] %vm1873, %v1778
      %1875 = vst.msk [vmem:[#allocation2 + $0x8] sm:$0xff] %vm1873, %v1780
      %1876 = vst.msk [vmem:[#allocation2 + $0x10] sm:$0xff] %vm1873, %v1782
      %1877 = vst.msk [vmem:[#allocation2 + $0x18] sm:$0xff] %vm1873, %v1784
      %1878 = vst.msk [vmem:[#allocation2 + $0x20] sm:$0xff] %vm1873, %v1786
      %1879 = vst.msk [vmem:[#allocation2 + $0x28] sm:$0xff] %vm1873, %v1788
      %1880 = vst.msk [vmem:[#allocation2 + $0x30] sm:$0xff] %vm1873, %v1790
      %1881 = vst.msk [vmem:[#allocation2 + $0x38] sm:$0xff] %vm1873, %v1792
      %1882 = vst.msk [vmem:[#allocation2 + $0x40] sm:$0xff] %vm1873, %v1794
      %1883 = vst.msk [vmem:[#allocation2 + $0x48] sm:$0xff] %vm1873, %v1796
      %1884 = vst.msk [vmem:[#allocation2 + $0x50] sm:$0xff] %vm1873, %v1798
      %1885 = vst.msk [vmem:[#allocation2 + $0x58] sm:$0xff] %vm1873, %v1800
      %1886 = vst.msk [vmem:[#allocation2 + $0x60] sm:$0xff] %vm1873, %v1802
      %1887 = vst.msk [vmem:[#allocation2 + $0x68] sm:$0xff] %vm1873, %v1804
      %1888 = vst.msk [vmem:[#allocation2 + $0x70] sm:$0xff] %vm1873, %v1806
      %1889 = vst.msk [vmem:[#allocation2 + $0x78] sm:$0xff] %vm1873, %v1808
      %1890 = vst.msk [vmem:[#allocation2 + $0x80] sm:$0xff] %vm1873, %v1810
      %1891 = vst.msk [vmem:[#allocation2 + $0x88] sm:$0xff] %vm1873, %v1812
      %1892 = vst.msk [vmem:[#allocation2 + $0x90] sm:$0xff] %vm1873, %v1814
      %1893 = vst.msk [vmem:[#allocation2 + $0x98] sm:$0xff] %vm1873, %v1816
      %1894 = vst.msk [vmem:[#allocation2 + $0xa0] sm:$0xff] %vm1873, %v1818
      %1895 = vst.msk [vmem:[#allocation2 + $0xa8] sm:$0xff] %vm1873, %v1820
      %1896 = vst.msk [vmem:[#allocation2 + $0xb0] sm:$0xff] %vm1873, %v1822
      %1897 = vst.msk [vmem:[#allocation2 + $0xb8] sm:$0xff] %vm1873, %v1824
      %1898 = vst.msk [vmem:[#allocation2 + $0xc0] sm:$0xff] %vm1873, %v1826
      %1899 = vst.msk [vmem:[#allocation2 + $0xc8] sm:$0xff] %vm1873, %v1828
      %1900 = vst.msk [vmem:[#allocation2 + $0xd0] sm:$0xff] %vm1873, %v1830
      %1901 = vst.msk [vmem:[#allocation2 + $0xd8] sm:$0xff] %vm1873, %v1832
      %1902 = vst.msk [vmem:[#allocation2 + $0xe0] sm:$0xff] %vm1873, %v1834
      %1903 = vst.msk [vmem:[#allocation2 + $0xe8] sm:$0xff] %vm1873, %v1836
      %1904 = vst.msk [vmem:[#allocation2 + $0xf0] sm:$0xff] %vm1873, %v1838
      %1905 = vst.msk [vmem:[#allocation2 + $0xf8] sm:$0xff] %vm1873, %v1840
      %v1906 = vld [vmem:[%s1037 + $0x2] sm:$0xff]
      %v1907 = vld [vmem:[%s1037 + $0xa] sm:$0xff]
      %v1908 = vld [vmem:[%s1037 + $0x1a] sm:$0xff]
      %v1909 = vld [vmem:[%s1037 + $0x22] sm:$0xff]
      %v1910 = vld [vmem:[%s1037 + $0x32] sm:$0xff]
      %v1911 = vld [vmem:[%s1037 + $0x3a] sm:$0xff]
      %v1912 = vld [vmem:[%s1037 + $0x4a] sm:$0xff]
      %v1913 = vld [vmem:[%s1037 + $0x52] sm:$0xff]
      %v1914 = vld [vmem:[%s1037 + $0x62] sm:$0xff]
      %v1915 = vld [vmem:[%s1037 + $0x6a] sm:$0xff]
      %v1916 = vld [vmem:[%s1037 + $0x7a] sm:$0xff]
      %v1917 = vld [vmem:[%s1037 + $0x82] sm:$0xff]
      %v1918 = vld [vmem:[%s1037 + $0x92] sm:$0xff]
      %v1919 = vld [vmem:[%s1037 + $0x9a] sm:$0xff]
      %v1920 = vld [vmem:[%s1037 + $0xaa] sm:$0xff]
      %v1921 = vld [vmem:[%s1037 + $0xb2] sm:$0xff]
      %v1922 = vld [vmem:[%s1037 + $0xc2] sm:$0xff]
      %v1923 = vld [vmem:[%s1037 + $0xca] sm:$0xff]
      %v1924 = vld [vmem:[%s1037 + $0xda] sm:$0xff]
      %v1925 = vld [vmem:[%s1037 + $0xe2] sm:$0xff]
      %v1926 = vld [vmem:[%s1037 + $0xf2] sm:$0xff]
      %v1927 = vld [vmem:[%s1037 + $0xfa] sm:$0xff]
      %v1928 = vld [vmem:[%s1037 + $0x10a] sm:$0xff]
      %v1929 = vld [vmem:[%s1037 + $0x112] sm:$0xff]
      %v1930 = vld [vmem:[%s1037 + $0x122] sm:$0xff]
      %v1931 = vld [vmem:[%s1037 + $0x12a] sm:$0xff]
      %v1932 = vld [vmem:[%s1037 + $0x13a] sm:$0xff]
      %v1933 = vld [vmem:[%s1037 + $0x142] sm:$0xff]
      %v1934 = vld [vmem:[%s1037 + $0x152] sm:$0xff]
      %v1935 = vld [vmem:[%s1037 + $0x15a] sm:$0xff]
      %v1936 = vld [vmem:[%s1037 + $0x16a] sm:$0xff]
      %v1937 = vld [vmem:[%s1037 + $0x172] sm:$0xff]
      %1970 = vrot.lane.b32.xlu0 %v1906, 40
      %v1971 = vpop.permute.xlu0 %1970
      %1972 = vrot.lane.b32.xlu0 %v1907, 40
      %v1973 = vpop.permute.xlu0 %1972
      %1974 = vrot.lane.b32.xlu0 %v1908, 40
      %v1975 = vpop.permute.xlu0 %1974
      %1976 = vrot.lane.b32.xlu0 %v1909, 40
      %v1977 = vpop.permute.xlu0 %1976
      %1978 = vrot.lane.b32.xlu0 %v1910, 40
      %v1979 = vpop.permute.xlu0 %1978
      %1980 = vrot.lane.b32.xlu0 %v1911, 40
      %v1981 = vpop.permute.xlu0 %1980
      %1982 = vrot.lane.b32.xlu0 %v1912, 40
      %v1983 = vpop.permute.xlu0 %1982
      %1984 = vrot.lane.b32.xlu0 %v1913, 40
      %v1985 = vpop.permute.xlu0 %1984
      %1986 = vrot.lane.b32.xlu0 %v1914, 40
      %v1987 = vpop.permute.xlu0 %1986
      %1988 = vrot.lane.b32.xlu0 %v1915, 40
      %v1989 = vpop.permute.xlu0 %1988
      %1990 = vrot.lane.b32.xlu0 %v1916, 40
      %v1991 = vpop.permute.xlu0 %1990
      %1992 = vrot.lane.b32.xlu0 %v1917, 40
      %v1993 = vpop.permute.xlu0 %1992
      %1994 = vrot.lane.b32.xlu0 %v1918, 40
      %v1995 = vpop.permute.xlu0 %1994
      %1996 = vrot.lane.b32.xlu0 %v1919, 40
      %v1997 = vpop.permute.xlu0 %1996
      %1998 = vrot.lane.b32.xlu0 %v1920, 40
      %v1999 = vpop.permute.xlu0 %1998
      %2000 = vrot.lane.b32.xlu0 %v1921, 40
      %v2001 = vpop.permute.xlu0 %2000
      %2002 = vrot.lane.b32.xlu0 %v1922, 40
      %v2003 = vpop.permute.xlu0 %2002
      %2004 = vrot.lane.b32.xlu0 %v1923, 40
      %v2005 = vpop.permute.xlu0 %2004
      %2006 = vrot.lane.b32.xlu0 %v1924, 40
      %v2007 = vpop.permute.xlu0 %2006
      %2008 = vrot.lane.b32.xlu0 %v1925, 40
      %v2009 = vpop.permute.xlu0 %2008
      %2010 = vrot.lane.b32.xlu0 %v1926, 40
      %v2011 = vpop.permute.xlu0 %2010
      %2012 = vrot.lane.b32.xlu0 %v1927, 40
      %v2013 = vpop.permute.xlu0 %2012
      %2014 = vrot.lane.b32.xlu0 %v1928, 40
      %v2015 = vpop.permute.xlu0 %2014
      %2016 = vrot.lane.b32.xlu0 %v1929, 40
      %v2017 = vpop.permute.xlu0 %2016
      %2018 = vrot.lane.b32.xlu0 %v1930, 40
      %v2019 = vpop.permute.xlu0 %2018
      %2020 = vrot.lane.b32.xlu0 %v1931, 40
      %v2021 = vpop.permute.xlu0 %2020
      %2022 = vrot.lane.b32.xlu0 %v1932, 40
      %v2023 = vpop.permute.xlu0 %2022
      %2024 = vrot.lane.b32.xlu0 %v1933, 40
      %v2025 = vpop.permute.xlu0 %2024
      %2026 = vrot.lane.b32.xlu0 %v1934, 40
      %v2027 = vpop.permute.xlu0 %2026
      %2028 = vrot.lane.b32.xlu0 %v1935, 40
      %v2029 = vpop.permute.xlu0 %2028
      %2030 = vrot.lane.b32.xlu0 %v1936, 40
      %v2031 = vpop.permute.xlu0 %2030
      %2032 = vrot.lane.b32.xlu0 %v1937, 40
      %v2033 = vpop.permute.xlu0 %2032
      %vm2066 = vcmask 392512
      %2067 = vst.msk [vmem:[#allocation2] sm:$0xff] %vm2066, %v1971
      %2068 = vst.msk [vmem:[#allocation2 + $0x8] sm:$0xff] %vm2066, %v1973
      %2069 = vst.msk [vmem:[#allocation2 + $0x10] sm:$0xff] %vm2066, %v1975
      %2070 = vst.msk [vmem:[#allocation2 + $0x18] sm:$0xff] %vm2066, %v1977
      %2071 = vst.msk [vmem:[#allocation2 + $0x20] sm:$0xff] %vm2066, %v1979
      %2072 = vst.msk [vmem:[#allocation2 + $0x28] sm:$0xff] %vm2066, %v1981
      %2073 = vst.msk [vmem:[#allocation2 + $0x30] sm:$0xff] %vm2066, %v1983
      %2074 = vst.msk [vmem:[#allocation2 + $0x38] sm:$0xff] %vm2066, %v1985
      %2075 = vst.msk [vmem:[#allocation2 + $0x40] sm:$0xff] %vm2066, %v1987
      %2076 = vst.msk [vmem:[#allocation2 + $0x48] sm:$0xff] %vm2066, %v1989
      %2077 = vst.msk [vmem:[#allocation2 + $0x50] sm:$0xff] %vm2066, %v1991
      %2078 = vst.msk [vmem:[#allocation2 + $0x58] sm:$0xff] %vm2066, %v1993
      %2079 = vst.msk [vmem:[#allocation2 + $0x60] sm:$0xff] %vm2066, %v1995
      %2080 = vst.msk [vmem:[#allocation2 + $0x68] sm:$0xff] %vm2066, %v1997
      %2081 = vst.msk [vmem:[#allocation2 + $0x70] sm:$0xff] %vm2066, %v1999
      %2082 = vst.msk [vmem:[#allocation2 + $0x78] sm:$0xff] %vm2066, %v2001
      %2083 = vst.msk [vmem:[#allocation2 + $0x80] sm:$0xff] %vm2066, %v2003
      %2084 = vst.msk [vmem:[#allocation2 + $0x88] sm:$0xff] %vm2066, %v2005
      %2085 = vst.msk [vmem:[#allocation2 + $0x90] sm:$0xff] %vm2066, %v2007
      %2086 = vst.msk [vmem:[#allocation2 + $0x98] sm:$0xff] %vm2066, %v2009
      %2087 = vst.msk [vmem:[#allocation2 + $0xa0] sm:$0xff] %vm2066, %v2011
      %2088 = vst.msk [vmem:[#allocation2 + $0xa8] sm:$0xff] %vm2066, %v2013
      %2089 = vst.msk [vmem:[#allocation2 + $0xb0] sm:$0xff] %vm2066, %v2015
      %2090 = vst.msk [vmem:[#allocation2 + $0xb8] sm:$0xff] %vm2066, %v2017
      %2091 = vst.msk [vmem:[#allocation2 + $0xc0] sm:$0xff] %vm2066, %v2019
      %2092 = vst.msk [vmem:[#allocation2 + $0xc8] sm:$0xff] %vm2066, %v2021
      %2093 = vst.msk [vmem:[#allocation2 + $0xd0] sm:$0xff] %vm2066, %v2023
      %2094 = vst.msk [vmem:[#allocation2 + $0xd8] sm:$0xff] %vm2066, %v2025
      %2095 = vst.msk [vmem:[#allocation2 + $0xe0] sm:$0xff] %vm2066, %v2027
      %2096 = vst.msk [vmem:[#allocation2 + $0xe8] sm:$0xff] %vm2066, %v2029
      %2097 = vst.msk [vmem:[#allocation2 + $0xf0] sm:$0xff] %vm2066, %v2031
      %2098 = vst.msk [vmem:[#allocation2 + $0xf8] sm:$0xff] %vm2066, %v2033
      %s2099 = scalar_lea.vmem [#allocation3], 48
      %v2100 = vld [vmem:[%s2099] sm:$0xff]
      %v2101 = vld [vmem:[%s2099 + $0x8] sm:$0xff]
      %v2102 = vld [vmem:[%s2099 + $0x18] sm:$0xff]
      %v2103 = vld [vmem:[%s2099 + $0x20] sm:$0xff]
      %v2104 = vld [vmem:[%s2099 + $0x30] sm:$0xff]
      %v2105 = vld [vmem:[%s2099 + $0x38] sm:$0xff]
      %v2106 = vld [vmem:[%s2099 + $0x48] sm:$0xff]
      %v2107 = vld [vmem:[%s2099 + $0x50] sm:$0xff]
      %v2108 = vld [vmem:[%s2099 + $0x60] sm:$0xff]
      %v2109 = vld [vmem:[%s2099 + $0x68] sm:$0xff]
      %v2110 = vld [vmem:[%s2099 + $0x78] sm:$0xff]
      %v2111 = vld [vmem:[%s2099 + $0x80] sm:$0xff]
      %v2112 = vld [vmem:[%s2099 + $0x90] sm:$0xff]
      %v2113 = vld [vmem:[%s2099 + $0x98] sm:$0xff]
      %v2114 = vld [vmem:[%s2099 + $0xa8] sm:$0xff]
      %v2115 = vld [vmem:[%s2099 + $0xb0] sm:$0xff]
      %v2116 = vld [vmem:[%s2099 + $0xc0] sm:$0xff]
      %v2117 = vld [vmem:[%s2099 + $0xc8] sm:$0xff]
      %v2118 = vld [vmem:[%s2099 + $0xd8] sm:$0xff]
      %v2119 = vld [vmem:[%s2099 + $0xe0] sm:$0xff]
      %v2120 = vld [vmem:[%s2099 + $0xf0] sm:$0xff]
      %v2121 = vld [vmem:[%s2099 + $0xf8] sm:$0xff]
      %v2122 = vld [vmem:[%s2099 + $0x108] sm:$0xff]
      %v2123 = vld [vmem:[%s2099 + $0x110] sm:$0xff]
      %v2124 = vld [vmem:[%s2099 + $0x120] sm:$0xff]
      %v2125 = vld [vmem:[%s2099 + $0x128] sm:$0xff]
      %v2126 = vld [vmem:[%s2099 + $0x138] sm:$0xff]
      %v2127 = vld [vmem:[%s2099 + $0x140] sm:$0xff]
      %v2128 = vld [vmem:[%s2099 + $0x150] sm:$0xff]
      %v2129 = vld [vmem:[%s2099 + $0x158] sm:$0xff]
      %v2130 = vld [vmem:[%s2099 + $0x168] sm:$0xff]
      %v2131 = vld [vmem:[%s2099 + $0x170] sm:$0xff]
      %2164 = vrot.lane.b32.xlu0 %v2100, 48
      %v2165 = vpop.permute.xlu0 %2164
      %2166 = vrot.lane.b32.xlu0 %v2101, 48
      %v2167 = vpop.permute.xlu0 %2166
      %2168 = vrot.lane.b32.xlu0 %v2102, 48
      %v2169 = vpop.permute.xlu0 %2168
      %2170 = vrot.lane.b32.xlu0 %v2103, 48
      %v2171 = vpop.permute.xlu0 %2170
      %2172 = vrot.lane.b32.xlu0 %v2104, 48
      %v2173 = vpop.permute.xlu0 %2172
      %2174 = vrot.lane.b32.xlu0 %v2105, 48
      %v2175 = vpop.permute.xlu0 %2174
      %2176 = vrot.lane.b32.xlu0 %v2106, 48
      %v2177 = vpop.permute.xlu0 %2176
      %2178 = vrot.lane.b32.xlu0 %v2107, 48
      %v2179 = vpop.permute.xlu0 %2178
      %2180 = vrot.lane.b32.xlu0 %v2108, 48
      %v2181 = vpop.permute.xlu0 %2180
      %2182 = vrot.lane.b32.xlu0 %v2109, 48
      %v2183 = vpop.permute.xlu0 %2182
      %2184 = vrot.lane.b32.xlu0 %v2110, 48
      %v2185 = vpop.permute.xlu0 %2184
      %2186 = vrot.lane.b32.xlu0 %v2111, 48
      %v2187 = vpop.permute.xlu0 %2186
      %2188 = vrot.lane.b32.xlu0 %v2112, 48
      %v2189 = vpop.permute.xlu0 %2188
      %2190 = vrot.lane.b32.xlu0 %v2113, 48
      %v2191 = vpop.permute.xlu0 %2190
      %2192 = vrot.lane.b32.xlu0 %v2114, 48
      %v2193 = vpop.permute.xlu0 %2192
      %2194 = vrot.lane.b32.xlu0 %v2115, 48
      %v2195 = vpop.permute.xlu0 %2194
      %2196 = vrot.lane.b32.xlu0 %v2116, 48
      %v2197 = vpop.permute.xlu0 %2196
      %2198 = vrot.lane.b32.xlu0 %v2117, 48
      %v2199 = vpop.permute.xlu0 %2198
      %2200 = vrot.lane.b32.xlu0 %v2118, 48
      %v2201 = vpop.permute.xlu0 %2200
      %2202 = vrot.lane.b32.xlu0 %v2119, 48
      %v2203 = vpop.permute.xlu0 %2202
      %2204 = vrot.lane.b32.xlu0 %v2120, 48
      %v2205 = vpop.permute.xlu0 %2204
      %2206 = vrot.lane.b32.xlu0 %v2121, 48
      %v2207 = vpop.permute.xlu0 %2206
      %2208 = vrot.lane.b32.xlu0 %v2122, 48
      %v2209 = vpop.permute.xlu0 %2208
      %2210 = vrot.lane.b32.xlu0 %v2123, 48
      %v2211 = vpop.permute.xlu0 %2210
      %2212 = vrot.lane.b32.xlu0 %v2124, 48
      %v2213 = vpop.permute.xlu0 %2212
      %2214 = vrot.lane.b32.xlu0 %v2125, 48
      %v2215 = vpop.permute.xlu0 %2214
      %2216 = vrot.lane.b32.xlu0 %v2126, 48
      %v2217 = vpop.permute.xlu0 %2216
      %2218 = vrot.lane.b32.xlu0 %v2127, 48
      %v2219 = vpop.permute.xlu0 %2218
      %2220 = vrot.lane.b32.xlu0 %v2128, 48
      %v2221 = vpop.permute.xlu0 %2220
      %2222 = vrot.lane.b32.xlu0 %v2129, 48
      %v2223 = vpop.permute.xlu0 %2222
      %2224 = vrot.lane.b32.xlu0 %v2130, 48
      %v2225 = vpop.permute.xlu0 %2224
      %2226 = vrot.lane.b32.xlu0 %v2131, 48
      %v2227 = vpop.permute.xlu0 %2226
      %vm2260 = vcmask 458112
      %2261 = vst.msk [vmem:[#allocation2] sm:$0xff] %vm2260, %v2165
      %2262 = vst.msk [vmem:[#allocation2 + $0x8] sm:$0xff] %vm2260, %v2167
      %2263 = vst.msk [vmem:[#allocation2 + $0x10] sm:$0xff] %vm2260, %v2169
      %2264 = vst.msk [vmem:[#allocation2 + $0x18] sm:$0xff] %vm2260, %v2171
      %2265 = vst.msk [vmem:[#allocation2 + $0x20] sm:$0xff] %vm2260, %v2173
      %2266 = vst.msk [vmem:[#allocation2 + $0x28] sm:$0xff] %vm2260, %v2175
      %2267 = vst.msk [vmem:[#allocation2 + $0x30] sm:$0xff] %vm2260, %v2177
      %2268 = vst.msk [vmem:[#allocation2 + $0x38] sm:$0xff] %vm2260, %v2179
      %2269 = vst.msk [vmem:[#allocation2 + $0x40] sm:$0xff] %vm2260, %v2181
      %2270 = vst.msk [vmem:[#allocation2 + $0x48] sm:$0xff] %vm2260, %v2183
      %2271 = vst.msk [vmem:[#allocation2 + $0x50] sm:$0xff] %vm2260, %v2185
      %2272 = vst.msk [vmem:[#allocation2 + $0x58] sm:$0xff] %vm2260, %v2187
      %2273 = vst.msk [vmem:[#allocation2 + $0x60] sm:$0xff] %vm2260, %v2189
      %2274 = vst.msk [vmem:[#allocation2 + $0x68] sm:$0xff] %vm2260, %v2191
      %2275 = vst.msk [vmem:[#allocation2 + $0x70] sm:$0xff] %vm2260, %v2193
      %2276 = vst.msk [vmem:[#allocation2 + $0x78] sm:$0xff] %vm2260, %v2195
      %2277 = vst.msk [vmem:[#allocation2 + $0x80] sm:$0xff] %vm2260, %v2197
      %2278 = vst.msk [vmem:[#allocation2 + $0x88] sm:$0xff] %vm2260, %v2199
      %2279 = vst.msk [vmem:[#allocation2 + $0x90] sm:$0xff] %vm2260, %v2201
      %2280 = vst.msk [vmem:[#allocation2 + $0x98] sm:$0xff] %vm2260, %v2203
      %2281 = vst.msk [vmem:[#allocation2 + $0xa0] sm:$0xff] %vm2260, %v2205
      %2282 = vst.msk [vmem:[#allocation2 + $0xa8] sm:$0xff] %vm2260, %v2207
      %2283 = vst.msk [vmem:[#allocation2 + $0xb0] sm:$0xff] %vm2260, %v2209
      %2284 = vst.msk [vmem:[#allocation2 + $0xb8] sm:$0xff] %vm2260, %v2211
      %2285 = vst.msk [vmem:[#allocation2 + $0xc0] sm:$0xff] %vm2260, %v2213
      %2286 = vst.msk [vmem:[#allocation2 + $0xc8] sm:$0xff] %vm2260, %v2215
      %2287 = vst.msk [vmem:[#allocation2 + $0xd0] sm:$0xff] %vm2260, %v2217
      %2288 = vst.msk [vmem:[#allocation2 + $0xd8] sm:$0xff] %vm2260, %v2219
      %2289 = vst.msk [vmem:[#allocation2 + $0xe0] sm:$0xff] %vm2260, %v2221
      %2290 = vst.msk [vmem:[#allocation2 + $0xe8] sm:$0xff] %vm2260, %v2223
      %2291 = vst.msk [vmem:[#allocation2 + $0xf0] sm:$0xff] %vm2260, %v2225
      %2292 = vst.msk [vmem:[#allocation2 + $0xf8] sm:$0xff] %vm2260, %v2227
      %v2293 = vld [vmem:[%s2099 + $0x1] sm:$0xff]
      %v2294 = vld [vmem:[%s2099 + $0x9] sm:$0xff]
      %v2295 = vld [vmem:[%s2099 + $0x19] sm:$0xff]
      %v2296 = vld [vmem:[%s2099 + $0x21] sm:$0xff]
      %v2297 = vld [vmem:[%s2099 + $0x31] sm:$0xff]
      %v2298 = vld [vmem:[%s2099 + $0x39] sm:$0xff]
      %v2299 = vld [vmem:[%s2099 + $0x49] sm:$0xff]
      %v2300 = vld [vmem:[%s2099 + $0x51] sm:$0xff]
      %v2301 = vld [vmem:[%s2099 + $0x61] sm:$0xff]
      %v2302 = vld [vmem:[%s2099 + $0x69] sm:$0xff]
      %v2303 = vld [vmem:[%s2099 + $0x79] sm:$0xff]
      %v2304 = vld [vmem:[%s2099 + $0x81] sm:$0xff]
      %v2305 = vld [vmem:[%s2099 + $0x91] sm:$0xff]
      %v2306 = vld [vmem:[%s2099 + $0x99] sm:$0xff]
      %v2307 = vld [vmem:[%s2099 + $0xa9] sm:$0xff]
      %v2308 = vld [vmem:[%s2099 + $0xb1] sm:$0xff]
      %v2309 = vld [vmem:[%s2099 + $0xc1] sm:$0xff]
      %v2310 = vld [vmem:[%s2099 + $0xc9] sm:$0xff]
      %v2311 = vld [vmem:[%s2099 + $0xd9] sm:$0xff]
      %v2312 = vld [vmem:[%s2099 + $0xe1] sm:$0xff]
      %v2313 = vld [vmem:[%s2099 + $0xf1] sm:$0xff]
      %v2314 = vld [vmem:[%s2099 + $0xf9] sm:$0xff]
      %v2315 = vld [vmem:[%s2099 + $0x109] sm:$0xff]
      %v2316 = vld [vmem:[%s2099 + $0x111] sm:$0xff]
      %v2317 = vld [vmem:[%s2099 + $0x121] sm:$0xff]
      %v2318 = vld [vmem:[%s2099 + $0x129] sm:$0xff]
      %v2319 = vld [vmem:[%s2099 + $0x139] sm:$0xff]
      %v2320 = vld [vmem:[%s2099 + $0x141] sm:$0xff]
      %v2321 = vld [vmem:[%s2099 + $0x151] sm:$0xff]
      %v2322 = vld [vmem:[%s2099 + $0x159] sm:$0xff]
      %v2323 = vld [vmem:[%s2099 + $0x169] sm:$0xff]
      %v2324 = vld [vmem:[%s2099 + $0x171] sm:$0xff]
      %2357 = vrot.lane.b32.xlu0 %v2293, 56
      %v2358 = vpop.permute.xlu0 %2357
      %2359 = vrot.lane.b32.xlu0 %v2294, 56
      %v2360 = vpop.permute.xlu0 %2359
      %2361 = vrot.lane.b32.xlu0 %v2295, 56
      %v2362 = vpop.permute.xlu0 %2361
      %2363 = vrot.lane.b32.xlu0 %v2296, 56
      %v2364 = vpop.permute.xlu0 %2363
      %2365 = vrot.lane.b32.xlu0 %v2297, 56
      %v2366 = vpop.permute.xlu0 %2365
      %2367 = vrot.lane.b32.xlu0 %v2298, 56
      %v2368 = vpop.permute.xlu0 %2367
      %2369 = vrot.lane.b32.xlu0 %v2299, 56
      %v2370 = vpop.permute.xlu0 %2369
      %2371 = vrot.lane.b32.xlu0 %v2300, 56
      %v2372 = vpop.permute.xlu0 %2371
      %2373 = vrot.lane.b32.xlu0 %v2301, 56
      %v2374 = vpop.permute.xlu0 %2373
      %2375 = vrot.lane.b32.xlu0 %v2302, 56
      %v2376 = vpop.permute.xlu0 %2375
      %2377 = vrot.lane.b32.xlu0 %v2303, 56
      %v2378 = vpop.permute.xlu0 %2377
      %2379 = vrot.lane.b32.xlu0 %v2304, 56
      %v2380 = vpop.permute.xlu0 %2379
      %2381 = vrot.lane.b32.xlu0 %v2305, 56
      %v2382 = vpop.permute.xlu0 %2381
      %2383 = vrot.lane.b32.xlu0 %v2306, 56
      %v2384 = vpop.permute.xlu0 %2383
      %2385 = vrot.lane.b32.xlu0 %v2307, 56
      %v2386 = vpop.permute.xlu0 %2385
      %2387 = vrot.lane.b32.xlu0 %v2308, 56
      %v2388 = vpop.permute.xlu0 %2387
      %2389 = vrot.lane.b32.xlu0 %v2309, 56
      %v2390 = vpop.permute.xlu0 %2389
      %2391 = vrot.lane.b32.xlu0 %v2310, 56
      %v2392 = vpop.permute.xlu0 %2391
      %2393 = vrot.lane.b32.xlu0 %v2311, 56
      %v2394 = vpop.permute.xlu0 %2393
      %2395 = vrot.lane.b32.xlu0 %v2312, 56
      %v2396 = vpop.permute.xlu0 %2395
      %2397 = vrot.lane.b32.xlu0 %v2313, 56
      %v2398 = vpop.permute.xlu0 %2397
      %2399 = vrot.lane.b32.xlu0 %v2314, 56
      %v2400 = vpop.permute.xlu0 %2399
      %2401 = vrot.lane.b32.xlu0 %v2315, 56
      %v2402 = vpop.permute.xlu0 %2401
      %2403 = vrot.lane.b32.xlu0 %v2316, 56
      %v2404 = vpop.permute.xlu0 %2403
      %2405 = vrot.lane.b32.xlu0 %v2317, 56
      %v2406 = vpop.permute.xlu0 %2405
      %2407 = vrot.lane.b32.xlu0 %v2318, 56
      %v2408 = vpop.permute.xlu0 %2407
      %2409 = vrot.lane.b32.xlu0 %v2319, 56
      %v2410 = vpop.permute.xlu0 %2409
      %2411 = vrot.lane.b32.xlu0 %v2320, 56
      %v2412 = vpop.permute.xlu0 %2411
      %2413 = vrot.lane.b32.xlu0 %v2321, 56
      %v2414 = vpop.permute.xlu0 %2413
      %2415 = vrot.lane.b32.xlu0 %v2322, 56
      %v2416 = vpop.permute.xlu0 %2415
      %2417 = vrot.lane.b32.xlu0 %v2323, 56
      %v2418 = vpop.permute.xlu0 %2417
      %2419 = vrot.lane.b32.xlu0 %v2324, 56
      %v2420 = vpop.permute.xlu0 %2419
      %vm2453 = vcmask 523712
      %2454 = vst.msk [vmem:[#allocation2] sm:$0xff] %vm2453, %v2358
      %2455 = vst.msk [vmem:[#allocation2 + $0x8] sm:$0xff] %vm2453, %v2360
      %2456 = vst.msk [vmem:[#allocation2 + $0x10] sm:$0xff] %vm2453, %v2362
      %2457 = vst.msk [vmem:[#allocation2 + $0x18] sm:$0xff] %vm2453, %v2364
      %2458 = vst.msk [vmem:[#allocation2 + $0x20] sm:$0xff] %vm2453, %v2366
      %2459 = vst.msk [vmem:[#allocation2 + $0x28] sm:$0xff] %vm2453, %v2368
      %2460 = vst.msk [vmem:[#allocation2 + $0x30] sm:$0xff] %vm2453, %v2370
      %2461 = vst.msk [vmem:[#allocation2 + $0x38] sm:$0xff] %vm2453, %v2372
      %2462 = vst.msk [vmem:[#allocation2 + $0x40] sm:$0xff] %vm2453, %v2374
      %2463 = vst.msk [vmem:[#allocation2 + $0x48] sm:$0xff] %vm2453, %v2376
      %2464 = vst.msk [vmem:[#allocation2 + $0x50] sm:$0xff] %vm2453, %v2378
      %2465 = vst.msk [vmem:[#allocation2 + $0x58] sm:$0xff] %vm2453, %v2380
      %2466 = vst.msk [vmem:[#allocation2 + $0x60] sm:$0xff] %vm2453, %v2382
      %2467 = vst.msk [vmem:[#allocation2 + $0x68] sm:$0xff] %vm2453, %v2384
      %2468 = vst.msk [vmem:[#allocation2 + $0x70] sm:$0xff] %vm2453, %v2386
      %2469 = vst.msk [vmem:[#allocation2 + $0x78] sm:$0xff] %vm2453, %v2388
      %2470 = vst.msk [vmem:[#allocation2 + $0x80] sm:$0xff] %vm2453, %v2390
      %2471 = vst.msk [vmem:[#allocation2 + $0x88] sm:$0xff] %vm2453, %v2392
      %2472 = vst.msk [vmem:[#allocation2 + $0x90] sm:$0xff] %vm2453, %v2394
      %2473 = vst.msk [vmem:[#allocation2 + $0x98] sm:$0xff] %vm2453, %v2396
      %2474 = vst.msk [vmem:[#allocation2 + $0xa0] sm:$0xff] %vm2453, %v2398
      %2475 = vst.msk [vmem:[#allocation2 + $0xa8] sm:$0xff] %vm2453, %v2400
      %2476 = vst.msk [vmem:[#allocation2 + $0xb0] sm:$0xff] %vm2453, %v2402
      %2477 = vst.msk [vmem:[#allocation2 + $0xb8] sm:$0xff] %vm2453, %v2404
      %2478 = vst.msk [vmem:[#allocation2 + $0xc0] sm:$0xff] %vm2453, %v2406
      %2479 = vst.msk [vmem:[#allocation2 + $0xc8] sm:$0xff] %vm2453, %v2408
      %2480 = vst.msk [vmem:[#allocation2 + $0xd0] sm:$0xff] %vm2453, %v2410
      %2481 = vst.msk [vmem:[#allocation2 + $0xd8] sm:$0xff] %vm2453, %v2412
      %2482 = vst.msk [vmem:[#allocation2 + $0xe0] sm:$0xff] %vm2453, %v2414
      %2483 = vst.msk [vmem:[#allocation2 + $0xe8] sm:$0xff] %vm2453, %v2416
      %2484 = vst.msk [vmem:[#allocation2 + $0xf0] sm:$0xff] %vm2453, %v2418
      %2485 = vst.msk [vmem:[#allocation2 + $0xf8] sm:$0xff] %vm2453, %v2420
      %v2486 = vld [vmem:[%s2099 + $0x2] sm:$0xff]
      %v2487 = vld [vmem:[%s2099 + $0xa] sm:$0xff]
      %v2488 = vld [vmem:[%s2099 + $0x1a] sm:$0xff]
      %v2489 = vld [vmem:[%s2099 + $0x22] sm:$0xff]
      %v2490 = vld [vmem:[%s2099 + $0x32] sm:$0xff]
      %v2491 = vld [vmem:[%s2099 + $0x3a] sm:$0xff]
      %v2492 = vld [vmem:[%s2099 + $0x4a] sm:$0xff]
      %v2493 = vld [vmem:[%s2099 + $0x52] sm:$0xff]
      %v2494 = vld [vmem:[%s2099 + $0x62] sm:$0xff]
      %v2495 = vld [vmem:[%s2099 + $0x6a] sm:$0xff]
      %v2496 = vld [vmem:[%s2099 + $0x7a] sm:$0xff]
      %v2497 = vld [vmem:[%s2099 + $0x82] sm:$0xff]
      %v2498 = vld [vmem:[%s2099 + $0x92] sm:$0xff]
      %v2499 = vld [vmem:[%s2099 + $0x9a] sm:$0xff]
      %v2500 = vld [vmem:[%s2099 + $0xaa] sm:$0xff]
      %v2501 = vld [vmem:[%s2099 + $0xb2] sm:$0xff]
      %v2502 = vld [vmem:[%s2099 + $0xc2] sm:$0xff]
      %v2503 = vld [vmem:[%s2099 + $0xca] sm:$0xff]
      %v2504 = vld [vmem:[%s2099 + $0xda] sm:$0xff]
      %v2505 = vld [vmem:[%s2099 + $0xe2] sm:$0xff]
      %v2506 = vld [vmem:[%s2099 + $0xf2] sm:$0xff]
      %v2507 = vld [vmem:[%s2099 + $0xfa] sm:$0xff]
      %v2508 = vld [vmem:[%s2099 + $0x10a] sm:$0xff]
      %v2509 = vld [vmem:[%s2099 + $0x112] sm:$0xff]
      %v2510 = vld [vmem:[%s2099 + $0x122] sm:$0xff]
      %v2511 = vld [vmem:[%s2099 + $0x12a] sm:$0xff]
      %v2512 = vld [vmem:[%s2099 + $0x13a] sm:$0xff]
      %v2513 = vld [vmem:[%s2099 + $0x142] sm:$0xff]
      %v2514 = vld [vmem:[%s2099 + $0x152] sm:$0xff]
      %v2515 = vld [vmem:[%s2099 + $0x15a] sm:$0xff]
      %v2516 = vld [vmem:[%s2099 + $0x16a] sm:$0xff]
      %v2517 = vld [vmem:[%s2099 + $0x172] sm:$0xff]
      %2550 = vrot.lane.b32.xlu0 %v2486, 64
      %v2551 = vpop.permute.xlu0 %2550
      %2552 = vrot.lane.b32.xlu0 %v2487, 64
      %v2553 = vpop.permute.xlu0 %2552
      %2554 = vrot.lane.b32.xlu0 %v2488, 64
      %v2555 = vpop.permute.xlu0 %2554
      %2556 = vrot.lane.b32.xlu0 %v2489, 64
      %v2557 = vpop.permute.xlu0 %2556
      %2558 = vrot.lane.b32.xlu0 %v2490, 64
      %v2559 = vpop.permute.xlu0 %2558
      %2560 = vrot.lane.b32.xlu0 %v2491, 64
      %v2561 = vpop.permute.xlu0 %2560
      %2562 = vrot.lane.b32.xlu0 %v2492, 64
      %v2563 = vpop.permute.xlu0 %2562
      %2564 = vrot.lane.b32.xlu0 %v2493, 64
      %v2565 = vpop.permute.xlu0 %2564
      %2566 = vrot.lane.b32.xlu0 %v2494, 64
      %v2567 = vpop.permute.xlu0 %2566
      %2568 = vrot.lane.b32.xlu0 %v2495, 64
      %v2569 = vpop.permute.xlu0 %2568
      %2570 = vrot.lane.b32.xlu0 %v2496, 64
      %v2571 = vpop.permute.xlu0 %2570
      %2572 = vrot.lane.b32.xlu0 %v2497, 64
      %v2573 = vpop.permute.xlu0 %2572
      %2574 = vrot.lane.b32.xlu0 %v2498, 64
      %v2575 = vpop.permute.xlu0 %2574
      %2576 = vrot.lane.b32.xlu0 %v2499, 64
      %v2577 = vpop.permute.xlu0 %2576
      %2578 = vrot.lane.b32.xlu0 %v2500, 64
      %v2579 = vpop.permute.xlu0 %2578
      %2580 = vrot.lane.b32.xlu0 %v2501, 64
      %v2581 = vpop.permute.xlu0 %2580
      %2582 = vrot.lane.b32.xlu0 %v2502, 64
      %v2583 = vpop.permute.xlu0 %2582
      %2584 = vrot.lane.b32.xlu0 %v2503, 64
      %v2585 = vpop.permute.xlu0 %2584
      %2586 = vrot.lane.b32.xlu0 %v2504, 64
      %v2587 = vpop.permute.xlu0 %2586
      %2588 = vrot.lane.b32.xlu0 %v2505, 64
      %v2589 = vpop.permute.xlu0 %2588
      %2590 = vrot.lane.b32.xlu0 %v2506, 64
      %v2591 = vpop.permute.xlu0 %2590
      %2592 = vrot.lane.b32.xlu0 %v2507, 64
      %v2593 = vpop.permute.xlu0 %2592
      %2594 = vrot.lane.b32.xlu0 %v2508, 64
      %v2595 = vpop.permute.xlu0 %2594
      %2596 = vrot.lane.b32.xlu0 %v2509, 64
      %v2597 = vpop.permute.xlu0 %2596
      %2598 = vrot.lane.b32.xlu0 %v2510, 64
      %v2599 = vpop.permute.xlu0 %2598
      %2600 = vrot.lane.b32.xlu0 %v2511, 64
      %v2601 = vpop.permute.xlu0 %2600
      %2602 = vrot.lane.b32.xlu0 %v2512, 64
      %v2603 = vpop.permute.xlu0 %2602
      %2604 = vrot.lane.b32.xlu0 %v2513, 64
      %v2605 = vpop.permute.xlu0 %2604
      %2606 = vrot.lane.b32.xlu0 %v2514, 64
      %v2607 = vpop.permute.xlu0 %2606
      %2608 = vrot.lane.b32.xlu0 %v2515, 64
      %v2609 = vpop.permute.xlu0 %2608
      %2610 = vrot.lane.b32.xlu0 %v2516, 64
      %v2611 = vpop.permute.xlu0 %2610
      %2612 = vrot.lane.b32.xlu0 %v2517, 64
      %v2613 = vpop.permute.xlu0 %2612
      %vm2646 = vcmask 589312
      %2647 = vst.msk [vmem:[#allocation2] sm:$0xff] %vm2646, %v2551
      %2648 = vst.msk [vmem:[#allocation2 + $0x8] sm:$0xff] %vm2646, %v2553
      %2649 = vst.msk [vmem:[#allocation2 + $0x10] sm:$0xff] %vm2646, %v2555
      %2650 = vst.msk [vmem:[#allocation2 + $0x18] sm:$0xff] %vm2646, %v2557
      %2651 = vst.msk [vmem:[#allocation2 + $0x20] sm:$0xff] %vm2646, %v2559
      %2652 = vst.msk [vmem:[#allocation2 + $0x28] sm:$0xff] %vm2646, %v2561
      %2653 = vst.msk [vmem:[#allocation2 + $0x30] sm:$0xff] %vm2646, %v2563
      %2654 = vst.msk [vmem:[#allocation2 + $0x38] sm:$0xff] %vm2646, %v2565
      %2655 = vst.msk [vmem:[#allocation2 + $0x40] sm:$0xff] %vm2646, %v2567
      %2656 = vst.msk [vmem:[#allocation2 + $0x48] sm:$0xff] %vm2646, %v2569
      %2657 = vst.msk [vmem:[#allocation2 + $0x50] sm:$0xff] %vm2646, %v2571
      %2658 = vst.msk [vmem:[#allocation2 + $0x58] sm:$0xff] %vm2646, %v2573
      %2659 = vst.msk [vmem:[#allocation2 + $0x60] sm:$0xff] %vm2646, %v2575
      %2660 = vst.msk [vmem:[#allocation2 + $0x68] sm:$0xff] %vm2646, %v2577
      %2661 = vst.msk [vmem:[#allocation2 + $0x70] sm:$0xff] %vm2646, %v2579
      %2662 = vst.msk [vmem:[#allocation2 + $0x78] sm:$0xff] %vm2646, %v2581
      %2663 = vst.msk [vmem:[#allocation2 + $0x80] sm:$0xff] %vm2646, %v2583
      %2664 = vst.msk [vmem:[#allocation2 + $0x88] sm:$0xff] %vm2646, %v2585
      %2665 = vst.msk [vmem:[#allocation2 + $0x90] sm:$0xff] %vm2646, %v2587
      %2666 = vst.msk [vmem:[#allocation2 + $0x98] sm:$0xff] %vm2646, %v2589
      %2667 = vst.msk [vmem:[#allocation2 + $0xa0] sm:$0xff] %vm2646, %v2591
      %2668 = vst.msk [vmem:[#allocation2 + $0xa8] sm:$0xff] %vm2646, %v2593
      %2669 = vst.msk [vmem:[#allocation2 + $0xb0] sm:$0xff] %vm2646, %v2595
      %2670 = vst.msk [vmem:[#allocation2 + $0xb8] sm:$0xff] %vm2646, %v2597
      %2671 = vst.msk [vmem:[#allocation2 + $0xc0] sm:$0xff] %vm2646, %v2599
      %2672 = vst.msk [vmem:[#allocation2 + $0xc8] sm:$0xff] %vm2646, %v2601
      %2673 = vst.msk [vmem:[#allocation2 + $0xd0] sm:$0xff] %vm2646, %v2603
      %2674 = vst.msk [vmem:[#allocation2 + $0xd8] sm:$0xff] %vm2646, %v2605
      %2675 = vst.msk [vmem:[#allocation2 + $0xe0] sm:$0xff] %vm2646, %v2607
      %2676 = vst.msk [vmem:[#allocation2 + $0xe8] sm:$0xff] %vm2646, %v2609
      %2677 = vst.msk [vmem:[#allocation2 + $0xf0] sm:$0xff] %vm2646, %v2611
      %2678 = vst.msk [vmem:[#allocation2 + $0xf8] sm:$0xff] %vm2646, %v2613
      %v2679 = vld [vmem:[#allocation2] sm:$0xff]
      %v2680 = vld [vmem:[#allocation2 + $0x8] sm:$0xff]
      %v2681 = vld [vmem:[#allocation2 + $0x10] sm:$0xff]
      %v2682 = vld [vmem:[#allocation2 + $0x18] sm:$0xff]
      %v2683 = vld [vmem:[#allocation2 + $0x20] sm:$0xff]
      %v2684 = vld [vmem:[#allocation2 + $0x28] sm:$0xff]
      %v2685 = vld [vmem:[#allocation2 + $0x30] sm:$0xff]
      %v2686 = vld [vmem:[#allocation2 + $0x38] sm:$0xff]
      %v2687 = vld [vmem:[#allocation2 + $0x40] sm:$0xff]
      %v2688 = vld [vmem:[#allocation2 + $0x48] sm:$0xff]
      %v2689 = vld [vmem:[#allocation2 + $0x50] sm:$0xff]
      %v2690 = vld [vmem:[#allocation2 + $0x58] sm:$0xff]
      %v2691 = vld [vmem:[#allocation2 + $0x60] sm:$0xff]
      %v2692 = vld [vmem:[#allocation2 + $0x68] sm:$0xff]
      %v2693 = vld [vmem:[#allocation2 + $0x70] sm:$0xff]
      %v2694 = vld [vmem:[#allocation2 + $0x78] sm:$0xff]
      %v2695 = vld [vmem:[#allocation2 + $0x80] sm:$0xff]
      %v2696 = vld [vmem:[#allocation2 + $0x88] sm:$0xff]
      %v2697 = vld [vmem:[#allocation2 + $0x90] sm:$0xff]
      %v2698 = vld [vmem:[#allocation2 + $0x98] sm:$0xff]
      %v2699 = vld [vmem:[#allocation2 + $0xa0] sm:$0xff]
      %v2700 = vld [vmem:[#allocation2 + $0xa8] sm:$0xff]
      %v2701 = vld [vmem:[#allocation2 + $0xb0] sm:$0xff]
      %v2702 = vld [vmem:[#allocation2 + $0xb8] sm:$0xff]
      %v2703 = vld [vmem:[#allocation2 + $0xc0] sm:$0xff]
      %v2704 = vld [vmem:[#allocation2 + $0xc8] sm:$0xff]
      %v2705 = vld [vmem:[#allocation2 + $0xd0] sm:$0xff]
      %v2706 = vld [vmem:[#allocation2 + $0xd8] sm:$0xff]
      %v2707 = vld [vmem:[#allocation2 + $0xe0] sm:$0xff]
      %v2708 = vld [vmem:[#allocation2 + $0xe8] sm:$0xff]
      %v2709 = vld [vmem:[#allocation2 + $0xf0] sm:$0xff]
      %v2710 = vld [vmem:[#allocation2 + $0xf8] sm:$0xff]
      %vm2711 = vcmask 588800
      %v2713 = vsel %vm2711, %v2679, 0
      %v2716 = vsel %vm2711, %v2680, 0
      %v2719 = vsel %vm2711, %v2681, 0
      %v2722 = vsel %vm2711, %v2682, 0
      %v2725 = vsel %vm2711, %v2683, 0
      %v2728 = vsel %vm2711, %v2684, 0
      %v2731 = vsel %vm2711, %v2685, 0
      %v2734 = vsel %vm2711, %v2686, 0
      %v2737 = vsel %vm2711, %v2687, 0
      %v2740 = vsel %vm2711, %v2688, 0
      %v2743 = vsel %vm2711, %v2689, 0
      %v2746 = vsel %vm2711, %v2690, 0
      %v2749 = vsel %vm2711, %v2691, 0
      %v2752 = vsel %vm2711, %v2692, 0
      %v2755 = vsel %vm2711, %v2693, 0
      %v2758 = vsel %vm2711, %v2694, 0
      %v2761 = vsel %vm2711, %v2695, 0
      %v2764 = vsel %vm2711, %v2696, 0
      %v2767 = vsel %vm2711, %v2697, 0
      %v2770 = vsel %vm2711, %v2698, 0
      %v2773 = vsel %vm2711, %v2699, 0
      %v2776 = vsel %vm2711, %v2700, 0
      %v2779 = vsel %vm2711, %v2701, 0
      %v2782 = vsel %vm2711, %v2702, 0
      %v2785 = vsel %vm2711, %v2703, 0
      %v2788 = vsel %vm2711, %v2704, 0
      %v2791 = vsel %vm2711, %v2705, 0
      %v2794 = vsel %vm2711, %v2706, 0
      %v2797 = vsel %vm2711, %v2707, 0
      %v2800 = vsel %vm2711, %v2708, 0
      %v2803 = vsel %vm2711, %v2709, 0
      %v2806 = vsel %vm2711, %v2710, 0
      %2808 = vmatpush.msra.mxu0 0.0
      %2809 = vmatpush.msra.mxu0 0.0
      %2810 = vmatpush.msra.mxu0 0.0
      %2811 = vmatpush.msra.mxu0 0.0
      %2812 = vmatpush.msra.mxu0 0.0
      %2813 = vmatpush.msra.mxu0 0.0
      %2814 = vmatpush.msra.mxu0 0.0
      %2815 = vmatpush.msra.mxu0 %v250
      %2816 = vmatpush.msra.mxu0 %v249
      %2817 = vmatpush.msra.mxu0 %v248
      %2818 = vmatpush.msra.mxu0 %v247
      %2819 = vmatpush.msra.mxu0 %v246
      %2820 = vmatpush.msra.mxu0 %v245
      %2821 = vmatpush.msra.mxu0 %v244
      %2822 = vmatpush.msra.mxu0 %v243
      %2823 = vmatpush.msra.mxu0 %v242
      %2824 = vmatmul.f32.gmra.mxu0 %v2713
      %v2825 = vpop.f32.mrf.mxu0
      %v2826 = vadd.f32 0.0, %v2825
      %2827 = vmatmul.f32.gmra.mxu0 %v2716
      %v2828 = vpop.f32.mrf.mxu0
      %v2829 = vadd.f32 0.0, %v2828
      %2830 = vmatmul.f32.gmra.mxu0 %v2719
      %v2831 = vpop.f32.mrf.mxu0
      %v2832 = vadd.f32 0.0, %v2831
      %2833 = vmatmul.f32.gmra.mxu0 %v2722
      %v2834 = vpop.f32.mrf.mxu0
      %v2835 = vadd.f32 0.0, %v2834
      %2836 = vmatmul.f32.gmra.mxu0 %v2725
      %v2837 = vpop.f32.mrf.mxu0
      %v2838 = vadd.f32 0.0, %v2837
      %2839 = vmatmul.f32.gmra.mxu0 %v2728
      %v2840 = vpop.f32.mrf.mxu0
      %v2841 = vadd.f32 0.0, %v2840
      %2842 = vmatmul.f32.gmra.mxu0 %v2731
      %v2843 = vpop.f32.mrf.mxu0
      %v2844 = vadd.f32 0.0, %v2843
      %2845 = vmatmul.f32.gmra.mxu0 %v2734
      %v2846 = vpop.f32.mrf.mxu0
      %v2847 = vadd.f32 0.0, %v2846
      %2848 = vmatmul.f32.gmra.mxu0 %v2737
      %v2849 = vpop.f32.mrf.mxu0
      %v2850 = vadd.f32 0.0, %v2849
      %2851 = vmatmul.f32.gmra.mxu0 %v2740
      %v2852 = vpop.f32.mrf.mxu0
      %v2853 = vadd.f32 0.0, %v2852
      %2854 = vmatmul.f32.gmra.mxu0 %v2743
      %v2855 = vpop.f32.mrf.mxu0
      %v2856 = vadd.f32 0.0, %v2855
      %2857 = vmatmul.f32.gmra.mxu0 %v2746
      %v2858 = vpop.f32.mrf.mxu0
      %v2859 = vadd.f32 0.0, %v2858
      %2860 = vmatmul.f32.gmra.mxu0 %v2749
      %v2861 = vpop.f32.mrf.mxu0
      %v2862 = vadd.f32 0.0, %v2861
      %2863 = vmatmul.f32.gmra.mxu0 %v2752
      %v2864 = vpop.f32.mrf.mxu0
      %v2865 = vadd.f32 0.0, %v2864
      %2866 = vmatmul.f32.gmra.mxu0 %v2755
      %v2867 = vpop.f32.mrf.mxu0
      %v2868 = vadd.f32 0.0, %v2867
      %2869 = vmatmul.f32.gmra.mxu0 %v2758
      %v2870 = vpop.f32.mrf.mxu0
      %v2871 = vadd.f32 0.0, %v2870
      %2872 = vmatmul.f32.gmra.mxu0 %v2761
      %v2873 = vpop.f32.mrf.mxu0
      %v2874 = vadd.f32 0.0, %v2873
      %2875 = vmatmul.f32.gmra.mxu0 %v2764
      %v2876 = vpop.f32.mrf.mxu0
      %v2877 = vadd.f32 0.0, %v2876
      %2878 = vmatmul.f32.gmra.mxu0 %v2767
      %v2879 = vpop.f32.mrf.mxu0
      %v2880 = vadd.f32 0.0, %v2879
      %2881 = vmatmul.f32.gmra.mxu0 %v2770
      %v2882 = vpop.f32.mrf.mxu0
      %v2883 = vadd.f32 0.0, %v2882
      %2884 = vmatmul.f32.gmra.mxu0 %v2773
      %v2885 = vpop.f32.mrf.mxu0
      %v2886 = vadd.f32 0.0, %v2885
      %2887 = vmatmul.f32.gmra.mxu0 %v2776
      %v2888 = vpop.f32.mrf.mxu0
      %v2889 = vadd.f32 0.0, %v2888
      %2890 = vmatmul.f32.gmra.mxu0 %v2779
      %v2891 = vpop.f32.mrf.mxu0
      %v2892 = vadd.f32 0.0, %v2891
      %2893 = vmatmul.f32.gmra.mxu0 %v2782
      %v2894 = vpop.f32.mrf.mxu0
      %v2895 = vadd.f32 0.0, %v2894
      %2896 = vmatmul.f32.gmra.mxu0 %v2785
      %v2897 = vpop.f32.mrf.mxu0
      %v2898 = vadd.f32 0.0, %v2897
      %2899 = vmatmul.f32.gmra.mxu0 %v2788
      %v2900 = vpop.f32.mrf.mxu0
      %v2901 = vadd.f32 0.0, %v2900
      %2902 = vmatmul.f32.gmra.mxu0 %v2791
      %v2903 = vpop.f32.mrf.mxu0
      %v2904 = vadd.f32 0.0, %v2903
      %2905 = vmatmul.f32.gmra.mxu0 %v2794
      %v2906 = vpop.f32.mrf.mxu0
      %v2907 = vadd.f32 0.0, %v2906
      %2908 = vmatmul.f32.gmra.mxu0 %v2797
      %v2909 = vpop.f32.mrf.mxu0
      %v2910 = vadd.f32 0.0, %v2909
      %2911 = vmatmul.f32.gmra.mxu0 %v2800
      %v2912 = vpop.f32.mrf.mxu0
      %v2913 = vadd.f32 0.0, %v2912
      %2914 = vmatmul.f32.gmra.mxu0 %v2803
      %v2915 = vpop.f32.mrf.mxu0
      %v2916 = vadd.f32 0.0, %v2915
      %2917 = vmatmul.f32.gmra.mxu0 %v2806
      %v2918 = vpop.f32.mrf.mxu0
      %v2919 = vadd.f32 0.0, %v2918
      %2920 = vdwg.mxu0
      %v2921 = vsel %vm991, %v2826, 0.0
      %v2922 = vsel %vm991, %v2829, 0.0
      %v2923 = vadd.f32 %v2921, %v2922
      %v2924 = vsel %vm991, %v2832, 0.0
      %v2925 = vadd.f32 %v2923, %v2924
      %v2926 = vsel %vm991, %v2835, 0.0
      %v2927 = vadd.f32 %v2925, %v2926
      %v2928 = vsel %vm991, %v2838, 0.0
      %v2929 = vadd.f32 %v2927, %v2928
      %v2930 = vsel %vm991, %v2841, 0.0
      %v2931 = vadd.f32 %v2929, %v2930
      %v2932 = vsel %vm991, %v2844, 0.0
      %v2933 = vadd.f32 %v2931, %v2932
      %v2934 = vsel %vm991, %v2847, 0.0
      %v2935 = vadd.f32 %v2933, %v2934
      %v2936 = vsel %vm991, %v2850, 0.0
      %v2937 = vadd.f32 %v2935, %v2936
      %v2938 = vsel %vm991, %v2853, 0.0
      %v2939 = vadd.f32 %v2937, %v2938
      %v2940 = vsel %vm991, %v2856, 0.0
      %v2941 = vadd.f32 %v2939, %v2940
      %v2942 = vsel %vm991, %v2859, 0.0
      %v2943 = vadd.f32 %v2941, %v2942
      %v2944 = vsel %vm991, %v2862, 0.0
      %v2945 = vadd.f32 %v2943, %v2944
      %v2946 = vsel %vm991, %v2865, 0.0
      %v2947 = vadd.f32 %v2945, %v2946
      %v2948 = vsel %vm991, %v2868, 0.0
      %v2949 = vadd.f32 %v2947, %v2948
      %v2950 = vsel %vm991, %v2871, 0.0
      %v2951 = vadd.f32 %v2949, %v2950
      %v2952 = vsel %vm991, %v2874, 0.0
      %v2953 = vadd.f32 %v2951, %v2952
      %v2954 = vsel %vm991, %v2877, 0.0
      %v2955 = vadd.f32 %v2953, %v2954
      %v2956 = vsel %vm991, %v2880, 0.0
      %v2957 = vadd.f32 %v2955, %v2956
      %v2958 = vsel %vm991, %v2883, 0.0
      %v2959 = vadd.f32 %v2957, %v2958
      %v2960 = vsel %vm991, %v2886, 0.0
      %v2961 = vadd.f32 %v2959, %v2960
      %v2962 = vsel %vm991, %v2889, 0.0
      %v2963 = vadd.f32 %v2961, %v2962
      %v2964 = vsel %vm991, %v2892, 0.0
      %v2965 = vadd.f32 %v2963, %v2964
      %v2966 = vsel %vm991, %v2895, 0.0
      %v2967 = vadd.f32 %v2965, %v2966
      %v2968 = vsel %vm991, %v2898, 0.0
      %v2969 = vadd.f32 %v2967, %v2968
      %v2970 = vsel %vm991, %v2901, 0.0
      %v2971 = vadd.f32 %v2969, %v2970
      %v2972 = vsel %vm991, %v2904, 0.0
      %v2973 = vadd.f32 %v2971, %v2972
      %v2974 = vsel %vm991, %v2907, 0.0
      %v2975 = vadd.f32 %v2973, %v2974
      %v2976 = vsel %vm991, %v2910, 0.0
      %v2977 = vadd.f32 %v2975, %v2976
      %v2978 = vsel %vm991, %v2913, 0.0
      %v2979 = vadd.f32 %v2977, %v2978
      %v2980 = vsel %vm991, %v2916, 0.0
      %v2981 = vadd.f32 %v2979, %v2980
      %v2982 = vsel %vm991, %v2919, 0.0
      %v2983 = vadd.f32 %v2981, %v2982
      %v2984 = vrot.slane %v2983, 4
      %v2985 = vadd.f32 %v2983, %v2984
      %v2986 = vrot.slane %v2985, 2
      %v2987 = vadd.f32 %v2985, %v2986
      %v2988 = vrot.slane %v2987, 1
      %v2989 = vadd.f32 %v2987, %v2988
      %v2990 = vadd.f32 %v2989, 0.0
      %v2991 = vmul.f32 %v2826, %v2826
      %v2992 = vmul.f32 %v2829, %v2829
      %v2993 = vmul.f32 %v2832, %v2832
      %v2994 = vmul.f32 %v2835, %v2835
      %v2995 = vmul.f32 %v2838, %v2838
      %v2996 = vmul.f32 %v2841, %v2841
      %v2997 = vmul.f32 %v2844, %v2844
      %v2998 = vmul.f32 %v2847, %v2847
      %v2999 = vmul.f32 %v2850, %v2850
      %v3000 = vmul.f32 %v2853, %v2853
      %v3001 = vmul.f32 %v2856, %v2856
      %v3002 = vmul.f32 %v2859, %v2859
      %v3003 = vmul.f32 %v2862, %v2862
      %v3004 = vmul.f32 %v2865, %v2865
      %v3005 = vmul.f32 %v2868, %v2868
      %v3006 = vmul.f32 %v2871, %v2871
      %v3007 = vmul.f32 %v2874, %v2874
      %v3008 = vmul.f32 %v2877, %v2877
      %v3009 = vmul.f32 %v2880, %v2880
      %v3010 = vmul.f32 %v2883, %v2883
      %v3011 = vmul.f32 %v2886, %v2886
      %v3012 = vmul.f32 %v2889, %v2889
      %v3013 = vmul.f32 %v2892, %v2892
      %v3014 = vmul.f32 %v2895, %v2895
      %v3015 = vmul.f32 %v2898, %v2898
      %v3016 = vmul.f32 %v2901, %v2901
      %v3017 = vmul.f32 %v2904, %v2904
      %v3018 = vmul.f32 %v2907, %v2907
      %v3019 = vmul.f32 %v2910, %v2910
      %v3020 = vmul.f32 %v2913, %v2913
      %v3021 = vmul.f32 %v2916, %v2916
      %v3022 = vmul.f32 %v2919, %v2919
      %v3023 = vsel %vm991, %v2991, 0.0
      %v3024 = vsel %vm991, %v2992, 0.0
      %v3025 = vadd.f32 %v3023, %v3024
      %v3026 = vsel %vm991, %v2993, 0.0
      %v3027 = vadd.f32 %v3025, %v3026
      %v3028 = vsel %vm991, %v2994, 0.0
      %v3029 = vadd.f32 %v3027, %v3028
      %v3030 = vsel %vm991, %v2995, 0.0
      %v3031 = vadd.f32 %v3029, %v3030
      %v3032 = vsel %vm991, %v2996, 0.0
      %v3033 = vadd.f32 %v3031, %v3032
      %v3034 = vsel %vm991, %v2997, 0.0
      %v3035 = vadd.f32 %v3033, %v3034
      %v3036 = vsel %vm991, %v2998, 0.0
      %v3037 = vadd.f32 %v3035, %v3036
      %v3038 = vsel %vm991, %v2999, 0.0
      %v3039 = vadd.f32 %v3037, %v3038
      %v3040 = vsel %vm991, %v3000, 0.0
      %v3041 = vadd.f32 %v3039, %v3040
      %v3042 = vsel %vm991, %v3001, 0.0
      %v3043 = vadd.f32 %v3041, %v3042
      %v3044 = vsel %vm991, %v3002, 0.0
      %v3045 = vadd.f32 %v3043, %v3044
      %v3046 = vsel %vm991, %v3003, 0.0
      %v3047 = vadd.f32 %v3045, %v3046
      %v3048 = vsel %vm991, %v3004, 0.0
      %v3049 = vadd.f32 %v3047, %v3048
      %v3050 = vsel %vm991, %v3005, 0.0
      %v3051 = vadd.f32 %v3049, %v3050
      %v3052 = vsel %vm991, %v3006, 0.0
      %v3053 = vadd.f32 %v3051, %v3052
      %v3054 = vsel %vm991, %v3007, 0.0
      %v3055 = vadd.f32 %v3053, %v3054
      %v3056 = vsel %vm991, %v3008, 0.0
      %v3057 = vadd.f32 %v3055, %v3056
      %v3058 = vsel %vm991, %v3009, 0.0
      %v3059 = vadd.f32 %v3057, %v3058
      %v3060 = vsel %vm991, %v3010, 0.0
      %v3061 = vadd.f32 %v3059, %v3060
      %v3062 = vsel %vm991, %v3011, 0.0
      %v3063 = vadd.f32 %v3061, %v3062
      %v3064 = vsel %vm991, %v3012, 0.0
      %v3065 = vadd.f32 %v3063, %v3064
      %v3066 = vsel %vm991, %v3013, 0.0
      %v3067 = vadd.f32 %v3065, %v3066
      %v3068 = vsel %vm991, %v3014, 0.0
      %v3069 = vadd.f32 %v3067, %v3068
      %v3070 = vsel %vm991, %v3015, 0.0
      %v3071 = vadd.f32 %v3069, %v3070
      %v3072 = vsel %vm991, %v3016, 0.0
      %v3073 = vadd.f32 %v3071, %v3072
      %v3074 = vsel %vm991, %v3017, 0.0
      %v3075 = vadd.f32 %v3073, %v3074
      %v3076 = vsel %vm991, %v3018, 0.0
      %v3077 = vadd.f32 %v3075, %v3076
      %v3078 = vsel %vm991, %v3019, 0.0
      %v3079 = vadd.f32 %v3077, %v3078
      %v3080 = vsel %vm991, %v3020, 0.0
      %v3081 = vadd.f32 %v3079, %v3080
      %v3082 = vsel %vm991, %v3021, 0.0
      %v3083 = vadd.f32 %v3081, %v3082
      %v3084 = vsel %vm991, %v3022, 0.0
      %v3085 = vadd.f32 %v3083, %v3084
      %v3086 = vrot.slane %v3085, 4
      %v3087 = vadd.f32 %v3085, %v3086
      %v3088 = vrot.slane %v3087, 2
      %v3089 = vadd.f32 %v3087, %v3088
      %v3090 = vrot.slane %v3089, 1
      %v3091 = vadd.f32 %v3089, %v3090
      %v3092 = vadd.f32 %v3091, 0.0
      %3093 = vst.msk [vmem:[%s235] sm:$0xff] %vm991, %v2826
      %3094 = vst.msk [vmem:[%s235 + $0x8] sm:$0xff] %vm991, %v2829
      %3095 = vst.msk [vmem:[%s235 + $0x10] sm:$0xff] %vm991, %v2832
      %3096 = vst.msk [vmem:[%s235 + $0x18] sm:$0xff] %vm991, %v2835
      %3097 = vst.msk [vmem:[%s235 + $0x20] sm:$0xff] %vm991, %v2838
      %3098 = vst.msk [vmem:[%s235 + $0x28] sm:$0xff] %vm991, %v2841
      %3099 = vst.msk [vmem:[%s235 + $0x30] sm:$0xff] %vm991, %v2844
      %3100 = vst.msk [vmem:[%s235 + $0x38] sm:$0xff] %vm991, %v2847
      %3101 = vst.msk [vmem:[%s235 + $0x40] sm:$0xff] %vm991, %v2850
      %3102 = vst.msk [vmem:[%s235 + $0x48] sm:$0xff] %vm991, %v2853
      %3103 = vst.msk [vmem:[%s235 + $0x50] sm:$0xff] %vm991, %v2856
      %3104 = vst.msk [vmem:[%s235 + $0x58] sm:$0xff] %vm991, %v2859
      %3105 = vst.msk [vmem:[%s235 + $0x60] sm:$0xff] %vm991, %v2862
      %3106 = vst.msk [vmem:[%s235 + $0x68] sm:$0xff] %vm991, %v2865
      %3107 = vst.msk [vmem:[%s235 + $0x70] sm:$0xff] %vm991, %v2868
      %3108 = vst.msk [vmem:[%s235 + $0x78] sm:$0xff] %vm991, %v2871
      %3109 = vst.msk [vmem:[%s235 + $0x80] sm:$0xff] %vm991, %v2874
      %3110 = vst.msk [vmem:[%s235 + $0x88] sm:$0xff] %vm991, %v2877
      %3111 = vst.msk [vmem:[%s235 + $0x90] sm:$0xff] %vm991, %v2880
      %3112 = vst.msk [vmem:[%s235 + $0x98] sm:$0xff] %vm991, %v2883
      %3113 = vst.msk [vmem:[%s235 + $0xa0] sm:$0xff] %vm991, %v2886
      %3114 = vst.msk [vmem:[%s235 + $0xa8] sm:$0xff] %vm991, %v2889
      %3115 = vst.msk [vmem:[%s235 + $0xb0] sm:$0xff] %vm991, %v2892
      %3116 = vst.msk [vmem:[%s235 + $0xb8] sm:$0xff] %vm991, %v2895
      %3117 = vst.msk [vmem:[%s235 + $0xc0] sm:$0xff] %vm991, %v2898
      %3118 = vst.msk [vmem:[%s235 + $0xc8] sm:$0xff] %vm991, %v2901
      %3119 = vst.msk [vmem:[%s235 + $0xd0] sm:$0xff] %vm991, %v2904
      %3120 = vst.msk [vmem:[%s235 + $0xd8] sm:$0xff] %vm991, %v2907
      %3121 = vst.msk [vmem:[%s235 + $0xe0] sm:$0xff] %vm991, %v2910
      %3122 = vst.msk [vmem:[%s235 + $0xe8] sm:$0xff] %vm991, %v2913
      %3123 = vst.msk [vmem:[%s235 + $0xf0] sm:$0xff] %vm991, %v2916
      %3124 = vst.msk [vmem:[%s235 + $0xf8] sm:$0xff] %vm991, %v2919
      %3125 = vst.msk [vmem:[%s238] sm:$0x1] %vm1000, %v2990
      %3126 = vst.msk [vmem:[%s241] sm:$0x1] %vm1000, %v3092
      %p3127 = scmp.lt.s32.totalorder %s17, 1
      %s3128 = scalar_select %p3127, %s17, 1
      %s3129 = smul.addr %s3128, 32
      %s3130 = smul.addr %s3129, 8
      %s3131 = scalar_lea.vmem %s3, %s3130
      %p3132 = scmp.lt.s32.totalorder %s17, 1
      %s3133 = scalar_select %p3132, %s17, 1
      %s3134 = scalar_lea.vmem %s4, %s3133
      %p3135 = scmp.lt.s32.totalorder %s17, 1
      %s3136 = scalar_select %p3135, %s17, 1
      %s3137 = scalar_lea.vmem %s5, %s3136
      // Predicated region
      $region33: #{residual_block_pallas.4} parent=31 // pred_check
        %p3138 = pneg %p103
      $region34: #{residual_block_pallas.4} parent=31 // pred_check_branch
        %3140 = sbr.rel (%p3138) target = $region36
      $region35: #{residual_block_pallas.4} parent=31 // pred_region
        _
      $region36: #{residual_block_pallas.4} parent=31 // pred_fallthru
        _
      // Predicated region
      $region37: #{residual_block_pallas.4} parent=31 // pred_check
        %p3141 = pneg %p129
      $region38: #{residual_block_pallas.4} parent=31 // pred_check_branch
        %3143 = sbr.rel (%p3141) target = $region40
      $region39: #{residual_block_pallas.4} parent=31 // pred_region
        _
      $region40: #{residual_block_pallas.4} parent=31 // pred_fallthru
        _
      // Predicated region
      $region41: #{residual_block_pallas.4} parent=31 // pred_check
        %p3144 = pneg %p155
      $region42: #{residual_block_pallas.4} parent=31 // pred_check_branch
        %3146 = sbr.rel (%p3144) target = $region44
      $region43: #{residual_block_pallas.4} parent=31 // pred_region
        _
      $region44: #{residual_block_pallas.4} parent=31 // pred_fallthru
        _
    $region32: #{residual_block_pallas.4} parent=5 // pred_fallthru
      _
    %p3147 = scmp.le.s32.totalorder 2, %s12
    // Predicated region
    $region45: #{residual_block_pallas.4} parent=5 // pred_check
      %p3148 = pneg %p3147
    $region46: #{residual_block_pallas.4} parent=5 // pred_check_branch
      %3150 = sbr.rel (%p3148) target = $region48
    $region47: #{residual_block_pallas.4} parent=5 // pred_region
      %s3151 = ssub.s32 %s12, 2
      // Predicated region
      $region49: #{residual_block_pallas.4} parent=47 // pred_check
        %p3152 = pneg %p109
      $region50: #{residual_block_pallas.4} parent=47 // pred_check_branch
        %3154 = sbr.rel (%p3152) target = $region52
      $region51: #{residual_block_pallas.4} parent=47 // pred_region
        %p3155 = scmp.lt.s32.totalorder %s18, 1
        %s3156 = scalar_select %p3155, %s18, 1
        %s3157 = smul.addr %s3156, 32
        %s3158 = smul.addr %s3157, 8
        %s3159 = scalar_lea.vmem %s3, %s3158
      $region52: #{residual_block_pallas.4} parent=47 // pred_fallthru
        _
      // Predicated region
      $region53: #{residual_block_pallas.4} parent=47 // pred_check
        %p3160 = pneg %p135
      $region54: #{residual_block_pallas.4} parent=47 // pred_check_branch
        %3162 = sbr.rel (%p3160) target = $region56
      $region55: #{residual_block_pallas.4} parent=47 // pred_region
        %p3163 = scmp.lt.s32.totalorder %s18, 1
        %s3164 = scalar_select %p3163, %s18, 1
        %s3165 = scalar_lea.vmem %s4, %s3164
      $region56: #{residual_block_pallas.4} parent=47 // pred_fallthru
        _
      // Predicated region
      $region57: #{residual_block_pallas.4} parent=47 // pred_check
        %p3166 = pneg %p161
      $region58: #{residual_block_pallas.4} parent=47 // pred_check_branch
        %3168 = sbr.rel (%p3166) target = $region60
      $region59: #{residual_block_pallas.4} parent=47 // pred_region
        %p3169 = scmp.lt.s32.totalorder %s18, 1
        %s3170 = scalar_select %p3169, %s18, 1
        %s3171 = scalar_lea.vmem %s5, %s3170
      $region60: #{residual_block_pallas.4} parent=47 // pred_fallthru
        _
    $region48: #{residual_block_pallas.4} parent=5 // pred_fallthru
      _
  $region6: #{residual_block_pallas.4} parent=0 // loop_footer
    %s16 = sadd.s32 1, %s12
  $region7: #{residual_block_pallas.4} parent=0 // loop_footer_branch
    %11 = sbr.rel target = $region3
  $region8: #{residual_block_pallas.4} parent=0 // loop_exit
    _

// kernel: residual_block_pallas.3
$region0: #{residual_block_pallas.3}
  #allocation0 [shape = 'u32[]', space=smem, size = 0x4, offset = 0x4, fixed_abs, tag = 'smem constant byte address 0x4 - core index']
  #allocation1 [shape = 'u32[72,128]{1,0:T(1,128)}', space=vmem, size = 0x9000, scoped, tag = 'internal scratch']
  #allocation2 [shape = 'f32[16,16,72]{2,1,0:T(8,128)}', space=vmem, size = 0x20000, scoped, tag = 'scratch operand']
  %s0 = inlined_call_operand.vmem [shape: f32[2,18,18,8], index: 0, kind: input, shape index: {}]
  %s1 = inlined_call_operand.vmem [shape: f32[72,8], index: 1, kind: input, shape index: {}]
  %s2 = inlined_call_operand.vmem [shape: f32[2,18,18,8], index: 2, kind: output, shape index: {0}]
  %s3 = inlined_call_operand.vmem [shape: f32[2,1,8], index: 3, kind: output, shape index: {1}]
  %s4 = inlined_call_operand.vmem [shape: f32[2,1,8], index: 4, kind: output, shape index: {2}]
  %5 = xla_tuple %s2, %s3, %s4
  %s6 = sld [smem:[#allocation0]]
  $region57: #{residual_block_pallas.3} parent=0
    _
  %s8 = ssub.s32 1, %s6
  %s9 = scalar_select 0, %s8, %s6
  loop: start=0, step=1, limit=4
  $region2: #{residual_block_pallas.3} parent=0 // loop_pre_header
    _
  $region3: #{residual_block_pallas.3} parent=0 // loop_header
    %s11 = sphi 0, %s15
    %p12 = scmp.ge.s32.totalorder %s11, 4
    %s21 = sphi 0, %s23
    %s24 = sphi 0, %s21
    %s25 = sphi 0, %s24
    %s41 = sphi 0, %s25
    %s45 = sphi 0, %s45
    %s47 = sphi 0, %s45
    %s48 = sphi 0, %s47
    %s62 = sphi 0, %s48
    %s68 = sphi 0, %s70
    %s71 = sphi 0, %s68
    %s72 = sphi 0, %s71
    %s88 = sphi 0, %s72
    %s94 = sphi 0, %s96
    %s97 = sphi 0, %s94
    %s98 = sphi 0, %s97
    %s114 = sphi 0, %s98
    %s120 = sphi 0, %s122
    %s123 = sphi 0, %s120
    %s124 = sphi 0, %s123
    %s140 = sphi 0, %s124
  $region4: #{residual_block_pallas.3} parent=0 // loop_header_branch
    %14 = sbr.rel (%p12) target = $region8
  $region5: #{residual_block_pallas.3} parent=0 // loop_body
    %s16 = ssub.s32 %s11, 1
    %s17 = ssub.s32 %s11, 2
    %s18 = sadd.s32 %s11, 1
    %s19 = ssub.s32 %s11, %s18
    %p20 = scmp.eq.s32.totalorder %s19, 0
    %s22 = sadd.s32 %s21, 1
    %s23 = scalar_select %p20, %s21, %s22
    %p26 = pneg %p20
    %p27 = scmp.eq.s32.totalorder %s11, 1
    %p28 = por %p26, %p27
    %p29 = scmp.ne.s32.totalorder %s21, %s24
    %p30 = scmp.eq.s32.totalorder %s11, 0
    %p31 = por %p29, %p30
    %p32 = scmp.ne.s32.totalorder %s21, %s24
    %p33 = scmp.eq.s32.totalorder %s16, 1
    %p34 = por %p32, %p33
    %p35 = scmp.ne.s32.totalorder %s24, %s25
    %p36 = scmp.eq.s32.totalorder %s16, 0
    %p37 = por %p35, %p36
    %p38 = scmp.ne.s32.totalorder %s24, %s25
    %p39 = scmp.eq.s32.totalorder %s17, 1
    %p40 = por %p38, %p39
    %p42 = scmp.ne.s32.totalorder %s25, %s41
    %p43 = scmp.eq.s32.totalorder %s17, 0
    %p44 = por %p42, %p43
    %s46 = sadd.s32 %s45, 1
    %p49 = scmp.eq.s32.totalorder %s11, 1
    %p50 = scmp.ne.s32.totalorder %s45, %s47
    %p51 = scmp.eq.s32.totalorder %s11, 0
    %p52 = por %p50, %p51
    %p53 = scmp.ne.s32.totalorder %s45, %s47
    %p54 = scmp.eq.s32.totalorder %s16, 1
    %p55 = por %p53, %p54
    %p56 = scmp.ne.s32.totalorder %s47, %s48
    %p57 = scmp.eq.s32.totalorder %s16, 0
    %p58 = por %p56, %p57
    %p59 = scmp.ne.s32.totalorder %s47, %s48
    %p60 = scmp.eq.s32.totalorder %s17, 1
    %p61 = por %p59, %p60
    %p63 = scmp.ne.s32.totalorder %s48, %s62
    %p64 = scmp.eq.s32.totalorder %s17, 0
    %p65 = por %p63, %p64
    %s66 = ssub.s32 %s11, %s18
    %p67 = scmp.eq.s32.totalorder %s66, 0
    %s69 = sadd.s32 %s68, 1
    %s70 = scalar_select %p67, %s68, %s69
    %p73 = pneg %p67
    %p74 = scmp.eq.s32.totalorder %s11, 1
    %p75 = por %p73, %p74
    %p76 = scmp.ne.s32.totalorder %s68, %s71
    %p77 = scmp.eq.s32.totalorder %s11, 0
    %p78 = por %p76, %p77
    %p79 = scmp.ne.s32.totalorder %s68, %s71
    %p80 = scmp.eq.s32.totalorder %s16, 1
    %p81 = por %p79, %p80
    %p82 = scmp.ne.s32.totalorder %s71, %s72
    %p83 = scmp.eq.s32.totalorder %s16, 0
    %p84 = por %p82, %p83
    %p85 = scmp.ne.s32.totalorder %s71, %s72
    %p86 = scmp.eq.s32.totalorder %s17, 1
    %p87 = por %p85, %p86
    %p89 = scmp.ne.s32.totalorder %s72, %s88
    %p90 = scmp.eq.s32.totalorder %s17, 0
    %p91 = por %p89, %p90
    %s92 = ssub.s32 %s11, %s18
    %p93 = scmp.eq.s32.totalorder %s92, 0
    %s95 = sadd.s32 %s94, 1
    %s96 = scalar_select %p93, %s94, %s95
    %p99 = pneg %p93
    %p100 = scmp.eq.s32.totalorder %s11, 1
    %p101 = por %p99, %p100
    %p102 = scmp.ne.s32.totalorder %s94, %s97
    %p103 = scmp.eq.s32.totalorder %s11, 0
    %p104 = por %p102, %p103
    %p105 = scmp.ne.s32.totalorder %s94, %s97
    %p106 = scmp.eq.s32.totalorder %s16, 1
    %p107 = por %p105, %p106
    %p108 = scmp.ne.s32.totalorder %s97, %s98
    %p109 = scmp.eq.s32.totalorder %s16, 0
    %p110 = por %p108, %p109
    %p111 = scmp.ne.s32.totalorder %s97, %s98
    %p112 = scmp.eq.s32.totalorder %s17, 1
    %p113 = por %p111, %p112
    %p115 = scmp.ne.s32.totalorder %s98, %s114
    %p116 = scmp.eq.s32.totalorder %s17, 0
    %p117 = por %p115, %p116
    %s118 = ssub.s32 %s11, %s18
    %p119 = scmp.eq.s32.totalorder %s118, 0
    %s121 = sadd.s32 %s120, 1
    %s122 = scalar_select %p119, %s120, %s121
    %p125 = pneg %p119
    %p126 = scmp.eq.s32.totalorder %s11, 1
    %p127 = por %p125, %p126
    %p128 = scmp.ne.s32.totalorder %s120, %s123
    %p129 = scmp.eq.s32.totalorder %s11, 0
    %p130 = por %p128, %p129
    %p131 = scmp.ne.s32.totalorder %s120, %s123
    %p132 = scmp.eq.s32.totalorder %s16, 1
    %p133 = por %p131, %p132
    %p134 = scmp.ne.s32.totalorder %s123, %s124
    %p135 = scmp.eq.s32.totalorder %s16, 0
    %p136 = por %p134, %p135
    %p137 = scmp.ne.s32.totalorder %s123, %s124
    %p138 = scmp.eq.s32.totalorder %s17, 1
    %p139 = por %p137, %p138
    %p141 = scmp.ne.s32.totalorder %s124, %s140
    %p142 = scmp.eq.s32.totalorder %s17, 0
    %p143 = por %p141, %p142
    %p144 = scmp.le.s32.totalorder 1, %s11
    %p145 = scmp.lt.s32.totalorder %s11, 3
    %p146 = pnand %p144, %p145
    %p147 = pneg %p146
    // Predicated region
    $region9: #{residual_block_pallas.3} parent=5 // pred_check
      _
    $region10: #{residual_block_pallas.3} parent=5 // pred_check_branch
      %149 = sbr.rel (%p146) target = $region12
    $region11: #{residual_block_pallas.3} parent=5 // pred_region
      %s150 = ssub.s32 %s11, 1
      // Predicated region
      $region13: #{residual_block_pallas.3} parent=11 // pred_check
        %p151 = pneg %p58
      $region14: #{residual_block_pallas.3} parent=11 // pred_check_branch
        %153 = sbr.rel (%p151) target = $region16
      $region15: #{residual_block_pallas.3} parent=11 // pred_region
        _
      $region16: #{residual_block_pallas.3} parent=11 // pred_fallthru
        _
    $region12: #{residual_block_pallas.3} parent=5 // pred_fallthru
      _
    %p154 = scmp.lt.s32.totalorder %s11, 2
    // Predicated region
    $region17: #{residual_block_pallas.3} parent=5 // pred_check
      %p155 = pneg %p154
    $region18: #{residual_block_pallas.3} parent=5 // pred_check_branch
      %157 = sbr.rel (%p155) target = $region20
    $region19: #{residual_block_pallas.3} parent=5 // pred_region
      // Predicated region
      $region21: #{residual_block_pallas.3} parent=19 // pred_check
        %p158 = pneg %p31
      $region22: #{residual_block_pallas.3} parent=19 // pred_check_branch
        %160 = sbr.rel (%p158) target = $region24
      $region23: #{residual_block_pallas.3} parent=19 // pred_region
        %p161 = scmp.lt.s32.totalorder %s11, 1
        %s162 = scalar_select %p161, %s11, 1
        %s163 = smul.addr %s162, 54
        %s164 = smul.addr %s163, 8
        %s165 = scalar_lea.vmem %s0, %s164
      $region24: #{residual_block_pallas.3} parent=19 // pred_fallthru
        _
    $region20: #{residual_block_pallas.3} parent=5 // pred_fallthru
      _
    %p166 = scmp.le.s32.totalorder 1, %s11
    %p167 = scmp.lt.s32.totalorder %s11, 3
    %p168 = pnand %p166, %p167
    %p169 = pneg %p168
    // Predicated region
    $region25: #{residual_block_pallas.3} parent=5 // pred_check
      _
    $region26: #{residual_block_pallas.3} parent=5 // pred_check_branch
      %171 = sbr.rel (%p168) target = $region28
    $region27: #{residual_block_pallas.3} parent=5 // pred_region
      %s172 = ssub.s32 %s11, 1
      %p173 = scmp.lt.s32.totalorder %s16, 1
      %s174 = scalar_select %p173, %s16, 1
      %s175 = smul.addr %s174, 54
      %s176 = smul.addr %s175, 8
      %s177 = scalar_lea.vmem %s0, %s176
      %p178 = pneg %p37
      %p179 = pneg %p34
      %p180 = pneg %p58
      %p181 = pneg %p55
      %p182 = pneg %p84
      %p183 = pneg %p81
      %p184 = scmp.lt.s32.totalorder %s16, 1
      %s185 = scalar_select %p184, %s16, 1
      %s186 = smul.addr %s185, 54
      %s187 = smul.addr %s186, 8
      %s188 = scalar_lea.vmem %s2, %s187
      %p189 = pneg %p110
      %p190 = pneg %p107
      %p191 = scmp.lt.s32.totalorder %s16, 1
      %s192 = scalar_select %p191, %s16, 1
      %s193 = scalar_lea.vmem %s3, %s192
      %p194 = pneg %p136
      %p195 = pneg %p133
      %p196 = scmp.lt.s32.totalorder %s16, 1
      %s197 = scalar_select %p196, %s16, 1
      %s198 = scalar_lea.vmem %s4, %s197
      %p199 = scmp.lt.s32.totalorder %s16, 1
      %s200 = scalar_select %p199, %s16, 1
      %s201 = smul.addr %s200, 54
      %s202 = smul.addr %s201, 8
      %s203 = scalar_lea.vmem %s0, %s202
      %p204 = scmp.lt.s32.totalorder %s16, 1
      %s205 = scalar_select %p204, %s16, 1
      %s206 = smul.addr %s205, 54
      %s207 = smul.addr %s206, 8
      %s208 = scalar_lea.vmem %s2, %s207
      %p209 = scmp.lt.s32.totalorder %s16, 1
      %s210 = scalar_select %p209, %s16, 1
      %s211 = scalar_lea.vmem %s3, %s210
      %p212 = scmp.lt.s32.totalorder %s16, 1
      %s213 = scalar_select %p212, %s16, 1
      %s214 = scalar_lea.vmem %s4, %s213
      %v215 = vld [vmem:[%s1] sm:$0xff]
      %v216 = vld [vmem:[%s1 + $0x8] sm:$0xff]
      %v217 = vld [vmem:[%s1 + $0x10] sm:$0xff]
      %v218 = vld [vmem:[%s1 + $0x18] sm:$0xff]
      %v219 = vld [vmem:[%s1 + $0x20] sm:$0xff]
      %v220 = vld [vmem:[%s1 + $0x28] sm:$0xff]
      %v221 = vld [vmem:[%s1 + $0x30] sm:$0xff]
      %v222 = vld [vmem:[%s1 + $0x38] sm:$0xff]
      %v223 = vld [vmem:[%s1 + $0x40] sm:$0xff]
      %vm224 = vcmask 64512
      %225 = vst.msk [vmem:[%s208] sm:$0xff] %vm224, 0.0
      %226 = vst.msk [vmem:[%s208 + $0x8] sm:$0xff] %vm224, 0.0
      %vm227 = vcmask 58368
      %228 = vst.msk [vmem:[%s208 + $0x10] sm:$0x3] %vm227, 0.0
      %s229 = scalar_lea.vmem %s208, 408
      %230 = vst.msk [vmem:[%s229] sm:$0xff] %vm224, 0.0
      %231 = vst.msk [vmem:[%s229 + $0x8] sm:$0xff] %vm224, 0.0
      %232 = vst.msk [vmem:[%s229 + $0x10] sm:$0x3] %vm227, 0.0
      %vm233 = vcmask 57344
      %234 = vst.msk [vmem:[%s208] sm:$0x1] %vm233, 0.0
      %235 = vst.msk [vmem:[%s208 + $0x18] sm:$0x1] %vm233, 0.0
      %236 = vst.msk [vmem:[%s208 + $0x30] sm:$0x1] %vm233, 0.0
      %237 = vst.msk [vmem:[%s208 + $0x48] sm:$0x1] %vm233, 0.0
      %238 = vst.msk [vmem:[%s208 + $0x60] sm:$0x1] %vm233, 0.0
      %239 = vst.msk [vmem:[%s208 + $0x78] sm:$0x1] %vm233, 0.0
      %240 = vst.msk [vmem:[%s208 + $0x90] sm:$0x1] %vm233, 0.0
      %241 = vst.msk [vmem:[%s208 + $0xa8] sm:$0x1] %vm233, 0.0
      %242 = vst.msk [vmem:[%s208 + $0xc0] sm:$0x1] %vm233, 0.0
      %243 = vst.msk [vmem:[%s208 + $0xd8] sm:$0x1] %vm233, 0.0
      %244 = vst.msk [vmem:[%s208 + $0xf0] sm:$0x1] %vm233, 0.0
      %245 = vst.msk [vmem:[%s208 + $0x108] sm:$0x1] %vm233, 0.0
      %246 = vst.msk [vmem:[%s208 + $0x120] sm:$0x1] %vm233, 0.0
      %247 = vst.msk [vmem:[%s208 + $0x138] sm:$0x1] %vm233, 0.0
      %248 = vst.msk [vmem:[%s208 + $0x150] sm:$0x1] %vm233, 0.0
      %249 = vst.msk [vmem:[%s208 + $0x168] sm:$0x1] %vm233, 0.0
      %250 = vst.msk [vmem:[%s208 + $0x180] sm:$0x1] %vm233, 0.0
      %251 = vst.msk [vmem:[%s208 + $0x198] sm:$0x1] %vm233, 0.0
      %252 = vst.msk [vmem:[%s208 + $0x11] sm:$0x1] %vm233, 0.0
      %253 = vst.msk [vmem:[%s208 + $0x29] sm:$0x1] %vm233, 0.0
      %254 = vst.msk [vmem:[%s208 + $0x41] sm:$0x1] %vm233, 0.0
      %255 = vst.msk [vmem:[%s208 + $0x59] sm:$0x1] %vm233, 0.0
      %256 = vst.msk [vmem:[%s208 + $0x71] sm:$0x1] %vm233, 0.0
      %257 = vst.msk [vmem:[%s208 + $0x89] sm:$0x1] %vm233, 0.0
      %258 = vst.msk [vmem:[%s208 + $0xa1] sm:$0x1] %vm233, 0.0
      %259 = vst.msk [vmem:[%s208 + $0xb9] sm:$0x1] %vm233, 0.0
      %260 = vst.msk [vmem:[%s208 + $0xd1] sm:$0x1] %vm233, 0.0
      %261 = vst.msk [vmem:[%s208 + $0xe9] sm:$0x1] %vm233, 0.0
      %262 = vst.msk [vmem:[%s208 + $0x101] sm:$0x1] %vm233, 0.0
      %263 = vst.msk [vmem:[%s208 + $0x119] sm:$0x1] %vm233, 0.0
      %264 = vst.msk [vmem:[%s208 + $0x131] sm:$0x1] %vm233, 0.0
      %265 = vst.msk [vmem:[%s208 + $0x149] sm:$0x1] %vm233, 0.0
      %266 = vst.msk [vmem:[%s208 + $0x161] sm:$0x1] %vm233, 0.0
      %267 = vst.msk [vmem:[%s208 + $0x179] sm:$0x1] %vm233, 0.0
      %268 = vst.msk [vmem:[%s208 + $0x191] sm:$0x1] %vm233, 0.0
      %269 = vst.msk [vmem:[%s208 + $0x1a9] sm:$0x1] %vm233, 0.0
      %v270 = vld [vmem:[%s203] sm:$0xff]
      %v271 = vld [vmem:[%s203 + $0x8] sm:$0xff]
      %v272 = vld [vmem:[%s203 + $0x18] sm:$0xff]
      %v273 = vld [vmem:[%s203 + $0x20] sm:$0xff]
      %v274 = vld [vmem:[%s203 + $0x30] sm:$0xff]
      %v275 = vld [vmem:[%s203 + $0x38] sm:$0xff]
      %v276 = vld [vmem:[%s203 + $0x48] sm:$0xff]
      %v277 = vld [vmem:[%s203 + $0x50] sm:$0xff]
      %v278 = vld [vmem:[%s203 + $0x60] sm:$0xff]
      %v279 = vld [vmem:[%s203 + $0x68] sm:$0xff]
      %v280 = vld [vmem:[%s203 + $0x78] sm:$0xff]
      %v281 = vld [vmem:[%s203 + $0x80] sm:$0xff]
      %v282 = vld [vmem:[%s203 + $0x90] sm:$0xff]
      %v283 = vld [vmem:[%s203 + $0x98] sm:$0xff]
      %v284 = vld [vmem:[%s203 + $0xa8] sm:$0xff]
      %v285 = vld [vmem:[%s203 + $0xb0] sm:$0xff]
      %v286 = vld [vmem:[%s203 + $0xc0] sm:$0xff]
      %v287 = vld [vmem:[%s203 + $0xc8] sm:$0xff]
      %v288 = vld [vmem:[%s203 + $0xd8] sm:$0xff]
      %v289 = vld [vmem:[%s203 + $0xe0] sm:$0xff]
      %v290 = vld [vmem:[%s203 + $0xf0] sm:$0xff]
      %v291 = vld [vmem:[%s203 + $0xf8] sm:$0xff]
      %v292 = vld [vmem:[%s203 + $0x108] sm:$0xff]
      %v293 = vld [vmem:[%s203 + $0x110] sm:$0xff]
      %v294 = vld [vmem:[%s203 + $0x120] sm:$0xff]
      %v295 = vld [vmem:[%s203 + $0x128] sm:$0xff]
      %v296 = vld [vmem:[%s203 + $0x138] sm:$0xff]
      %v297 = vld [vmem:[%s203 + $0x140] sm:$0xff]
      %v298 = vld [vmem:[%s203 + $0x150] sm:$0xff]
      %v299 = vld [vmem:[%s203 + $0x158] sm:$0xff]
      %v300 = vld [vmem:[%s203 + $0x168] sm:$0xff]
      %v301 = vld [vmem:[%s203 + $0x170] sm:$0xff]
      %302 = vst.msk [vmem:[#allocation2] sm:$0xff] %vm224, %v270
      %303 = vst.msk [vmem:[#allocation2 + $0x8] sm:$0xff] %vm224, %v271
      %304 = vst.msk [vmem:[#allocation2 + $0x10] sm:$0xff] %vm224, %v272
      %305 = vst.msk [vmem:[#allocation2 + $0x18] sm:$0xff] %vm224, %v273
      %306 = vst.msk [vmem:[#allocation2 + $0x20] sm:$0xff] %vm224, %v274
      %307 = vst.msk [vmem:[#allocation2 + $0x28] sm:$0xff] %vm224, %v275
      %308 = vst.msk [vmem:[#allocation2 + $0x30] sm:$0xff] %vm224, %v276
      %309 = vst.msk [vmem:[#allocation2 + $0x38] sm:$0xff] %vm224, %v277
      %310 = vst.msk [vmem:[#allocation2 + $0x40] sm:$0xff] %vm224, %v278
      %311 = vst.msk [vmem:[#allocation2 + $0x48] sm:$0xff] %vm224, %v279
      %312 = vst.msk [vmem:[#allocation2 + $0x50] sm:$0xff] %vm224, %v280
      %313 = vst.msk [vmem:[#allocation2 + $0x58] sm:$0xff] %vm224, %v281
      %314 = vst.msk [vmem:[#allocation2 + $0x60] sm:$0xff] %vm224, %v282
      %315 = vst.msk [vmem:[#allocation2 + $0x68] sm:$0xff] %vm224, %v283
      %316 = vst.msk [vmem:[#allocation2 + $0x70] sm:$0xff] %vm224, %v284
      %317 = vst.msk [vmem:[#allocation2 + $0x78] sm:$0xff] %vm224, %v285
      %318 = vst.msk [vmem:[#allocation2 + $0x80] sm:$0xff] %vm224, %v286
      %319 = vst.msk [vmem:[#allocation2 + $0x88] sm:$0xff] %vm224, %v287
      %320 = vst.msk [vmem:[#allocation2 + $0x90] sm:$0xff] %vm224, %v288
      %321 = vst.msk [vmem:[#allocation2 + $0x98] sm:$0xff] %vm224, %v289
      %322 = vst.msk [vmem:[#allocation2 + $0xa0] sm:$0xff] %vm224, %v290
      %323 = vst.msk [vmem:[#allocation2 + $0xa8] sm:$0xff] %vm224, %v291
      %324 = vst.msk [vmem:[#allocation2 + $0xb0] sm:$0xff] %vm224, %v292
      %325 = vst.msk [vmem:[#allocation2 + $0xb8] sm:$0xff] %vm224, %v293
      %326 = vst.msk [vmem:[#allocation2 + $0xc0] sm:$0xff] %vm224, %v294
      %327 = vst.msk [vmem:[#allocation2 + $0xc8] sm:$0xff] %vm224, %v295
      %328 = vst.msk [vmem:[#allocation2 + $0xd0] sm:$0xff] %vm224, %v296
      %329 = vst.msk [vmem:[#allocation2 + $0xd8] sm:$0xff] %vm224, %v297
      %330 = vst.msk [vmem:[#allocation2 + $0xe0] sm:$0xff] %vm224, %v298
      %331 = vst.msk [vmem:[#allocation2 + $0xe8] sm:$0xff] %vm224, %v299
      %332 = vst.msk [vmem:[#allocation2 + $0xf0] sm:$0xff] %vm224, %v300
      %333 = vst.msk [vmem:[#allocation2 + $0xf8] sm:$0xff] %vm224, %v301
      %v334 = vld [vmem:[%s203 + $0x1] sm:$0xff]
      %v335 = vld [vmem:[%s203 + $0x9] sm:$0xff]
      %v336 = vld [vmem:[%s203 + $0x19] sm:$0xff]
      %v337 = vld [vmem:[%s203 + $0x21] sm:$0xff]
      %v338 = vld [vmem:[%s203 + $0x31] sm:$0xff]
      %v339 = vld [vmem:[%s203 + $0x39] sm:$0xff]
      %v340 = vld [vmem:[%s203 + $0x49] sm:$0xff]
      %v341 = vld [vmem:[%s203 + $0x51] sm:$0xff]
      %v342 = vld [vmem:[%s203 + $0x61] sm:$0xff]
      %v343 = vld [vmem:[%s203 + $0x69] sm:$0xff]
      %v344 = vld [vmem:[%s203 + $0x79] sm:$0xff]
      %v345 = vld [vmem:[%s203 + $0x81] sm:$0xff]
      %v346 = vld [vmem:[%s203 + $0x91] sm:$0xff]
      %v347 = vld [vmem:[%s203 + $0x99] sm:$0xff]
      %v348 = vld [vmem:[%s203 + $0xa9] sm:$0xff]
      %v349 = vld [vmem:[%s203 + $0xb1] sm:$0xff]
      %v350 = vld [vmem:[%s203 + $0xc1] sm:$0xff]
      %v351 = vld [vmem:[%s203 + $0xc9] sm:$0xff]
      %v352 = vld [vmem:[%s203 + $0xd9] sm:$0xff]
      %v353 = vld [vmem:[%s203 + $0xe1] sm:$0xff]
      %v354 = vld [vmem:[%s203 + $0xf1] sm:$0xff]
      %v355 = vld [vmem:[%s203 + $0xf9] sm:$0xff]
      %v356 = vld [vmem:[%s203 + $0x109] sm:$0xff]
      %v357 = vld [vmem:[%s203 + $0x111] sm:$0xff]
      %v358 = vld [vmem:[%s203 + $0x121] sm:$0xff]
      %v359 = vld [vmem:[%s203 + $0x129] sm:$0xff]
      %v360 = vld [vmem:[%s203 + $0x139] sm:$0xff]
      %v361 = vld [vmem:[%s203 + $0x141] sm:$0xff]
      %v362 = vld [vmem:[%s203 + $0x151] sm:$0xff]
      %v363 = vld [vmem:[%s203 + $0x159] sm:$0xff]
      %v364 = vld [vmem:[%s203 + $0x169] sm:$0xff]
      %v365 = vld [vmem:[%s203 + $0x171] sm:$0xff]
      %398 = vrot.lane.b32.xlu0 %v334, 8
      %v399 = vpop.permute.xlu0 %398
      %400 = vrot.lane.b32.xlu0 %v335, 8
      %v401 = vpop.permute.xlu0 %400
      %402 = vrot.lane.b32.xlu0 %v336, 8
      %v403 = vpop.permute.xlu0 %402
      %404 = vrot.lane.b32.xlu0 %v337, 8
      %v405 = vpop.permute.xlu0 %404
      %406 = vrot.lane.b32.xlu0 %v338, 8
      %v407 = vpop.permute.xlu0 %406
      %408 = vrot.lane.b32.xlu0 %v339, 8
      %v409 = vpop.permute.xlu0 %408
      %410 = vrot.lane.b32.xlu0 %v340, 8
      %v411 = vpop.permute.xlu0 %410
      %412 = vrot.lane.b32.xlu0 %v341, 8
      %v413 = vpop.permute.xlu0 %412
      %414 = vrot.lane.b32.xlu0 %v342, 8
      %v415 = vpop.permute.xlu0 %414
      %416 = vrot.lane.b32.xlu0 %v343, 8
      %v417 = vpop.permute.xlu0 %416
      %418 = vrot.lane.b32.xlu0 %v344, 8
      %v419 = vpop.permute.xlu0 %418
      %420 = vrot.lane.b32.xlu0 %v345, 8
      %v421 = vpop.permute.xlu0 %420
      %422 = vrot.lane.b32.xlu0 %v346, 8
      %v423 = vpop.permute.xlu0 %422
      %424 = vrot.lane.b32.xlu0 %v347, 8
      %v425 = vpop.permute.xlu0 %424
      %426 = vrot.lane.b32.xlu0 %v348, 8
      %v427 = vpop.permute.xlu0 %426
      %428 = vrot.lane.b32.xlu0 %v349, 8
      %v429 = vpop.permute.xlu0 %428
      %430 = vrot.lane.b32.xlu0 %v350, 8
      %v431 = vpop.permute.xlu0 %430
      %432 = vrot.lane.b32.xlu0 %v351, 8
      %v433 = vpop.permute.xlu0 %432
      %434 = vrot.lane.b32.xlu0 %v352, 8
      %v435 = vpop.permute.xlu0 %434
      %436 = vrot.lane.b32.xlu0 %v353, 8
      %v437 = vpop.permute.xlu0 %436
      %438 = vrot.lane.b32.xlu0 %v354, 8
      %v439 = vpop.permute.xlu0 %438
      %440 = vrot.lane.b32.xlu0 %v355, 8
      %v441 = vpop.permute.xlu0 %440
      %442 = vrot.lane.b32.xlu0 %v356, 8
      %v443 = vpop.permute.xlu0 %442
      %444 = vrot.lane.b32.xlu0 %v357, 8
      %v445 = vpop.permute.xlu0 %444
      %446 = vrot.lane.b32.xlu0 %v358, 8
      %v447 = vpop.permute.xlu0 %446
      %448 = vrot.lane.b32.xlu0 %v359, 8
      %v449 = vpop.permute.xlu0 %448
      %450 = vrot.lane.b32.xlu0 %v360, 8
      %v451 = vpop.permute.xlu0 %450
      %452 = vrot.lane.b32.xlu0 %v361, 8
      %v453 = vpop.permute.xlu0 %452
      %454 = vrot.lane.b32.xlu0 %v362, 8
      %v455 = vpop.permute.xlu0 %454
      %456 = vrot.lane.b32.xlu0 %v363, 8
      %v457 = vpop.permute.xlu0 %456
      %458 = vrot.lane.b32.xlu0 %v364, 8
      %v459 = vpop.permute.xlu0 %458
      %460 = vrot.lane.b32.xlu0 %v365, 8
      %v461 = vpop.permute.xlu0 %460
      %vm494 = vcmask 130112
      %495 = vst.msk [vmem:[#allocation2] sm:$0xff] %vm494, %v399
      %496 = vst.msk [vmem:[#allocation2 + $0x8] sm:$0xff] %vm494, %v401
      %497 = vst.msk [vmem:[#allocation2 + $0x10] sm:$0xff] %vm494, %v403
      %498 = vst.msk [vmem:[#allocation2 + $0x18] sm:$0xff] %vm494, %v405
      %499 = vst.msk [vmem:[#allocation2 + $0x20] sm:$0xff] %vm494, %v407
      %500 = vst.msk [vmem:[#allocation2 + $0x28] sm:$0xff] %vm494, %v409
      %501 = vst.msk [vmem:[#allocation2 + $0x30] sm:$0xff] %vm494, %v411
      %502 = vst.msk [vmem:[#allocation2 + $0x38] sm:$0xff] %vm494, %v413
      %503 = vst.msk [vmem:[#allocation2 + $0x40] sm:$0xff] %vm494, %v415
      %504 = vst.msk [vmem:[#allocation2 + $0x48] sm:$0xff] %vm494, %v417
      %505 = vst.msk [vmem:[#allocation2 + $0x50] sm:$0xff] %vm494, %v419
      %506 = vst.msk [vmem:[#allocation2 + $0x58] sm:$0xff] %vm494, %v421
      %507 = vst.msk [vmem:[#allocation2 + $0x60] sm:$0xff] %vm494, %v423
      %508 = vst.msk [vmem:[#allocation2 + $0x68] sm:$0xff] %vm494, %v425
      %509 = vst.msk [vmem:[#allocation2 + $0x70] sm:$0xff] %vm494, %v427
      %510 = vst.msk [vmem:[#allocation2 + $0x78] sm:$0xff] %vm494, %v429
      %511 = vst.msk [vmem:[#allocation2 + $0x80] sm:$0xff] %vm494, %v431
      %512 = vst.msk [vmem:[#allocation2 + $0x88] sm:$0xff] %vm494, %v433
      %513 = vst.msk [vmem:[#allocation2 + $0x90] sm:$0xff] %vm494, %v435
      %514 = vst.msk [vmem:[#allocation2 + $0x98] sm:$0xff] %vm494, %v437
      %515 = vst.msk [vmem:[#allocation2 + $0xa0] sm:$0xff] %vm494, %v439
      %516 = vst.msk [vmem:[#allocation2 + $0xa8] sm:$0xff] %vm494, %v441
      %517 = vst.msk [vmem:[#allocation2 + $0xb0] sm:$0xff] %vm494, %v443
      %518 = vst.msk [vmem:[#allocation2 + $0xb8] sm:$0xff] %vm494, %v445
      %519 = vst.msk [vmem:[#allocation2 + $0xc0] sm:$0xff] %vm494, %v447
      %520 = vst.msk [vmem:[#allocation2 + $0xc8] sm:$0xff] %vm494, %v449
      %521 = vst.msk [vmem:[#allocation2 + $0xd0] sm:$0xff] %vm494, %v451
      %522 = vst.msk [vmem:[#allocation2 + $0xd8] sm:$0xff] %vm494, %v453
      %523 = vst.msk [vmem:[#allocation2 + $0xe0] sm:$0xff] %vm494, %v455
      %524 = vst.msk [vmem:[#allocation2 + $0xe8] sm:$0xff] %vm494, %v457
      %525 = vst.msk [vmem:[#allocation2 + $0xf0] sm:$0xff] %vm494, %v459
      %526 = vst.msk [vmem:[#allocation2 + $0xf8] sm:$0xff] %vm494, %v461
      %v527 = vld [vmem:[%s203 + $0x2] sm:$0xff]
      %v528 = vld [vmem:[%s203 + $0xa] sm:$0xff]
      %v529 = vld [vmem:[%s203 + $0x1a] sm:$0xff]
      %v530 = vld [vmem:[%s203 + $0x22] sm:$0xff]
      %v531 = vld [vmem:[%s203 + $0x32] sm:$0xff]
      %v532 = vld [vmem:[%s203 + $0x3a] sm:$0xff]
      %v533 = vld [vmem:[%s203 + $0x4a] sm:$0xff]
      %v534 = vld [vmem:[%s203 + $0x52] sm:$0xff]
      %v535 = vld [vmem:[%s203 + $0x62] sm:$0xff]
      %v536 = vld [vmem:[%s203 + $0x6a] sm:$0xff]
      %v537 = vld [vmem:[%s203 + $0x7a] sm:$0xff]
      %v538 = vld [vmem:[%s203 + $0x82] sm:$0xff]
      %v539 = vld [vmem:[%s203 + $0x92] sm:$0xff]
      %v540 = vld [vmem:[%s203 + $0x9a] sm:$0xff]
      %v541 = vld [vmem:[%s203 + $0xaa] sm:$0xff]
      %v542 = vld [vmem:[%s203 + $0xb2] sm:$0xff]
      %v543 = vld [vmem:[%s203 + $0xc2] sm:$0xff]
      %v544 = vld [vmem:[%s203 + $0xca] sm:$0xff]
      %v545 = vld [vmem:[%s203 + $0xda] sm:$0xff]
      %v546 = vld [vmem:[%s203 + $0xe2] sm:$0xff]
      %v547 = vld [vmem:[%s203 + $0xf2] sm:$0xff]
      %v548 = vld [vmem:[%s203 + $0xfa] sm:$0xff]
      %v549 = vld [vmem:[%s203 + $0x10a] sm:$0xff]
      %v550 = vld [vmem:[%s203 + $0x112] sm:$0xff]
      %v551 = vld [vmem:[%s203 + $0x122] sm:$0xff]
      %v552 = vld [vmem:[%s203 + $0x12a] sm:$0xff]
      %v553 = vld [vmem:[%s203 + $0x13a] sm:$0xff]
      %v554 = vld [vmem:[%s203 + $0x142] sm:$0xff]
      %v555 = vld [vmem:[%s203 + $0x152] sm:$0xff]
      %v556 = vld [vmem:[%s203 + $0x15a] sm:$0xff]
      %v557 = vld [vmem:[%s203 + $0x16a] sm:$0xff]
      %v558 = vld [vmem:[%s203 + $0x172] sm:$0xff]
      %591 = vrot.lane.b32.xlu0 %v527, 16
      %v592 = vpop.permute.xlu0 %591
      %593 = vrot.lane.b32.xlu0 %v528, 16
      %v594 = vpop.permute.xlu0 %593
      %595 = vrot.lane.b32.xlu0 %v529, 16
      %v596 = vpop.permute.xlu0 %595
      %597 = vrot.lane.b32.xlu0 %v530, 16
      %v598 = vpop.permute.xlu0 %597
      %599 = vrot.lane.b32.xlu0 %v531, 16
      %v600 = vpop.permute.xlu0 %599
      %601 = vrot.lane.b32.xlu0 %v532, 16
      %v602 = vpop.permute.xlu0 %601
      %603 = vrot.lane.b32.xlu0 %v533, 16
      %v604 = vpop.permute.xlu0 %603
      %605 = vrot.lane.b32.xlu0 %v534, 16
      %v606 = vpop.permute.xlu0 %605
      %607 = vrot.lane.b32.xlu0 %v535, 16
      %v608 = vpop.permute.xlu0 %607
      %609 = vrot.lane.b32.xlu0 %v536, 16
      %v610 = vpop.permute.xlu0 %609
      %611 = vrot.lane.b32.xlu0 %v537, 16
      %v612 = vpop.permute.xlu0 %611
      %613 = vrot.lane.b32.xlu0 %v538, 16
      %v614 = vpop.permute.xlu0 %613
      %615 = vrot.lane.b32.xlu0 %v539, 16
      %v616 = vpop.permute.xlu0 %615
      %617 = vrot.lane.b32.xlu0 %v540, 16
      %v618 = vpop.permute.xlu0 %617
      %619 = vrot.lane.b32.xlu0 %v541, 16
      %v620 = vpop.permute.xlu0 %619
      %621 = vrot.lane.b32.xlu0 %v542, 16
      %v622 = vpop.permute.xlu0 %621
      %623 = vrot.lane.b32.xlu0 %v543, 16
      %v624 = vpop.permute.xlu0 %623
      %625 = vrot.lane.b32.xlu0 %v544, 16
      %v626 = vpop.permute.xlu0 %625
      %627 = vrot.lane.b32.xlu0 %v545, 16
      %v628 = vpop.permute.xlu0 %627
      %629 = vrot.lane.b32.xlu0 %v546, 16
      %v630 = vpop.permute.xlu0 %629
      %631 = vrot.lane.b32.xlu0 %v547, 16
      %v632 = vpop.permute.xlu0 %631
      %633 = vrot.lane.b32.xlu0 %v548, 16
      %v634 = vpop.permute.xlu0 %633
      %635 = vrot.lane.b32.xlu0 %v549, 16
      %v636 = vpop.permute.xlu0 %635
      %637 = vrot.lane.b32.xlu0 %v550, 16
      %v638 = vpop.permute.xlu0 %637
      %639 = vrot.lane.b32.xlu0 %v551, 16
      %v640 = vpop.permute.xlu0 %639
      %641 = vrot.lane.b32.xlu0 %v552, 16
      %v642 = vpop.permute.xlu0 %641
      %643 = vrot.lane.b32.xlu0 %v553, 16
      %v644 = vpop.permute.xlu0 %643
      %645 = vrot.lane.b32.xlu0 %v554, 16
      %v646 = vpop.permute.xlu0 %645
      %647 = vrot.lane.b32.xlu0 %v555, 16
      %v648 = vpop.permute.xlu0 %647
      %649 = vrot.lane.b32.xlu0 %v556, 16
      %v650 = vpop.permute.xlu0 %649
      %651 = vrot.lane.b32.xlu0 %v557, 16
      %v652 = vpop.permute.xlu0 %651
      %653 = vrot.lane.b32.xlu0 %v558, 16
      %v654 = vpop.permute.xlu0 %653
      %vm687 = vcmask 195712
      %688 = vst.msk [vmem:[#allocation2] sm:$0xff] %vm687, %v592
      %689 = vst.msk [vmem:[#allocation2 + $0x8] sm:$0xff] %vm687, %v594
      %690 = vst.msk [vmem:[#allocation2 + $0x10] sm:$0xff] %vm687, %v596
      %691 = vst.msk [vmem:[#allocation2 + $0x18] sm:$0xff] %vm687, %v598
      %692 = vst.msk [vmem:[#allocation2 + $0x20] sm:$0xff] %vm687, %v600
      %693 = vst.msk [vmem:[#allocation2 + $0x28] sm:$0xff] %vm687, %v602
      %694 = vst.msk [vmem:[#allocation2 + $0x30] sm:$0xff] %vm687, %v604
      %695 = vst.msk [vmem:[#allocation2 + $0x38] sm:$0xff] %vm687, %v606
      %696 = vst.msk [vmem:[#allocation2 + $0x40] sm:$0xff] %vm687, %v608
      %697 = vst.msk [vmem:[#allocation2 + $0x48] sm:$0xff] %vm687, %v610
      %698 = vst.msk [vmem:[#allocation2 + $0x50] sm:$0xff] %vm687, %v612
      %699 = vst.msk [vmem:[#allocation2 + $0x58] sm:$0xff] %vm687, %v614
      %700 = vst.msk [vmem:[#allocation2 + $0x60] sm:$0xff] %vm687, %v616
      %701 = vst.msk [vmem:[#allocation2 + $0x68] sm:$0xff] %vm687, %v618
      %702 = vst.msk [vmem:[#allocation2 + $0x70] sm:$0xff] %vm687, %v620
      %703 = vst.msk [vmem:[#allocation2 + $0x78] sm:$0xff] %vm687, %v622
      %704 = vst.msk [vmem:[#allocation2 + $0x80] sm:$0xff] %vm687, %v624
      %705 = vst.msk [vmem:[#allocation2 + $0x88] sm:$0xff] %vm687, %v626
      %706 = vst.msk [vmem:[#allocation2 + $0x90] sm:$0xff] %vm687, %v628
      %707 = vst.msk [vmem:[#allocation2 + $0x98] sm:$0xff] %vm687, %v630
      %708 = vst.msk [vmem:[#allocation2 + $0xa0] sm:$0xff] %vm687, %v632
      %709 = vst.msk [vmem:[#allocation2 + $0xa8] sm:$0xff] %vm687, %v634
      %710 = vst.msk [vmem:[#allocation2 + $0xb0] sm:$0xff] %vm687, %v636
      %711 = vst.msk [vmem:[#allocation2 + $0xb8] sm:$0xff] %vm687, %v638
      %712 = vst.msk [vmem:[#allocation2 + $0xc0] sm:$0xff] %vm687, %v640
      %713 = vst.msk [vmem:[#allocation2 + $0xc8] sm:$0xff] %vm687, %v642
      %714 = vst.msk [vmem:[#allocation2 + $0xd0] sm:$0xff] %vm687, %v644
      %715 = vst.msk [vmem:[#allocation2 + $0xd8] sm:$0xff] %vm687, %v646
      %716 = vst.msk [vmem:[#allocation2 + $0xe0] sm:$0xff] %vm687, %v648
      %717 = vst.msk [vmem:[#allocation2 + $0xe8] sm:$0xff] %vm687, %v650
      %718 = vst.msk [vmem:[#allocation2 + $0xf0] sm:$0xff] %vm687, %v652
      %719 = vst.msk [vmem:[#allocation2 + $0xf8] sm:$0xff] %vm687, %v654
      %s720 = scalar_lea.vmem %s203, 24
      %v721 = vld [vmem:[%s720] sm:$0xff]
      %v722 = vld [vmem:[%s720 + $0x8] sm:$0xff]
      %v723 = vld [vmem:[%s720 + $0x18] sm:$0xff]
      %v724 = vld [vmem:[%s720 + $0x20] sm:$0xff]
      %v725 = vld [vmem:[%s720 + $0x30] sm:$0xff]
      %v726 = vld [vmem:[%s720 + $0x38] sm:$0xff]
      %v727 = vld [vmem:[%s720 + $0x48] sm:$0xff]
      %v728 = vld [vmem:[%s720 + $0x50] sm:$0xff]
      %v729 = vld [vmem:[%s720 + $0x60] sm:$0xff]
      %v730 = vld [vmem:[%s720 + $0x68] sm:$0xff]
      %v731 = vld [vmem:[%s720 + $0x78] sm:$0xff]
      %v732 = vld [vmem:[%s720 + $0x80] sm:$0xff]
      %v733 = vld [vmem:[%s720 + $0x90] sm:$0xff]
      %v734 = vld [vmem:[%s720 + $0x98] sm:$0xff]
      %v735 = vld [vmem:[%s720 + $0xa8] sm:$0xff]
      %v736 = vld [vmem:[%s720 + $0xb0] sm:$0xff]
      %v737 = vld [vmem:[%s720 + $0xc0] sm:$0xff]
      %v738 = vld [vmem:[%s720 + $0xc8] sm:$0xff]
      %v739 = vld [vmem:[%s720 + $0xd8] sm:$0xff]
      %v740 = vld [vmem:[%s720 + $0xe0] sm:$0xff]
      %v741 = vld [vmem:[%s720 + $0xf0] sm:$0xff]
      %v742 = vld [vmem:[%s720 + $0xf8] sm:$0xff]
      %v743 = vld [vmem:[%s720 + $0x108] sm:$0xff]
      %v744 = vld [vmem:[%s720 + $0x110] sm:$0xff]
      %v745 = vld [vmem:[%s720 + $0x120] sm:$0xff]
      %v746 = vld [vmem:[%s720 + $0x128] sm:$0xff]
      %v747 = vld [vmem:[%s720 + $0x138] sm:$0xff]
      %v748 = vld [vmem:[%s720 + $0x140] sm:$0xff]
      %v749 = vld [vmem:[%s720 + $0x150] sm:$0xff]
      %v750 = vld [vmem:[%s720 + $0x158] sm:$0xff]
      %v751 = vld [vmem:[%s720 + $0x168] sm:$0xff]
      %v752 = vld [vmem:[%s720 + $0x170] sm:$0xff]
      %785 = vrot.lane.b32.xlu0 %v721, 24
      %v786 = vpop.permute.xlu0 %785
      %787 = vrot.lane.b32.xlu0 %v722, 24
      %v788 = vpop.permute.xlu0 %787
      %789 = vrot.lane.b32.xlu0 %v723, 24
      %v790 = vpop.permute.xlu0 %789
      %791 = vrot.lane.b32.xlu0 %v724, 24
      %v792 = vpop.permute.xlu0 %791
      %793 = vrot.lane.b32.xlu0 %v725, 24
      %v794 = vpop.permute.xlu0 %793
      %795 = vrot.lane.b32.xlu0 %v726, 24
      %v796 = vpop.permute.xlu0 %795
      %797 = vrot.lane.b32.xlu0 %v727, 24
      %v798 = vpop.permute.xlu0 %797
      %799 = vrot.lane.b32.xlu0 %v728, 24
      %v800 = vpop.permute.xlu0 %799
      %801 = vrot.lane.b32.xlu0 %v729, 24
      %v802 = vpop.permute.xlu0 %801
      %803 = vrot.lane.b32.xlu0 %v730, 24
      %v804 = vpop.permute.xlu0 %803
      %805 = vrot.lane.b32.xlu0 %v731, 24
      %v806 = vpop.permute.xlu0 %805
      %807 = vrot.lane.b32.xlu0 %v732, 24
      %v808 = vpop.permute.xlu0 %807
      %809 = vrot.lane.b32.xlu0 %v733, 24
      %v810 = vpop.permute.xlu0 %809
      %811 = vrot.lane.b32.xlu0 %v734, 24
      %v812 = vpop.permute.xlu0 %811
      %813 = vrot.lane.b32.xlu0 %v735, 24
      %v814 = vpop.permute.xlu0 %813
      %815 = vrot.lane.b32.xlu0 %v736, 24
      %v816 = vpop.permute.xlu0 %815
      %817 = vrot.lane.b32.xlu0 %v737, 24
      %v818 = vpop.permute.xlu0 %817
      %819 = vrot.lane.b32.xlu0 %v738, 24
      %v820 = vpop.permute.xlu0 %819
      %821 = vrot.lane.b32.xlu0 %v739, 24
      %v822 = vpop.permute.xlu0 %821
      %823 = vrot.lane.b32.xlu0 %v740, 24
      %v824 = vpop.permute.xlu0 %823
      %825 = vrot.lane.b32.xlu0 %v741, 24
      %v826 = vpop.permute.xlu0 %825
      %827 = vrot.lane.b32.xlu0 %v742, 24
      %v828 = vpop.permute.xlu0 %827
      %829 = vrot.lane.b32.xlu0 %v743, 24
      %v830 = vpop.permute.xlu0 %829
      %831 = vrot.lane.b32.xlu0 %v744, 24
      %v832 = vpop.permute.xlu0 %831
      %833 = vrot.lane.b32.xlu0 %v745, 24
      %v834 = vpop.permute.xlu0 %833
      %835 = vrot.lane.b32.xlu0 %v746, 24
      %v836 = vpop.permute.xlu0 %835
      %837 = vrot.lane.b32.xlu0 %v747, 24
      %v838 = vpop.permute.xlu0 %837
      %839 = vrot.lane.b32.xlu0 %v748, 24
      %v840 = vpop.permute.xlu0 %839
      %841 = vrot.lane.b32.xlu0 %v749, 24
      %v842 = vpop.permute.xlu0 %841
      %843 = vrot.lane.b32.xlu0 %v750, 24
      %v844 = vpop.permute.xlu0 %843
      %845 = vrot.lane.b32.xlu0 %v751, 24
      %v846 = vpop.permute.xlu0 %845
      %847 = vrot.lane.b32.xlu0 %v752, 24
      %v848 = vpop.permute.xlu0 %847
      %vm881 = vcmask 261312
      %882 = vst.msk [vmem:[#allocation2] sm:$0xff] %vm881, %v786
      %883 = vst.msk [vmem:[#allocation2 + $0x8] sm:$0xff] %vm881, %v788
      %884 = vst.msk [vmem:[#allocation2 + $0x10] sm:$0xff] %vm881, %v790
      %885 = vst.msk [vmem:[#allocation2 + $0x18] sm:$0xff] %vm881, %v792
      %886 = vst.msk [vmem:[#allocation2 + $0x20] sm:$0xff] %vm881, %v794
      %887 = vst.msk [vmem:[#allocation2 + $0x28] sm:$0xff] %vm881, %v796
      %888 = vst.msk [vmem:[#allocation2 + $0x30] sm:$0xff] %vm881, %v798
      %889 = vst.msk [vmem:[#allocation2 + $0x38] sm:$0xff] %vm881, %v800
      %890 = vst.msk [vmem:[#allocation2 + $0x40] sm:$0xff] %vm881, %v802
      %891 = vst.msk [vmem:[#allocation2 + $0x48] sm:$0xff] %vm881, %v804
      %892 = vst.msk [vmem:[#allocation2 + $0x50] sm:$0xff] %vm881, %v806
      %893 = vst.msk [vmem:[#allocation2 + $0x58] sm:$0xff] %vm881, %v808
      %894 = vst.msk [vmem:[#allocation2 + $0x60] sm:$0xff] %vm881, %v810
      %895 = vst.msk [vmem:[#allocation2 + $0x68] sm:$0xff] %vm881, %v812
      %896 = vst.msk [vmem:[#allocation2 + $0x70] sm:$0xff] %vm881, %v814
      %897 = vst.msk [vmem:[#allocation2 + $0x78] sm:$0xff] %vm881, %v816
      %898 = vst.msk [vmem:[#allocation2 + $0x80] sm:$0xff] %vm881, %v818
      %899 = vst.msk [vmem:[#allocation2 + $0x88] sm:$0xff] %vm881, %v820
      %900 = vst.msk [vmem:[#allocation2 + $0x90] sm:$0xff] %vm881, %v822
      %901 = vst.msk [vmem:[#allocation2 + $0x98] sm:$0xff] %vm881, %v824
      %902 = vst.msk [vmem:[#allocation2 + $0xa0] sm:$0xff] %vm881, %v826
      %903 = vst.msk [vmem:[#allocation2 + $0xa8] sm:$0xff] %vm881, %v828
      %904 = vst.msk [vmem:[#allocation2 + $0xb0] sm:$0xff] %vm881, %v830
      %905 = vst.msk [vmem:[#allocation2 + $0xb8] sm:$0xff] %vm881, %v832
      %906 = vst.msk [vmem:[#allocation2 + $0xc0] sm:$0xff] %vm881, %v834
      %907 = vst.msk [vmem:[#allocation2 + $0xc8] sm:$0xff] %vm881, %v836
      %908 = vst.msk [vmem:[#allocation2 + $0xd0] sm:$0xff] %vm881, %v838
      %909 = vst.msk [vmem:[#allocation2 + $0xd8] sm:$0xff] %vm881, %v840
      %910 = vst.msk [vmem:[#allocation2 + $0xe0] sm:$0xff] %vm881, %v842
      %911 = vst.msk [vmem:[#allocation2 + $0xe8] sm:$0xff] %vm881, %v844
      %912 = vst.msk [vmem:[#allocation2 + $0xf0] sm:$0xff] %vm881, %v846
      %913 = vst.msk [vmem:[#allocation2 + $0xf8] sm:$0xff] %vm881, %v848
      %v914 = vld [vmem:[%s720 + $0x1] sm:$0xff]
      %v915 = vld [vmem:[%s720 + $0x9] sm:$0xff]
      %v916 = vld [vmem:[%s720 + $0x19] sm:$0xff]
      %v917 = vld [vmem:[%s720 + $0x21] sm:$0xff]
      %v918 = vld [vmem:[%s720 + $0x31] sm:$0xff]
      %v919 = vld [vmem:[%s720 + $0x39] sm:$0xff]
      %v920 = vld [vmem:[%s720 + $0x49] sm:$0xff]
      %v921 = vld [vmem:[%s720 + $0x51] sm:$0xff]
      %v922 = vld [vmem:[%s720 + $0x61] sm:$0xff]
      %v923 = vld [vmem:[%s720 + $0x69] sm:$0xff]
      %v924 = vld [vmem:[%s720 + $0x79] sm:$0xff]
      %v925 = vld [vmem:[%s720 + $0x81] sm:$0xff]
      %v926 = vld [vmem:[%s720 + $0x91] sm:$0xff]
      %v927 = vld [vmem:[%s720 + $0x99] sm:$0xff]
      %v928 = vld [vmem:[%s720 + $0xa9] sm:$0xff]
      %v929 = vld [vmem:[%s720 + $0xb1] sm:$0xff]
      %v930 = vld [vmem:[%s720 + $0xc1] sm:$0xff]
      %v931 = vld [vmem:[%s720 + $0xc9] sm:$0xff]
      %v932 = vld [vmem:[%s720 + $0xd9] sm:$0xff]
      %v933 = vld [vmem:[%s720 + $0xe1] sm:$0xff]
      %v934 = vld [vmem:[%s720 + $0xf1] sm:$0xff]
      %v935 = vld [vmem:[%s720 + $0xf9] sm:$0xff]
      %v936 = vld [vmem:[%s720 + $0x109] sm:$0xff]
      %v937 = vld [vmem:[%s720 + $0x111] sm:$0xff]
      %v938 = vld [vmem:[%s720 + $0x121] sm:$0xff]
      %v939 = vld [vmem:[%s720 + $0x129] sm:$0xff]
      %v940 = vld [vmem:[%s720 + $0x139] sm:$0xff]
      %v941 = vld [vmem:[%s720 + $0x141] sm:$0xff]
      %v942 = vld [vmem:[%s720 + $0x151] sm:$0xff]
      %v943 = vld [vmem:[%s720 + $0x159] sm:$0xff]
      %v944 = vld [vmem:[%s720 + $0x169] sm:$0xff]
      %v945 = vld [vmem:[%s720 + $0x171] sm:$0xff]
      %978 = vrot.lane.b32.xlu0 %v914, 32
      %v979 = vpop.permute.xlu0 %978
      %980 = vrot.lane.b32.xlu0 %v915, 32
      %v981 = vpop.permute.xlu0 %980
      %982 = vrot.lane.b32.xlu0 %v916, 32
      %v983 = vpop.permute.xlu0 %982
      %984 = vrot.lane.b32.xlu0 %v917, 32
      %v985 = vpop.permute.xlu0 %984
      %986 = vrot.lane.b32.xlu0 %v918, 32
      %v987 = vpop.permute.xlu0 %986
      %988 = vrot.lane.b32.xlu0 %v919, 32
      %v989 = vpop.permute.xlu0 %988
      %990 = vrot.lane.b32.xlu0 %v920, 32
      %v991 = vpop.permute.xlu0 %990
      %992 = vrot.lane.b32.xlu0 %v921, 32
      %v993 = vpop.permute.xlu0 %992
      %994 = vrot.lane.b32.xlu0 %v922, 32
      %v995 = vpop.permute.xlu0 %994
      %996 = vrot.lane.b32.xlu0 %v923, 32
      %v997 = vpop.permute.xlu0 %996
      %998 = vrot.lane.b32.xlu0 %v924, 32
      %v999 = vpop.permute.xlu0 %998
      %1000 = vrot.lane.b32.xlu0 %v925, 32
      %v1001 = vpop.permute.xlu0 %1000
      %1002 = vrot.lane.b32.xlu0 %v926, 32
      %v1003 = vpop.permute.xlu0 %1002
      %1004 = vrot.lane.b32.xlu0 %v927, 32
      %v1005 = vpop.permute.xlu0 %1004
      %1006 = vrot.lane.b32.xlu0 %v928, 32
      %v1007 = vpop.permute.xlu0 %1006
      %1008 = vrot.lane.b32.xlu0 %v929, 32
      %v1009 = vpop.permute.xlu0 %1008
      %1010 = vrot.lane.b32.xlu0 %v930, 32
      %v1011 = vpop.permute.xlu0 %1010
      %1012 = vrot.lane.b32.xlu0 %v931, 32
      %v1013 = vpop.permute.xlu0 %1012
      %1014 = vrot.lane.b32.xlu0 %v932, 32
      %v1015 = vpop.permute.xlu0 %1014
      %1016 = vrot.lane.b32.xlu0 %v933, 32
      %v1017 = vpop.permute.xlu0 %1016
      %1018 = vrot.lane.b32.xlu0 %v934, 32
      %v1019 = vpop.permute.xlu0 %1018
      %1020 = vrot.lane.b32.xlu0 %v935, 32
      %v1021 = vpop.permute.xlu0 %1020
      %1022 = vrot.lane.b32.xlu0 %v936, 32
      %v1023 = vpop.permute.xlu0 %1022
      %1024 = vrot.lane.b32.xlu0 %v937, 32
      %v1025 = vpop.permute.xlu0 %1024
      %1026 = vrot.lane.b32.xlu0 %v938, 32
      %v1027 = vpop.permute.xlu0 %1026
      %1028 = vrot.lane.b32.xlu0 %v939, 32
      %v1029 = vpop.permute.xlu0 %1028
      %1030 = vrot.lane.b32.xlu0 %v940, 32
      %v1031 = vpop.permute.xlu0 %1030
      %1032 = vrot.lane.b32.xlu0 %v941, 32
      %v1033 = vpop.permute.xlu0 %1032
      %1034 = vrot.lane.b32.xlu0 %v942, 32
      %v1035 = vpop.permute.xlu0 %1034
      %1036 = vrot.lane.b32.xlu0 %v943, 32
      %v1037 = vpop.permute.xlu0 %1036
      %1038 = vrot.lane.b32.xlu0 %v944, 32
      %v1039 = vpop.permute.xlu0 %1038
      %1040 = vrot.lane.b32.xlu0 %v945, 32
      %v1041 = vpop.permute.xlu0 %1040
      %vm1074 = vcmask 326912
      %1075 = vst.msk [vmem:[#allocation2] sm:$0xff] %vm1074, %v979
      %1076 = vst.msk [vmem:[#allocation2 + $0x8] sm:$0xff] %vm1074, %v981
      %1077 = vst.msk [vmem:[#allocation2 + $0x10] sm:$0xff] %vm1074, %v983
      %1078 = vst.msk [vmem:[#allocation2 + $0x18] sm:$0xff] %vm1074, %v985
      %1079 = vst.msk [vmem:[#allocation2 + $0x20] sm:$0xff] %vm1074, %v987
      %1080 = vst.msk [vmem:[#allocation2 + $0x28] sm:$0xff] %vm1074, %v989
      %1081 = vst.msk [vmem:[#allocation2 + $0x30] sm:$0xff] %vm1074, %v991
      %1082 = vst.msk [vmem:[#allocation2 + $0x38] sm:$0xff] %vm1074, %v993
      %1083 = vst.msk [vmem:[#allocation2 + $0x40] sm:$0xff] %vm1074, %v995
      %1084 = vst.msk [vmem:[#allocation2 + $0x48] sm:$0xff] %vm1074, %v997
      %1085 = vst.msk [vmem:[#allocation2 + $0x50] sm:$0xff] %vm1074, %v999
      %1086 = vst.msk [vmem:[#allocation2 + $0x58] sm:$0xff] %vm1074, %v1001
      %1087 = vst.msk [vmem:[#allocation2 + $0x60] sm:$0xff] %vm1074, %v1003
      %1088 = vst.msk [vmem:[#allocation2 + $0x68] sm:$0xff] %vm1074, %v1005
      %1089 = vst.msk [vmem:[#allocation2 + $0x70] sm:$0xff] %vm1074, %v1007
      %1090 = vst.msk [vmem:[#allocation2 + $0x78] sm:$0xff] %vm1074, %v1009
      %1091 = vst.msk [vmem:[#allocation2 + $0x80] sm:$0xff] %vm1074, %v1011
      %1092 = vst.msk [vmem:[#allocation2 + $0x88] sm:$0xff] %vm1074, %v1013
      %1093 = vst.msk [vmem:[#allocation2 + $0x90] sm:$0xff] %vm1074, %v1015
      %1094 = vst.msk [vmem:[#allocation2 + $0x98] sm:$0xff] %vm1074, %v1017
      %1095 = vst.msk [vmem:[#allocation2 + $0xa0] sm:$0xff] %vm1074, %v1019
      %1096 = vst.msk [vmem:[#allocation2 + $0xa8] sm:$0xff] %vm1074, %v1021
      %1097 = vst.msk [vmem:[#allocation2 + $0xb0] sm:$0xff] %vm1074, %v1023
      %1098 = vst.msk [vmem:[#allocation2 + $0xb8] sm:$0xff] %vm1074, %v1025
      %1099 = vst.msk [vmem:[#allocation2 + $0xc0] sm:$0xff] %vm1074, %v1027
      %1100 = vst.msk [vmem:[#allocation2 + $0xc8] sm:$0xff] %vm1074, %v1029
      %1101 = vst.msk [vmem:[#allocation2 + $0xd0] sm:$0xff] %vm1074, %v1031
      %1102 = vst.msk [vmem:[#allocation2 + $0xd8] sm:$0xff] %vm1074, %v1033
      %1103 = vst.msk [vmem:[#allocation2 + $0xe0] sm:$0xff] %vm1074, %v1035
      %1104 = vst.msk [vmem:[#allocation2 + $0xe8] sm:$0xff] %vm1074, %v1037
      %1105 = vst.msk [vmem:[#allocation2 + $0xf0] sm:$0xff] %vm1074, %v1039
      %1106 = vst.msk [vmem:[#allocation2 + $0xf8] sm:$0xff] %vm1074, %v1041
      %v1107 = vld [vmem:[%s720 + $0x2] sm:$0xff]
      %v1108 = vld [vmem:[%s720 + $0xa] sm:$0xff]
      %v1109 = vld [vmem:[%s720 + $0x1a] sm:$0xff]
      %v1110 = vld [vmem:[%s720 + $0x22] sm:$0xff]
      %v1111 = vld [vmem:[%s720 + $0x32] sm:$0xff]
      %v1112 = vld [vmem:[%s720 + $0x3a] sm:$0xff]
      %v1113 = vld [vmem:[%s720 + $0x4a] sm:$0xff]
      %v1114 = vld [vmem:[%s720 + $0x52] sm:$0xff]
      %v1115 = vld [vmem:[%s720 + $0x62] sm:$0xff]
      %v1116 = vld [vmem:[%s720 + $0x6a] sm:$0xff]
      %v1117 = vld [vmem:[%s720 + $0x7a] sm:$0xff]
      %v1118 = vld [vmem:[%s720 + $0x82] sm:$0xff]
      %v1119 = vld [vmem:[%s720 + $0x92] sm:$0xff]
      %v1120 = vld [vmem:[%s720 + $0x9a] sm:$0xff]
      %v1121 = vld [vmem:[%s720 + $0xaa] sm:$0xff]
      %v1122 = vld [vmem:[%s720 + $0xb2] sm:$0xff]
      %v1123 = vld [vmem:[%s720 + $0xc2] sm:$0xff]
      %v1124 = vld [vmem:[%s720 + $0xca] sm:$0xff]
      %v1125 = vld [vmem:[%s720 + $0xda] sm:$0xff]
      %v1126 = vld [vmem:[%s720 + $0xe2] sm:$0xff]
      %v1127 = vld [vmem:[%s720 + $0xf2] sm:$0xff]
      %v1128 = vld [vmem:[%s720 + $0xfa] sm:$0xff]
      %v1129 = vld [vmem:[%s720 + $0x10a] sm:$0xff]
      %v1130 = vld [vmem:[%s720 + $0x112] sm:$0xff]
      %v1131 = vld [vmem:[%s720 + $0x122] sm:$0xff]
      %v1132 = vld [vmem:[%s720 + $0x12a] sm:$0xff]
      %v1133 = vld [vmem:[%s720 + $0x13a] sm:$0xff]
      %v1134 = vld [vmem:[%s720 + $0x142] sm:$0xff]
      %v1135 = vld [vmem:[%s720 + $0x152] sm:$0xff]
      %v1136 = vld [vmem:[%s720 + $0x15a] sm:$0xff]
      %v1137 = vld [vmem:[%s720 + $0x16a] sm:$0xff]
      %v1138 = vld [vmem:[%s720 + $0x172] sm:$0xff]
      %1171 = vrot.lane.b32.xlu0 %v1107, 40
      %v1172 = vpop.permute.xlu0 %1171
      %1173 = vrot.lane.b32.xlu0 %v1108, 40
      %v1174 = vpop.permute.xlu0 %1173
      %1175 = vrot.lane.b32.xlu0 %v1109, 40
      %v1176 = vpop.permute.xlu0 %1175
      %1177 = vrot.lane.b32.xlu0 %v1110, 40
      %v1178 = vpop.permute.xlu0 %1177
      %1179 = vrot.lane.b32.xlu0 %v1111, 40
      %v1180 = vpop.permute.xlu0 %1179
      %1181 = vrot.lane.b32.xlu0 %v1112, 40
      %v1182 = vpop.permute.xlu0 %1181
      %1183 = vrot.lane.b32.xlu0 %v1113, 40
      %v1184 = vpop.permute.xlu0 %1183
      %1185 = vrot.lane.b32.xlu0 %v1114, 40
      %v1186 = vpop.permute.xlu0 %1185
      %1187 = vrot.lane.b32.xlu0 %v1115, 40
      %v1188 = vpop.permute.xlu0 %1187
      %1189 = vrot.lane.b32.xlu0 %v1116, 40
      %v1190 = vpop.permute.xlu0 %1189
      %1191 = vrot.lane.b32.xlu0 %v1117, 40
      %v1192 = vpop.permute.xlu0 %1191
      %1193 = vrot.lane.b32.xlu0 %v1118, 40
      %v1194 = vpop.permute.xlu0 %1193
      %1195 = vrot.lane.b32.xlu0 %v1119, 40
      %v1196 = vpop.permute.xlu0 %1195
      %1197 = vrot.lane.b32.xlu0 %v1120, 40
      %v1198 = vpop.permute.xlu0 %1197
      %1199 = vrot.lane.b32.xlu0 %v1121, 40
      %v1200 = vpop.permute.xlu0 %1199
      %1201 = vrot.lane.b32.xlu0 %v1122, 40
      %v1202 = vpop.permute.xlu0 %1201
      %1203 = vrot.lane.b32.xlu0 %v1123, 40
      %v1204 = vpop.permute.xlu0 %1203
      %1205 = vrot.lane.b32.xlu0 %v1124, 40
      %v1206 = vpop.permute.xlu0 %1205
      %1207 = vrot.lane.b32.xlu0 %v1125, 40
      %v1208 = vpop.permute.xlu0 %1207
      %1209 = vrot.lane.b32.xlu0 %v1126, 40
      %v1210 = vpop.permute.xlu0 %1209
      %1211 = vrot.lane.b32.xlu0 %v1127, 40
      %v1212 = vpop.permute.xlu0 %1211
      %1213 = vrot.lane.b32.xlu0 %v1128, 40
      %v1214 = vpop.permute.xlu0 %1213
      %1215 = vrot.lane.b32.xlu0 %v1129, 40
      %v1216 = vpop.permute.xlu0 %1215
      %1217 = vrot.lane.b32.xlu0 %v1130, 40
      %v1218 = vpop.permute.xlu0 %1217
      %1219 = vrot.lane.b32.xlu0 %v1131, 40
      %v1220 = vpop.permute.xlu0 %1219
      %1221 = vrot.lane.b32.xlu0 %v1132, 40
      %v1222 = vpop.permute.xlu0 %1221
      %1223 = vrot.lane.b32.xlu0 %v1133, 40
      %v1224 = vpop.permute.xlu0 %1223
      %1225 = vrot.lane.b32.xlu0 %v1134, 40
      %v1226 = vpop.permute.xlu0 %1225
      %1227 = vrot.lane.b32.xlu0 %v1135, 40
      %v1228 = vpop.permute.xlu0 %1227
      %1229 = vrot.lane.b32.xlu0 %v1136, 40
      %v1230 = vpop.permute.xlu0 %1229
      %1231 = vrot.lane.b32.xlu0 %v1137, 40
      %v1232 = vpop.permute.xlu0 %1231
      %1233 = vrot.lane.b32.xlu0 %v1138, 40
      %v1234 = vpop.permute.xlu0 %1233
      %vm1267 = vcmask 392512
      %1268 = vst.msk [vmem:[#allocation2] sm:$0xff] %vm1267, %v1172
      %1269 = vst.msk [vmem:[#allocation2 + $0x8] sm:$0xff] %vm1267, %v1174
      %1270 = vst.msk [vmem:[#allocation2 + $0x10] sm:$0xff] %vm1267, %v1176
      %1271 = vst.msk [vmem:[#allocation2 + $0x18] sm:$0xff] %vm1267, %v1178
      %1272 = vst.msk [vmem:[#allocation2 + $0x20] sm:$0xff] %vm1267, %v1180
      %1273 = vst.msk [vmem:[#allocation2 + $0x28] sm:$0xff] %vm1267, %v1182
      %1274 = vst.msk [vmem:[#allocation2 + $0x30] sm:$0xff] %vm1267, %v1184
      %1275 = vst.msk [vmem:[#allocation2 + $0x38] sm:$0xff] %vm1267, %v1186
      %1276 = vst.msk [vmem:[#allocation2 + $0x40] sm:$0xff] %vm1267, %v1188
      %1277 = vst.msk [vmem:[#allocation2 + $0x48] sm:$0xff] %vm1267, %v1190
      %1278 = vst.msk [vmem:[#allocation2 + $0x50] sm:$0xff] %vm1267, %v1192
      %1279 = vst.msk [vmem:[#allocation2 + $0x58] sm:$0xff] %vm1267, %v1194
      %1280 = vst.msk [vmem:[#allocation2 + $0x60] sm:$0xff] %vm1267, %v1196
      %1281 = vst.msk [vmem:[#allocation2 + $0x68] sm:$0xff] %vm1267, %v1198
      %1282 = vst.msk [vmem:[#allocation2 + $0x70] sm:$0xff] %vm1267, %v1200
      %1283 = vst.msk [vmem:[#allocation2 + $0x78] sm:$0xff] %vm1267, %v1202
      %1284 = vst.msk [vmem:[#allocation2 + $0x80] sm:$0xff] %vm1267, %v1204
      %1285 = vst.msk [vmem:[#allocation2 + $0x88] sm:$0xff] %vm1267, %v1206
      %1286 = vst.msk [vmem:[#allocation2 + $0x90] sm:$0xff] %vm1267, %v1208
      %1287 = vst.msk [vmem:[#allocation2 + $0x98] sm:$0xff] %vm1267, %v1210
      %1288 = vst.msk [vmem:[#allocation2 + $0xa0] sm:$0xff] %vm1267, %v1212
      %1289 = vst.msk [vmem:[#allocation2 + $0xa8] sm:$0xff] %vm1267, %v1214
      %1290 = vst.msk [vmem:[#allocation2 + $0xb0] sm:$0xff] %vm1267, %v1216
      %1291 = vst.msk [vmem:[#allocation2 + $0xb8] sm:$0xff] %vm1267, %v1218
      %1292 = vst.msk [vmem:[#allocation2 + $0xc0] sm:$0xff] %vm1267, %v1220
      %1293 = vst.msk [vmem:[#allocation2 + $0xc8] sm:$0xff] %vm1267, %v1222
      %1294 = vst.msk [vmem:[#allocation2 + $0xd0] sm:$0xff] %vm1267, %v1224
      %1295 = vst.msk [vmem:[#allocation2 + $0xd8] sm:$0xff] %vm1267, %v1226
      %1296 = vst.msk [vmem:[#allocation2 + $0xe0] sm:$0xff] %vm1267, %v1228
      %1297 = vst.msk [vmem:[#allocation2 + $0xe8] sm:$0xff] %vm1267, %v1230
      %1298 = vst.msk [vmem:[#allocation2 + $0xf0] sm:$0xff] %vm1267, %v1232
      %1299 = vst.msk [vmem:[#allocation2 + $0xf8] sm:$0xff] %vm1267, %v1234
      %s1300 = scalar_lea.vmem %s203, 48
      %v1301 = vld [vmem:[%s1300] sm:$0xff]
      %v1302 = vld [vmem:[%s1300 + $0x8] sm:$0xff]
      %v1303 = vld [vmem:[%s1300 + $0x18] sm:$0xff]
      %v1304 = vld [vmem:[%s1300 + $0x20] sm:$0xff]
      %v1305 = vld [vmem:[%s1300 + $0x30] sm:$0xff]
      %v1306 = vld [vmem:[%s1300 + $0x38] sm:$0xff]
      %v1307 = vld [vmem:[%s1300 + $0x48] sm:$0xff]
      %v1308 = vld [vmem:[%s1300 + $0x50] sm:$0xff]
      %v1309 = vld [vmem:[%s1300 + $0x60] sm:$0xff]
      %v1310 = vld [vmem:[%s1300 + $0x68] sm:$0xff]
      %v1311 = vld [vmem:[%s1300 + $0x78] sm:$0xff]
      %v1312 = vld [vmem:[%s1300 + $0x80] sm:$0xff]
      %v1313 = vld [vmem:[%s1300 + $0x90] sm:$0xff]
      %v1314 = vld [vmem:[%s1300 + $0x98] sm:$0xff]
      %v1315 = vld [vmem:[%s1300 + $0xa8] sm:$0xff]
      %v1316 = vld [vmem:[%s1300 + $0xb0] sm:$0xff]
      %v1317 = vld [vmem:[%s1300 + $0xc0] sm:$0xff]
      %v1318 = vld [vmem:[%s1300 + $0xc8] sm:$0xff]
      %v1319 = vld [vmem:[%s1300 + $0xd8] sm:$0xff]
      %v1320 = vld [vmem:[%s1300 + $0xe0] sm:$0xff]
      %v1321 = vld [vmem:[%s1300 + $0xf0] sm:$0xff]
      %v1322 = vld [vmem:[%s1300 + $0xf8] sm:$0xff]
      %v1323 = vld [vmem:[%s1300 + $0x108] sm:$0xff]
      %v1324 = vld [vmem:[%s1300 + $0x110] sm:$0xff]
      %v1325 = vld [vmem:[%s1300 + $0x120] sm:$0xff]
      %v1326 = vld [vmem:[%s1300 + $0x128] sm:$0xff]
      %v1327 = vld [vmem:[%s1300 + $0x138] sm:$0xff]
      %v1328 = vld [vmem:[%s1300 + $0x140] sm:$0xff]
      %v1329 = vld [vmem:[%s1300 + $0x150] sm:$0xff]
      %v1330 = vld [vmem:[%s1300 + $0x158] sm:$0xff]
      %v1331 = vld [vmem:[%s1300 + $0x168] sm:$0xff]
      %v1332 = vld [vmem:[%s1300 + $0x170] sm:$0xff]
      %1365 = vrot.lane.b32.xlu0 %v1301, 48
      %v1366 = vpop.permute.xlu0 %1365
      %1367 = vrot.lane.b32.xlu0 %v1302, 48
      %v1368 = vpop.permute.xlu0 %1367
      %1369 = vrot.lane.b32.xlu0 %v1303, 48
      %v1370 = vpop.permute.xlu0 %1369
      %1371 = vrot.lane.b32.xlu0 %v1304, 48
      %v1372 = vpop.permute.xlu0 %1371
      %1373 = vrot.lane.b32.xlu0 %v1305, 48
      %v1374 = vpop.permute.xlu0 %1373
      %1375 = vrot.lane.b32.xlu0 %v1306, 48
      %v1376 = vpop.permute.xlu0 %1375
      %1377 = vrot.lane.b32.xlu0 %v1307, 48
      %v1378 = vpop.permute.xlu0 %1377
      %1379 = vrot.lane.b32.xlu0 %v1308, 48
      %v1380 = vpop.permute.xlu0 %1379
      %1381 = vrot.lane.b32.xlu0 %v1309, 48
      %v1382 = vpop.permute.xlu0 %1381
      %1383 = vrot.lane.b32.xlu0 %v1310, 48
      %v1384 = vpop.permute.xlu0 %1383
      %1385 = vrot.lane.b32.xlu0 %v1311, 48
      %v1386 = vpop.permute.xlu0 %1385
      %1387 = vrot.lane.b32.xlu0 %v1312, 48
      %v1388 = vpop.permute.xlu0 %1387
      %1389 = vrot.lane.b32.xlu0 %v1313, 48
      %v1390 = vpop.permute.xlu0 %1389
      %1391 = vrot.lane.b32.xlu0 %v1314, 48
      %v1392 = vpop.permute.xlu0 %1391
      %1393 = vrot.lane.b32.xlu0 %v1315, 48
      %v1394 = vpop.permute.xlu0 %1393
      %1395 = vrot.lane.b32.xlu0 %v1316, 48
      %v1396 = vpop.permute.xlu0 %1395
      %1397 = vrot.lane.b32.xlu0 %v1317, 48
      %v1398 = vpop.permute.xlu0 %1397
      %1399 = vrot.lane.b32.xlu0 %v1318, 48
      %v1400 = vpop.permute.xlu0 %1399
      %1401 = vrot.lane.b32.xlu0 %v1319, 48
      %v1402 = vpop.permute.xlu0 %1401
      %1403 = vrot.lane.b32.xlu0 %v1320, 48
      %v1404 = vpop.permute.xlu0 %1403
      %1405 = vrot.lane.b32.xlu0 %v1321, 48
      %v1406 = vpop.permute.xlu0 %1405
      %1407 = vrot.lane.b32.xlu0 %v1322, 48
      %v1408 = vpop.permute.xlu0 %1407
      %1409 = vrot.lane.b32.xlu0 %v1323, 48
      %v1410 = vpop.permute.xlu0 %1409
      %1411 = vrot.lane.b32.xlu0 %v1324, 48
      %v1412 = vpop.permute.xlu0 %1411
      %1413 = vrot.lane.b32.xlu0 %v1325, 48
      %v1414 = vpop.permute.xlu0 %1413
      %1415 = vrot.lane.b32.xlu0 %v1326, 48
      %v1416 = vpop.permute.xlu0 %1415
      %1417 = vrot.lane.b32.xlu0 %v1327, 48
      %v1418 = vpop.permute.xlu0 %1417
      %1419 = vrot.lane.b32.xlu0 %v1328, 48
      %v1420 = vpop.permute.xlu0 %1419
      %1421 = vrot.lane.b32.xlu0 %v1329, 48
      %v1422 = vpop.permute.xlu0 %1421
      %1423 = vrot.lane.b32.xlu0 %v1330, 48
      %v1424 = vpop.permute.xlu0 %1423
      %1425 = vrot.lane.b32.xlu0 %v1331, 48
      %v1426 = vpop.permute.xlu0 %1425
      %1427 = vrot.lane.b32.xlu0 %v1332, 48
      %v1428 = vpop.permute.xlu0 %1427
      %vm1461 = vcmask 458112
      %1462 = vst.msk [vmem:[#allocation2] sm:$0xff] %vm1461, %v1366
      %1463 = vst.msk [vmem:[#allocation2 + $0x8] sm:$0xff] %vm1461, %v1368
      %1464 = vst.msk [vmem:[#allocation2 + $0x10] sm:$0xff] %vm1461, %v1370
      %1465 = vst.msk [vmem:[#allocation2 + $0x18] sm:$0xff] %vm1461, %v1372
      %1466 = vst.msk [vmem:[#allocation2 + $0x20] sm:$0xff] %vm1461, %v1374
      %1467 = vst.msk [vmem:[#allocation2 + $0x28] sm:$0xff] %vm1461, %v1376
      %1468 = vst.msk [vmem:[#allocation2 + $0x30] sm:$0xff] %vm1461, %v1378
      %1469 = vst.msk [vmem:[#allocation2 + $0x38] sm:$0xff] %vm1461, %v1380
      %1470 = vst.msk [vmem:[#allocation2 + $0x40] sm:$0xff] %vm1461, %v1382
      %1471 = vst.msk [vmem:[#allocation2 + $0x48] sm:$0xff] %vm1461, %v1384
      %1472 = vst.msk [vmem:[#allocation2 + $0x50] sm:$0xff] %vm1461, %v1386
      %1473 = vst.msk [vmem:[#allocation2 + $0x58] sm:$0xff] %vm1461, %v1388
      %1474 = vst.msk [vmem:[#allocation2 + $0x60] sm:$0xff] %vm1461, %v1390
      %1475 = vst.msk [vmem:[#allocation2 + $0x68] sm:$0xff] %vm1461, %v1392
      %1476 = vst.msk [vmem:[#allocation2 + $0x70] sm:$0xff] %vm1461, %v1394
      %1477 = vst.msk [vmem:[#allocation2 + $0x78] sm:$0xff] %vm1461, %v1396
      %1478 = vst.msk [vmem:[#allocation2 + $0x80] sm:$0xff] %vm1461, %v1398
      %1479 = vst.msk [vmem:[#allocation2 + $0x88] sm:$0xff] %vm1461, %v1400
      %1480 = vst.msk [vmem:[#allocation2 + $0x90] sm:$0xff] %vm1461, %v1402
      %1481 = vst.msk [vmem:[#allocation2 + $0x98] sm:$0xff] %vm1461, %v1404
      %1482 = vst.msk [vmem:[#allocation2 + $0xa0] sm:$0xff] %vm1461, %v1406
      %1483 = vst.msk [vmem:[#allocation2 + $0xa8] sm:$0xff] %vm1461, %v1408
      %1484 = vst.msk [vmem:[#allocation2 + $0xb0] sm:$0xff] %vm1461, %v1410
      %1485 = vst.msk [vmem:[#allocation2 + $0xb8] sm:$0xff] %vm1461, %v1412
      %1486 = vst.msk [vmem:[#allocation2 + $0xc0] sm:$0xff] %vm1461, %v1414
      %1487 = vst.msk [vmem:[#allocation2 + $0xc8] sm:$0xff] %vm1461, %v1416
      %1488 = vst.msk [vmem:[#allocation2 + $0xd0] sm:$0xff] %vm1461, %v1418
      %1489 = vst.msk [vmem:[#allocation2 + $0xd8] sm:$0xff] %vm1461, %v1420
      %1490 = vst.msk [vmem:[#allocation2 + $0xe0] sm:$0xff] %vm1461, %v1422
      %1491 = vst.msk [vmem:[#allocation2 + $0xe8] sm:$0xff] %vm1461, %v1424
      %1492 = vst.msk [vmem:[#allocation2 + $0xf0] sm:$0xff] %vm1461, %v1426
      %1493 = vst.msk [vmem:[#allocation2 + $0xf8] sm:$0xff] %vm1461, %v1428
      %v1494 = vld [vmem:[%s1300 + $0x1] sm:$0xff]
      %v1495 = vld [vmem:[%s1300 + $0x9] sm:$0xff]
      %v1496 = vld [vmem:[%s1300 + $0x19] sm:$0xff]
      %v1497 = vld [vmem:[%s1300 + $0x21] sm:$0xff]
      %v1498 = vld [vmem:[%s1300 + $0x31] sm:$0xff]
      %v1499 = vld [vmem:[%s1300 + $0x39] sm:$0xff]
      %v1500 = vld [vmem:[%s1300 + $0x49] sm:$0xff]
      %v1501 = vld [vmem:[%s1300 + $0x51] sm:$0xff]
      %v1502 = vld [vmem:[%s1300 + $0x61] sm:$0xff]
      %v1503 = vld [vmem:[%s1300 + $0x69] sm:$0xff]
      %v1504 = vld [vmem:[%s1300 + $0x79] sm:$0xff]
      %v1505 = vld [vmem:[%s1300 + $0x81] sm:$0xff]
      %v1506 = vld [vmem:[%s1300 + $0x91] sm:$0xff]
      %v1507 = vld [vmem:[%s1300 + $0x99] sm:$0xff]
      %v1508 = vld [vmem:[%s1300 + $0xa9] sm:$0xff]
      %v1509 = vld [vmem:[%s1300 + $0xb1] sm:$0xff]
      %v1510 = vld [vmem:[%s1300 + $0xc1] sm:$0xff]
      %v1511 = vld [vmem:[%s1300 + $0xc9] sm:$0xff]
      %v1512 = vld [vmem:[%s1300 + $0xd9] sm:$0xff]
      %v1513 = vld [vmem:[%s1300 + $0xe1] sm:$0xff]
      %v1514 = vld [vmem:[%s1300 + $0xf1] sm:$0xff]
      %v1515 = vld [vmem:[%s1300 + $0xf9] sm:$0xff]
      %v1516 = vld [vmem:[%s1300 + $0x109] sm:$0xff]
      %v1517 = vld [vmem:[%s1300 + $0x111] sm:$0xff]
      %v1518 = vld [vmem:[%s1300 + $0x121] sm:$0xff]
      %v1519 = vld [vmem:[%s1300 + $0x129] sm:$0xff]
      %v1520 = vld [vmem:[%s1300 + $0x139] sm:$0xff]
      %v1521 = vld [vmem:[%s1300 + $0x141] sm:$0xff]
      %v1522 = vld [vmem:[%s1300 + $0x151] sm:$0xff]
      %v1523 = vld [vmem:[%s1300 + $0x159] sm:$0xff]
      %v1524 = vld [vmem:[%s1300 + $0x169] sm:$0xff]
      %v1525 = vld [vmem:[%s1300 + $0x171] sm:$0xff]
      %1558 = vrot.lane.b32.xlu0 %v1494, 56
      %v1559 = vpop.permute.xlu0 %1558
      %1560 = vrot.lane.b32.xlu0 %v1495, 56
      %v1561 = vpop.permute.xlu0 %1560
      %1562 = vrot.lane.b32.xlu0 %v1496, 56
      %v1563 = vpop.permute.xlu0 %1562
      %1564 = vrot.lane.b32.xlu0 %v1497, 56
      %v1565 = vpop.permute.xlu0 %1564
      %1566 = vrot.lane.b32.xlu0 %v1498, 56
      %v1567 = vpop.permute.xlu0 %1566
      %1568 = vrot.lane.b32.xlu0 %v1499, 56
      %v1569 = vpop.permute.xlu0 %1568
      %1570 = vrot.lane.b32.xlu0 %v1500, 56
      %v1571 = vpop.permute.xlu0 %1570
      %1572 = vrot.lane.b32.xlu0 %v1501, 56
      %v1573 = vpop.permute.xlu0 %1572
      %1574 = vrot.lane.b32.xlu0 %v1502, 56
      %v1575 = vpop.permute.xlu0 %1574
      %1576 = vrot.lane.b32.xlu0 %v1503, 56
      %v1577 = vpop.permute.xlu0 %1576
      %1578 = vrot.lane.b32.xlu0 %v1504, 56
      %v1579 = vpop.permute.xlu0 %1578
      %1580 = vrot.lane.b32.xlu0 %v1505, 56
      %v1581 = vpop.permute.xlu0 %1580
      %1582 = vrot.lane.b32.xlu0 %v1506, 56
      %v1583 = vpop.permute.xlu0 %1582
      %1584 = vrot.lane.b32.xlu0 %v1507, 56
      %v1585 = vpop.permute.xlu0 %1584
      %1586 = vrot.lane.b32.xlu0 %v1508, 56
      %v1587 = vpop.permute.xlu0 %1586
      %1588 = vrot.lane.b32.xlu0 %v1509, 56
      %v1589 = vpop.permute.xlu0 %1588
      %1590 = vrot.lane.b32.xlu0 %v1510, 56
      %v1591 = vpop.permute.xlu0 %1590
      %1592 = vrot.lane.b32.xlu0 %v1511, 56
      %v1593 = vpop.permute.xlu0 %1592
      %1594 = vrot.lane.b32.xlu0 %v1512, 56
      %v1595 = vpop.permute.xlu0 %1594
      %1596 = vrot.lane.b32.xlu0 %v1513, 56
      %v1597 = vpop.permute.xlu0 %1596
      %1598 = vrot.lane.b32.xlu0 %v1514, 56
      %v1599 = vpop.permute.xlu0 %1598
      %1600 = vrot.lane.b32.xlu0 %v1515, 56
      %v1601 = vpop.permute.xlu0 %1600
      %1602 = vrot.lane.b32.xlu0 %v1516, 56
      %v1603 = vpop.permute.xlu0 %1602
      %1604 = vrot.lane.b32.xlu0 %v1517, 56
      %v1605 = vpop.permute.xlu0 %1604
      %1606 = vrot.lane.b32.xlu0 %v1518, 56
      %v1607 = vpop.permute.xlu0 %1606
      %1608 = vrot.lane.b32.xlu0 %v1519, 56
      %v1609 = vpop.permute.xlu0 %1608
      %1610 = vrot.lane.b32.xlu0 %v1520, 56
      %v1611 = vpop.permute.xlu0 %1610
      %1612 = vrot.lane.b32.xlu0 %v1521, 56
      %v1613 = vpop.permute.xlu0 %1612
      %1614 = vrot.lane.b32.xlu0 %v1522, 56
      %v1615 = vpop.permute.xlu0 %1614
      %1616 = vrot.lane.b32.xlu0 %v1523, 56
      %v1617 = vpop.permute.xlu0 %1616
      %1618 = vrot.lane.b32.xlu0 %v1524, 56
      %v1619 = vpop.permute.xlu0 %1618
      %1620 = vrot.lane.b32.xlu0 %v1525, 56
      %v1621 = vpop.permute.xlu0 %1620
      %vm1654 = vcmask 523712
      %1655 = vst.msk [vmem:[#allocation2] sm:$0xff] %vm1654, %v1559
      %1656 = vst.msk [vmem:[#allocation2 + $0x8] sm:$0xff] %vm1654, %v1561
      %1657 = vst.msk [vmem:[#allocation2 + $0x10] sm:$0xff] %vm1654, %v1563
      %1658 = vst.msk [vmem:[#allocation2 + $0x18] sm:$0xff] %vm1654, %v1565
      %1659 = vst.msk [vmem:[#allocation2 + $0x20] sm:$0xff] %vm1654, %v1567
      %1660 = vst.msk [vmem:[#allocation2 + $0x28] sm:$0xff] %vm1654, %v1569
      %1661 = vst.msk [vmem:[#allocation2 + $0x30] sm:$0xff] %vm1654, %v1571
      %1662 = vst.msk [vmem:[#allocation2 + $0x38] sm:$0xff] %vm1654, %v1573
      %1663 = vst.msk [vmem:[#allocation2 + $0x40] sm:$0xff] %vm1654, %v1575
      %1664 = vst.msk [vmem:[#allocation2 + $0x48] sm:$0xff] %vm1654, %v1577
      %1665 = vst.msk [vmem:[#allocation2 + $0x50] sm:$0xff] %vm1654, %v1579
      %1666 = vst.msk [vmem:[#allocation2 + $0x58] sm:$0xff] %vm1654, %v1581
      %1667 = vst.msk [vmem:[#allocation2 + $0x60] sm:$0xff] %vm1654, %v1583
      %1668 = vst.msk [vmem:[#allocation2 + $0x68] sm:$0xff] %vm1654, %v1585
      %1669 = vst.msk [vmem:[#allocation2 + $0x70] sm:$0xff] %vm1654, %v1587
      %1670 = vst.msk [vmem:[#allocation2 + $0x78] sm:$0xff] %vm1654, %v1589
      %1671 = vst.msk [vmem:[#allocation2 + $0x80] sm:$0xff] %vm1654, %v1591
      %1672 = vst.msk [vmem:[#allocation2 + $0x88] sm:$0xff] %vm1654, %v1593
      %1673 = vst.msk [vmem:[#allocation2 + $0x90] sm:$0xff] %vm1654, %v1595
      %1674 = vst.msk [vmem:[#allocation2 + $0x98] sm:$0xff] %vm1654, %v1597
      %1675 = vst.msk [vmem:[#allocation2 + $0xa0] sm:$0xff] %vm1654, %v1599
      %1676 = vst.msk [vmem:[#allocation2 + $0xa8] sm:$0xff] %vm1654, %v1601
      %1677 = vst.msk [vmem:[#allocation2 + $0xb0] sm:$0xff] %vm1654, %v1603
      %1678 = vst.msk [vmem:[#allocation2 + $0xb8] sm:$0xff] %vm1654, %v1605
      %1679 = vst.msk [vmem:[#allocation2 + $0xc0] sm:$0xff] %vm1654, %v1607
      %1680 = vst.msk [vmem:[#allocation2 + $0xc8] sm:$0xff] %vm1654, %v1609
      %1681 = vst.msk [vmem:[#allocation2 + $0xd0] sm:$0xff] %vm1654, %v1611
      %1682 = vst.msk [vmem:[#allocation2 + $0xd8] sm:$0xff] %vm1654, %v1613
      %1683 = vst.msk [vmem:[#allocation2 + $0xe0] sm:$0xff] %vm1654, %v1615
      %1684 = vst.msk [vmem:[#allocation2 + $0xe8] sm:$0xff] %vm1654, %v1617
      %1685 = vst.msk [vmem:[#allocation2 + $0xf0] sm:$0xff] %vm1654, %v1619
      %1686 = vst.msk [vmem:[#allocation2 + $0xf8] sm:$0xff] %vm1654, %v1621
      %v1687 = vld [vmem:[%s1300 + $0x2] sm:$0xff]
      %v1688 = vld [vmem:[%s1300 + $0xa] sm:$0xff]
      %v1689 = vld [vmem:[%s1300 + $0x1a] sm:$0xff]
      %v1690 = vld [vmem:[%s1300 + $0x22] sm:$0xff]
      %v1691 = vld [vmem:[%s1300 + $0x32] sm:$0xff]
      %v1692 = vld [vmem:[%s1300 + $0x3a] sm:$0xff]
      %v1693 = vld [vmem:[%s1300 + $0x4a] sm:$0xff]
      %v1694 = vld [vmem:[%s1300 + $0x52] sm:$0xff]
      %v1695 = vld [vmem:[%s1300 + $0x62] sm:$0xff]
      %v1696 = vld [vmem:[%s1300 + $0x6a] sm:$0xff]
      %v1697 = vld [vmem:[%s1300 + $0x7a] sm:$0xff]
      %v1698 = vld [vmem:[%s1300 + $0x82] sm:$0xff]
      %v1699 = vld [vmem:[%s1300 + $0x92] sm:$0xff]
      %v1700 = vld [vmem:[%s1300 + $0x9a] sm:$0xff]
      %v1701 = vld [vmem:[%s1300 + $0xaa] sm:$0xff]
      %v1702 = vld [vmem:[%s1300 + $0xb2] sm:$0xff]
      %v1703 = vld [vmem:[%s1300 + $0xc2] sm:$0xff]
      %v1704 = vld [vmem:[%s1300 + $0xca] sm:$0xff]
      %v1705 = vld [vmem:[%s1300 + $0xda] sm:$0xff]
      %v1706 = vld [vmem:[%s1300 + $0xe2] sm:$0xff]
      %v1707 = vld [vmem:[%s1300 + $0xf2] sm:$0xff]
      %v1708 = vld [vmem:[%s1300 + $0xfa] sm:$0xff]
      %v1709 = vld [vmem:[%s1300 + $0x10a] sm:$0xff]
      %v1710 = vld [vmem:[%s1300 + $0x112] sm:$0xff]
      %v1711 = vld [vmem:[%s1300 + $0x122] sm:$0xff]
      %v1712 = vld [vmem:[%s1300 + $0x12a] sm:$0xff]
      %v1713 = vld [vmem:[%s1300 + $0x13a] sm:$0xff]
      %v1714 = vld [vmem:[%s1300 + $0x142] sm:$0xff]
      %v1715 = vld [vmem:[%s1300 + $0x152] sm:$0xff]
      %v1716 = vld [vmem:[%s1300 + $0x15a] sm:$0xff]
      %v1717 = vld [vmem:[%s1300 + $0x16a] sm:$0xff]
      %v1718 = vld [vmem:[%s1300 + $0x172] sm:$0xff]
      %1751 = vrot.lane.b32.xlu0 %v1687, 64
      %v1752 = vpop.permute.xlu0 %1751
      %1753 = vrot.lane.b32.xlu0 %v1688, 64
      %v1754 = vpop.permute.xlu0 %1753
      %1755 = vrot.lane.b32.xlu0 %v1689, 64
      %v1756 = vpop.permute.xlu0 %1755
      %1757 = vrot.lane.b32.xlu0 %v1690, 64
      %v1758 = vpop.permute.xlu0 %1757
      %1759 = vrot.lane.b32.xlu0 %v1691, 64
      %v1760 = vpop.permute.xlu0 %1759
      %1761 = vrot.lane.b32.xlu0 %v1692, 64
      %v1762 = vpop.permute.xlu0 %1761
      %1763 = vrot.lane.b32.xlu0 %v1693, 64
      %v1764 = vpop.permute.xlu0 %1763
      %1765 = vrot.lane.b32.xlu0 %v1694, 64
      %v1766 = vpop.permute.xlu0 %1765
      %1767 = vrot.lane.b32.xlu0 %v1695, 64
      %v1768 = vpop.permute.xlu0 %1767
      %1769 = vrot.lane.b32.xlu0 %v1696, 64
      %v1770 = vpop.permute.xlu0 %1769
      %1771 = vrot.lane.b32.xlu0 %v1697, 64
      %v1772 = vpop.permute.xlu0 %1771
      %1773 = vrot.lane.b32.xlu0 %v1698, 64
      %v1774 = vpop.permute.xlu0 %1773
      %1775 = vrot.lane.b32.xlu0 %v1699, 64
      %v1776 = vpop.permute.xlu0 %1775
      %1777 = vrot.lane.b32.xlu0 %v1700, 64
      %v1778 = vpop.permute.xlu0 %1777
      %1779 = vrot.lane.b32.xlu0 %v1701, 64
      %v1780 = vpop.permute.xlu0 %1779
      %1781 = vrot.lane.b32.xlu0 %v1702, 64
      %v1782 = vpop.permute.xlu0 %1781
      %1783 = vrot.lane.b32.xlu0 %v1703, 64
      %v1784 = vpop.permute.xlu0 %1783
      %1785 = vrot.lane.b32.xlu0 %v1704, 64
      %v1786 = vpop.permute.xlu0 %1785
      %1787 = vrot.lane.b32.xlu0 %v1705, 64
      %v1788 = vpop.permute.xlu0 %1787
      %1789 = vrot.lane.b32.xlu0 %v1706, 64
      %v1790 = vpop.permute.xlu0 %1789
      %1791 = vrot.lane.b32.xlu0 %v1707, 64
      %v1792 = vpop.permute.xlu0 %1791
      %1793 = vrot.lane.b32.xlu0 %v1708, 64
      %v1794 = vpop.permute.xlu0 %1793
      %1795 = vrot.lane.b32.xlu0 %v1709, 64
      %v1796 = vpop.permute.xlu0 %1795
      %1797 = vrot.lane.b32.xlu0 %v1710, 64
      %v1798 = vpop.permute.xlu0 %1797
      %1799 = vrot.lane.b32.xlu0 %v1711, 64
      %v1800 = vpop.permute.xlu0 %1799
      %1801 = vrot.lane.b32.xlu0 %v1712, 64
      %v1802 = vpop.permute.xlu0 %1801
      %1803 = vrot.lane.b32.xlu0 %v1713, 64
      %v1804 = vpop.permute.xlu0 %1803
      %1805 = vrot.lane.b32.xlu0 %v1714, 64
      %v1806 = vpop.permute.xlu0 %1805
      %1807 = vrot.lane.b32.xlu0 %v1715, 64
      %v1808 = vpop.permute.xlu0 %1807
      %1809 = vrot.lane.b32.xlu0 %v1716, 64
      %v1810 = vpop.permute.xlu0 %1809
      %1811 = vrot.lane.b32.xlu0 %v1717, 64
      %v1812 = vpop.permute.xlu0 %1811
      %1813 = vrot.lane.b32.xlu0 %v1718, 64
      %v1814 = vpop.permute.xlu0 %1813
      %vm1847 = vcmask 589312
      %1848 = vst.msk [vmem:[#allocation2] sm:$0xff] %vm1847, %v1752
      %1849 = vst.msk [vmem:[#allocation2 + $0x8] sm:$0xff] %vm1847, %v1754
      %1850 = vst.msk [vmem:[#allocation2 + $0x10] sm:$0xff] %vm1847, %v1756
      %1851 = vst.msk [vmem:[#allocation2 + $0x18] sm:$0xff] %vm1847, %v1758
      %1852 = vst.msk [vmem:[#allocation2 + $0x20] sm:$0xff] %vm1847, %v1760
      %1853 = vst.msk [vmem:[#allocation2 + $0x28] sm:$0xff] %vm1847, %v1762
      %1854 = vst.msk [vmem:[#allocation2 + $0x30] sm:$0xff] %vm1847, %v1764
      %1855 = vst.msk [vmem:[#allocation2 + $0x38] sm:$0xff] %vm1847, %v1766
      %1856 = vst.msk [vmem:[#allocation2 + $0x40] sm:$0xff] %vm1847, %v1768
      %1857 = vst.msk [vmem:[#allocation2 + $0x48] sm:$0xff] %vm1847, %v1770
      %1858 = vst.msk [vmem:[#allocation2 + $0x50] sm:$0xff] %vm1847, %v1772
      %1859 = vst.msk [vmem:[#allocation2 + $0x58] sm:$0xff] %vm1847, %v1774
      %1860 = vst.msk [vmem:[#allocation2 + $0x60] sm:$0xff] %vm1847, %v1776
      %1861 = vst.msk [vmem:[#allocation2 + $0x68] sm:$0xff] %vm1847, %v1778
      %1862 = vst.msk [vmem:[#allocation2 + $0x70] sm:$0xff] %vm1847, %v1780
      %1863 = vst.msk [vmem:[#allocation2 + $0x78] sm:$0xff] %vm1847, %v1782
      %1864 = vst.msk [vmem:[#allocation2 + $0x80] sm:$0xff] %vm1847, %v1784
      %1865 = vst.msk [vmem:[#allocation2 + $0x88] sm:$0xff] %vm1847, %v1786
      %1866 = vst.msk [vmem:[#allocation2 + $0x90] sm:$0xff] %vm1847, %v1788
      %1867 = vst.msk [vmem:[#allocation2 + $0x98] sm:$0xff] %vm1847, %v1790
      %1868 = vst.msk [vmem:[#allocation2 + $0xa0] sm:$0xff] %vm1847, %v1792
      %1869 = vst.msk [vmem:[#allocation2 + $0xa8] sm:$0xff] %vm1847, %v1794
      %1870 = vst.msk [vmem:[#allocation2 + $0xb0] sm:$0xff] %vm1847, %v1796
      %1871 = vst.msk [vmem:[#allocation2 + $0xb8] sm:$0xff] %vm1847, %v1798
      %1872 = vst.msk [vmem:[#allocation2 + $0xc0] sm:$0xff] %vm1847, %v1800
      %1873 = vst.msk [vmem:[#allocation2 + $0xc8] sm:$0xff] %vm1847, %v1802
      %1874 = vst.msk [vmem:[#allocation2 + $0xd0] sm:$0xff] %vm1847, %v1804
      %1875 = vst.msk [vmem:[#allocation2 + $0xd8] sm:$0xff] %vm1847, %v1806
      %1876 = vst.msk [vmem:[#allocation2 + $0xe0] sm:$0xff] %vm1847, %v1808
      %1877 = vst.msk [vmem:[#allocation2 + $0xe8] sm:$0xff] %vm1847, %v1810
      %1878 = vst.msk [vmem:[#allocation2 + $0xf0] sm:$0xff] %vm1847, %v1812
      %1879 = vst.msk [vmem:[#allocation2 + $0xf8] sm:$0xff] %vm1847, %v1814
      %v1880 = vld [vmem:[#allocation2] sm:$0xff]
      %v1881 = vld [vmem:[#allocation2 + $0x8] sm:$0xff]
      %v1882 = vld [vmem:[#allocation2 + $0x10] sm:$0xff]
      %v1883 = vld [vmem:[#allocation2 + $0x18] sm:$0xff]
      %v1884 = vld [vmem:[#allocation2 + $0x20] sm:$0xff]
      %v1885 = vld [vmem:[#allocation2 + $0x28] sm:$0xff]
      %v1886 = vld [vmem:[#allocation2 + $0x30] sm:$0xff]
      %v1887 = vld [vmem:[#allocation2 + $0x38] sm:$0xff]
      %v1888 = vld [vmem:[#allocation2 + $0x40] sm:$0xff]
      %v1889 = vld [vmem:[#allocation2 + $0x48] sm:$0xff]
      %v1890 = vld [vmem:[#allocation2 + $0x50] sm:$0xff]
      %v1891 = vld [vmem:[#allocation2 + $0x58] sm:$0xff]
      %v1892 = vld [vmem:[#allocation2 + $0x60] sm:$0xff]
      %v1893 = vld [vmem:[#allocation2 + $0x68] sm:$0xff]
      %v1894 = vld [vmem:[#allocation2 + $0x70] sm:$0xff]
      %v1895 = vld [vmem:[#allocation2 + $0x78] sm:$0xff]
      %v1896 = vld [vmem:[#allocation2 + $0x80] sm:$0xff]
      %v1897 = vld [vmem:[#allocation2 + $0x88] sm:$0xff]
      %v1898 = vld [vmem:[#allocation2 + $0x90] sm:$0xff]
      %v1899 = vld [vmem:[#allocation2 + $0x98] sm:$0xff]
      %v1900 = vld [vmem:[#allocation2 + $0xa0] sm:$0xff]
      %v1901 = vld [vmem:[#allocation2 + $0xa8] sm:$0xff]
      %v1902 = vld [vmem:[#allocation2 + $0xb0] sm:$0xff]
      %v1903 = vld [vmem:[#allocation2 + $0xb8] sm:$0xff]
      %v1904 = vld [vmem:[#allocation2 + $0xc0] sm:$0xff]
      %v1905 = vld [vmem:[#allocation2 + $0xc8] sm:$0xff]
      %v1906 = vld [vmem:[#allocation2 + $0xd0] sm:$0xff]
      %v1907 = vld [vmem:[#allocation2 + $0xd8] sm:$0xff]
      %v1908 = vld [vmem:[#allocation2 + $0xe0] sm:$0xff]
      %v1909 = vld [vmem:[#allocation2 + $0xe8] sm:$0xff]
      %v1910 = vld [vmem:[#allocation2 + $0xf0] sm:$0xff]
      %v1911 = vld [vmem:[#allocation2 + $0xf8] sm:$0xff]
      %vm1912 = vcmask 588800
      %v1914 = vsel %vm1912, %v1880, 0
      %v1917 = vsel %vm1912, %v1881, 0
      %v1920 = vsel %vm1912, %v1882, 0
      %v1923 = vsel %vm1912, %v1883, 0
      %v1926 = vsel %vm1912, %v1884, 0
      %v1929 = vsel %vm1912, %v1885, 0
      %v1932 = vsel %vm1912, %v1886, 0
      %v1935 = vsel %vm1912, %v1887, 0
      %v1938 = vsel %vm1912, %v1888, 0
      %v1941 = vsel %vm1912, %v1889, 0
      %v1944 = vsel %vm1912, %v1890, 0
      %v1947 = vsel %vm1912, %v1891, 0
      %v1950 = vsel %vm1912, %v1892, 0
      %v1953 = vsel %vm1912, %v1893, 0
      %v1956 = vsel %vm1912, %v1894, 0
      %v1959 = vsel %vm1912, %v1895, 0
      %v1962 = vsel %vm1912, %v1896, 0
      %v1965 = vsel %vm1912, %v1897, 0
      %v1968 = vsel %vm1912, %v1898, 0
      %v1971 = vsel %vm1912, %v1899, 0
      %v1974 = vsel %vm1912, %v1900, 0
      %v1977 = vsel %vm1912, %v1901, 0
      %v1980 = vsel %vm1912, %v1902, 0
      %v1983 = vsel %vm1912, %v1903, 0
      %v1986 = vsel %vm1912, %v1904, 0
      %v1989 = vsel %vm1912, %v1905, 0
      %v1992 = vsel %vm1912, %v1906, 0
      %v1995 = vsel %vm1912, %v1907, 0
      %v1998 = vsel %vm1912, %v1908, 0
      %v2001 = vsel %vm1912, %v1909, 0
      %v2004 = vsel %vm1912, %v1910, 0
      %v2007 = vsel %vm1912, %v1911, 0
      %2009 = vmatpush.msra.mxu0 0.0
      %2010 = vmatpush.msra.mxu0 0.0
      %2011 = vmatpush.msra.mxu0 0.0
      %2012 = vmatpush.msra.mxu0 0.0
      %2013 = vmatpush.msra.mxu0 0.0
      %2014 = vmatpush.msra.mxu0 0.0
      %2015 = vmatpush.msra.mxu0 0.0
      %2016 = vmatpush.msra.mxu0 %v223
      %2017 = vmatpush.msra.mxu0 %v222
      %2018 = vmatpush.msra.mxu0 %v221
      %2019 = vmatpush.msra.mxu0 %v220
      %2020 = vmatpush.msra.mxu0 %v219
      %2021 = vmatpush.msra.mxu0 %v218
      %2022 = vmatpush.msra.mxu0 %v217
      %2023 = vmatpush.msra.mxu0 %v216
      %2024 = vmatpush.msra.mxu0 %v215
      %2025 = vmatmul.f32.gmra.mxu0 %v1914
      %v2026 = vpop.f32.mrf.mxu0
      %v2027 = vadd.f32 0.0, %v2026
      %2028 = vmatmul.f32.gmra.mxu0 %v1917
      %v2029 = vpop.f32.mrf.mxu0
      %v2030 = vadd.f32 0.0, %v2029
      %2031 = vmatmul.f32.gmra.mxu0 %v1920
      %v2032 = vpop.f32.mrf.mxu0
      %v2033 = vadd.f32 0.0, %v2032
      %2034 = vmatmul.f32.gmra.mxu0 %v1923
      %v2035 = vpop.f32.mrf.mxu0
      %v2036 = vadd.f32 0.0, %v2035
      %2037 = vmatmul.f32.gmra.mxu0 %v1926
      %v2038 = vpop.f32.mrf.mxu0
      %v2039 = vadd.f32 0.0, %v2038
      %2040 = vmatmul.f32.gmra.mxu0 %v1929
      %v2041 = vpop.f32.mrf.mxu0
      %v2042 = vadd.f32 0.0, %v2041
      %2043 = vmatmul.f32.gmra.mxu0 %v1932
      %v2044 = vpop.f32.mrf.mxu0
      %v2045 = vadd.f32 0.0, %v2044
      %2046 = vmatmul.f32.gmra.mxu0 %v1935
      %v2047 = vpop.f32.mrf.mxu0
      %v2048 = vadd.f32 0.0, %v2047
      %2049 = vmatmul.f32.gmra.mxu0 %v1938
      %v2050 = vpop.f32.mrf.mxu0
      %v2051 = vadd.f32 0.0, %v2050
      %2052 = vmatmul.f32.gmra.mxu0 %v1941
      %v2053 = vpop.f32.mrf.mxu0
      %v2054 = vadd.f32 0.0, %v2053
      %2055 = vmatmul.f32.gmra.mxu0 %v1944
      %v2056 = vpop.f32.mrf.mxu0
      %v2057 = vadd.f32 0.0, %v2056
      %2058 = vmatmul.f32.gmra.mxu0 %v1947
      %v2059 = vpop.f32.mrf.mxu0
      %v2060 = vadd.f32 0.0, %v2059
      %2061 = vmatmul.f32.gmra.mxu0 %v1950
      %v2062 = vpop.f32.mrf.mxu0
      %v2063 = vadd.f32 0.0, %v2062
      %2064 = vmatmul.f32.gmra.mxu0 %v1953
      %v2065 = vpop.f32.mrf.mxu0
      %v2066 = vadd.f32 0.0, %v2065
      %2067 = vmatmul.f32.gmra.mxu0 %v1956
      %v2068 = vpop.f32.mrf.mxu0
      %v2069 = vadd.f32 0.0, %v2068
      %2070 = vmatmul.f32.gmra.mxu0 %v1959
      %v2071 = vpop.f32.mrf.mxu0
      %v2072 = vadd.f32 0.0, %v2071
      %2073 = vmatmul.f32.gmra.mxu0 %v1962
      %v2074 = vpop.f32.mrf.mxu0
      %v2075 = vadd.f32 0.0, %v2074
      %2076 = vmatmul.f32.gmra.mxu0 %v1965
      %v2077 = vpop.f32.mrf.mxu0
      %v2078 = vadd.f32 0.0, %v2077
      %2079 = vmatmul.f32.gmra.mxu0 %v1968
      %v2080 = vpop.f32.mrf.mxu0
      %v2081 = vadd.f32 0.0, %v2080
      %2082 = vmatmul.f32.gmra.mxu0 %v1971
      %v2083 = vpop.f32.mrf.mxu0
      %v2084 = vadd.f32 0.0, %v2083
      %2085 = vmatmul.f32.gmra.mxu0 %v1974
      %v2086 = vpop.f32.mrf.mxu0
      %v2087 = vadd.f32 0.0, %v2086
      %2088 = vmatmul.f32.gmra.mxu0 %v1977
      %v2089 = vpop.f32.mrf.mxu0
      %v2090 = vadd.f32 0.0, %v2089
      %2091 = vmatmul.f32.gmra.mxu0 %v1980
      %v2092 = vpop.f32.mrf.mxu0
      %v2093 = vadd.f32 0.0, %v2092
      %2094 = vmatmul.f32.gmra.mxu0 %v1983
      %v2095 = vpop.f32.mrf.mxu0
      %v2096 = vadd.f32 0.0, %v2095
      %2097 = vmatmul.f32.gmra.mxu0 %v1986
      %v2098 = vpop.f32.mrf.mxu0
      %v2099 = vadd.f32 0.0, %v2098
      %2100 = vmatmul.f32.gmra.mxu0 %v1989
      %v2101 = vpop.f32.mrf.mxu0
      %v2102 = vadd.f32 0.0, %v2101
      %2103 = vmatmul.f32.gmra.mxu0 %v1992
      %v2104 = vpop.f32.mrf.mxu0
      %v2105 = vadd.f32 0.0, %v2104
      %2106 = vmatmul.f32.gmra.mxu0 %v1995
      %v2107 = vpop.f32.mrf.mxu0
      %v2108 = vadd.f32 0.0, %v2107
      %2109 = vmatmul.f32.gmra.mxu0 %v1998
      %v2110 = vpop.f32.mrf.mxu0
      %v2111 = vadd.f32 0.0, %v2110
      %2112 = vmatmul.f32.gmra.mxu0 %v2001
      %v2113 = vpop.f32.mrf.mxu0
      %v2114 = vadd.f32 0.0, %v2113
      %2115 = vmatmul.f32.gmra.mxu0 %v2004
      %v2116 = vpop.f32.mrf.mxu0
      %v2117 = vadd.f32 0.0, %v2116
      %2118 = vmatmul.f32.gmra.mxu0 %v2007
      %v2119 = vpop.f32.mrf.mxu0
      %v2120 = vadd.f32 0.0, %v2119
      %2121 = vdwg.mxu0
      %v2122 = vsel %vm224, %v2027, 0.0
      %v2123 = vsel %vm224, %v2030, 0.0
      %v2124 = vadd.f32 %v2122, %v2123
      %v2125 = vsel %vm224, %v2033, 0.0
      %v2126 = vadd.f32 %v2124, %v2125
      %v2127 = vsel %vm224, %v2036, 0.0
      %v2128 = vadd.f32 %v2126, %v2127
      %v2129 = vsel %vm224, %v2039, 0.0
      %v2130 = vadd.f32 %v2128, %v2129
      %v2131 = vsel %vm224, %v2042, 0.0
      %v2132 = vadd.f32 %v2130, %v2131
      %v2133 = vsel %vm224, %v2045, 0.0
      %v2134 = vadd.f32 %v2132, %v2133
      %v2135 = vsel %vm224, %v2048, 0.0
      %v2136 = vadd.f32 %v2134, %v2135
      %v2137 = vsel %vm224, %v2051, 0.0
      %v2138 = vadd.f32 %v2136, %v2137
      %v2139 = vsel %vm224, %v2054, 0.0
      %v2140 = vadd.f32 %v2138, %v2139
      %v2141 = vsel %vm224, %v2057, 0.0
      %v2142 = vadd.f32 %v2140, %v2141
      %v2143 = vsel %vm224, %v2060, 0.0
      %v2144 = vadd.f32 %v2142, %v2143
      %v2145 = vsel %vm224, %v2063, 0.0
      %v2146 = vadd.f32 %v2144, %v2145
      %v2147 = vsel %vm224, %v2066, 0.0
      %v2148 = vadd.f32 %v2146, %v2147
      %v2149 = vsel %vm224, %v2069, 0.0
      %v2150 = vadd.f32 %v2148, %v2149
      %v2151 = vsel %vm224, %v2072, 0.0
      %v2152 = vadd.f32 %v2150, %v2151
      %v2153 = vsel %vm224, %v2075, 0.0
      %v2154 = vadd.f32 %v2152, %v2153
      %v2155 = vsel %vm224, %v2078, 0.0
      %v2156 = vadd.f32 %v2154, %v2155
      %v2157 = vsel %vm224, %v2081, 0.0
      %v2158 = vadd.f32 %v2156, %v2157
      %v2159 = vsel %vm224, %v2084, 0.0
      %v2160 = vadd.f32 %v2158, %v2159
      %v2161 = vsel %vm224, %v2087, 0.0
      %v2162 = vadd.f32 %v2160, %v2161
      %v2163 = vsel %vm224, %v2090, 0.0
      %v2164 = vadd.f32 %v2162, %v2163
      %v2165 = vsel %vm224, %v2093, 0.0
      %v2166 = vadd.f32 %v2164, %v2165
      %v2167 = vsel %vm224, %v2096, 0.0
      %v2168 = vadd.f32 %v2166, %v2167
      %v2169 = vsel %vm224, %v2099, 0.0
      %v2170 = vadd.f32 %v2168, %v2169
      %v2171 = vsel %vm224, %v2102, 0.0
      %v2172 = vadd.f32 %v2170, %v2171
      %v2173 = vsel %vm224, %v2105, 0.0
      %v2174 = vadd.f32 %v2172, %v2173
      %v2175 = vsel %vm224, %v2108, 0.0
      %v2176 = vadd.f32 %v2174, %v2175
      %v2177 = vsel %vm224, %v2111, 0.0
      %v2178 = vadd.f32 %v2176, %v2177
      %v2179 = vsel %vm224, %v2114, 0.0
      %v2180 = vadd.f32 %v2178, %v2179
      %v2181 = vsel %vm224, %v2117, 0.0
      %v2182 = vadd.f32 %v2180, %v2181
      %v2183 = vsel %vm224, %v2120, 0.0
      %v2184 = vadd.f32 %v2182, %v2183
      %v2185 = vrot.slane %v2184, 4
      %v2186 = vadd.f32 %v2184, %v2185
      %v2187 = vrot.slane %v2186, 2
      %v2188 = vadd.f32 %v2186, %v2187
      %v2189 = vrot.slane %v2188, 1
      %v2190 = vadd.f32 %v2188, %v2189
      %v2191 = vadd.f32 %v2190, 0.0
      %v2192 = vmul.f32 %v2027, %v2027
      %v2193 = vmul.f32 %v2030, %v2030
      %v2194 = vmul.f32 %v2033, %v2033
      %v2195 = vmul.f32 %v2036, %v2036
      %v2196 = vmul.f32 %v2039, %v2039
      %v2197 = vmul.f32 %v2042, %v2042
      %v2198 = vmul.f32 %v2045, %v2045
      %v2199 = vmul.f32 %v2048, %v2048
      %v2200 = vmul.f32 %v2051, %v2051
      %v2201 = vmul.f32 %v2054, %v2054
      %v2202 = vmul.f32 %v2057, %v2057
      %v2203 = vmul.f32 %v2060, %v2060
      %v2204 = vmul.f32 %v2063, %v2063
      %v2205 = vmul.f32 %v2066, %v2066
      %v2206 = vmul.f32 %v2069, %v2069
      %v2207 = vmul.f32 %v2072, %v2072
      %v2208 = vmul.f32 %v2075, %v2075
      %v2209 = vmul.f32 %v2078, %v2078
      %v2210 = vmul.f32 %v2081, %v2081
      %v2211 = vmul.f32 %v2084, %v2084
      %v2212 = vmul.f32 %v2087, %v2087
      %v2213 = vmul.f32 %v2090, %v2090
      %v2214 = vmul.f32 %v2093, %v2093
      %v2215 = vmul.f32 %v2096, %v2096
      %v2216 = vmul.f32 %v2099, %v2099
      %v2217 = vmul.f32 %v2102, %v2102
      %v2218 = vmul.f32 %v2105, %v2105
      %v2219 = vmul.f32 %v2108, %v2108
      %v2220 = vmul.f32 %v2111, %v2111
      %v2221 = vmul.f32 %v2114, %v2114
      %v2222 = vmul.f32 %v2117, %v2117
      %v2223 = vmul.f32 %v2120, %v2120
      %v2224 = vsel %vm224, %v2192, 0.0
      %v2225 = vsel %vm224, %v2193, 0.0
      %v2226 = vadd.f32 %v2224, %v2225
      %v2227 = vsel %vm224, %v2194, 0.0
      %v2228 = vadd.f32 %v2226, %v2227
      %v2229 = vsel %vm224, %v2195, 0.0
      %v2230 = vadd.f32 %v2228, %v2229
      %v2231 = vsel %vm224, %v2196, 0.0
      %v2232 = vadd.f32 %v2230, %v2231
      %v2233 = vsel %vm224, %v2197, 0.0
      %v2234 = vadd.f32 %v2232, %v2233
      %v2235 = vsel %vm224, %v2198, 0.0
      %v2236 = vadd.f32 %v2234, %v2235
      %v2237 = vsel %vm224, %v2199, 0.0
      %v2238 = vadd.f32 %v2236, %v2237
      %v2239 = vsel %vm224, %v2200, 0.0
      %v2240 = vadd.f32 %v2238, %v2239
      %v2241 = vsel %vm224, %v2201, 0.0
      %v2242 = vadd.f32 %v2240, %v2241
      %v2243 = vsel %vm224, %v2202, 0.0
      %v2244 = vadd.f32 %v2242, %v2243
      %v2245 = vsel %vm224, %v2203, 0.0
      %v2246 = vadd.f32 %v2244, %v2245
      %v2247 = vsel %vm224, %v2204, 0.0
      %v2248 = vadd.f32 %v2246, %v2247
      %v2249 = vsel %vm224, %v2205, 0.0
      %v2250 = vadd.f32 %v2248, %v2249
      %v2251 = vsel %vm224, %v2206, 0.0
      %v2252 = vadd.f32 %v2250, %v2251
      %v2253 = vsel %vm224, %v2207, 0.0
      %v2254 = vadd.f32 %v2252, %v2253
      %v2255 = vsel %vm224, %v2208, 0.0
      %v2256 = vadd.f32 %v2254, %v2255
      %v2257 = vsel %vm224, %v2209, 0.0
      %v2258 = vadd.f32 %v2256, %v2257
      %v2259 = vsel %vm224, %v2210, 0.0
      %v2260 = vadd.f32 %v2258, %v2259
      %v2261 = vsel %vm224, %v2211, 0.0
      %v2262 = vadd.f32 %v2260, %v2261
      %v2263 = vsel %vm224, %v2212, 0.0
      %v2264 = vadd.f32 %v2262, %v2263
      %v2265 = vsel %vm224, %v2213, 0.0
      %v2266 = vadd.f32 %v2264, %v2265
      %v2267 = vsel %vm224, %v2214, 0.0
      %v2268 = vadd.f32 %v2266, %v2267
      %v2269 = vsel %vm224, %v2215, 0.0
      %v2270 = vadd.f32 %v2268, %v2269
      %v2271 = vsel %vm224, %v2216, 0.0
      %v2272 = vadd.f32 %v2270, %v2271
      %v2273 = vsel %vm224, %v2217, 0.0
      %v2274 = vadd.f32 %v2272, %v2273
      %v2275 = vsel %vm224, %v2218, 0.0
      %v2276 = vadd.f32 %v2274, %v2275
      %v2277 = vsel %vm224, %v2219, 0.0
      %v2278 = vadd.f32 %v2276, %v2277
      %v2279 = vsel %vm224, %v2220, 0.0
      %v2280 = vadd.f32 %v2278, %v2279
      %v2281 = vsel %vm224, %v2221, 0.0
      %v2282 = vadd.f32 %v2280, %v2281
      %v2283 = vsel %vm224, %v2222, 0.0
      %v2284 = vadd.f32 %v2282, %v2283
      %v2285 = vsel %vm224, %v2223, 0.0
      %v2286 = vadd.f32 %v2284, %v2285
      %v2287 = vrot.slane %v2286, 4
      %v2288 = vadd.f32 %v2286, %v2287
      %v2289 = vrot.slane %v2288, 2
      %v2290 = vadd.f32 %v2288, %v2289
      %v2291 = vrot.slane %v2290, 1
      %v2292 = vadd.f32 %v2290, %v2291
      %v2293 = vadd.f32 %v2292, 0.0
      %s2294 = scalar_lea.vmem %s208, 24
      %2295 = vst.msk [vmem:[%s2294 + $0x1] sm:$0xff] %vm224, %v2027
      %2296 = vst.msk [vmem:[%s2294 + $0x9] sm:$0xff] %vm224, %v2030
      %2297 = vst.msk [vmem:[%s2294 + $0x19] sm:$0xff] %vm224, %v2033
      %2298 = vst.msk [vmem:[%s2294 + $0x21] sm:$0xff] %vm224, %v2036
      %2299 = vst.msk [vmem:[%s2294 + $0x31] sm:$0xff] %vm224, %v2039
      %2300 = vst.msk [vmem:[%s2294 + $0x39] sm:$0xff] %vm224, %v2042
      %2301 = vst.msk [vmem:[%s2294 + $0x49] sm:$0xff] %vm224, %v2045
      %2302 = vst.msk [vmem:[%s2294 + $0x51] sm:$0xff] %vm224, %v2048
      %2303 = vst.msk [vmem:[%s2294 + $0x61] sm:$0xff] %vm224, %v2051
      %2304 = vst.msk [vmem:[%s2294 + $0x69] sm:$0xff] %vm224, %v2054
      %2305 = vst.msk [vmem:[%s2294 + $0x79] sm:$0xff] %vm224, %v2057
      %2306 = vst.msk [vmem:[%s2294 + $0x81] sm:$0xff] %vm224, %v2060
      %2307 = vst.msk [vmem:[%s2294 + $0x91] sm:$0xff] %vm224, %v2063
      %2308 = vst.msk [vmem:[%s2294 + $0x99] sm:$0xff] %vm224, %v2066
      %2309 = vst.msk [vmem:[%s2294 + $0xa9] sm:$0xff] %vm224, %v2069
      %2310 = vst.msk [vmem:[%s2294 + $0xb1] sm:$0xff] %vm224, %v2072
      %2311 = vst.msk [vmem:[%s2294 + $0xc1] sm:$0xff] %vm224, %v2075
      %2312 = vst.msk [vmem:[%s2294 + $0xc9] sm:$0xff] %vm224, %v2078
      %2313 = vst.msk [vmem:[%s2294 + $0xd9] sm:$0xff] %vm224, %v2081
      %2314 = vst.msk [vmem:[%s2294 + $0xe1] sm:$0xff] %vm224, %v2084
      %2315 = vst.msk [vmem:[%s2294 + $0xf1] sm:$0xff] %vm224, %v2087
      %2316 = vst.msk [vmem:[%s2294 + $0xf9] sm:$0xff] %vm224, %v2090
      %2317 = vst.msk [vmem:[%s2294 + $0x109] sm:$0xff] %vm224, %v2093
      %2318 = vst.msk [vmem:[%s2294 + $0x111] sm:$0xff] %vm224, %v2096
      %2319 = vst.msk [vmem:[%s2294 + $0x121] sm:$0xff] %vm224, %v2099
      %2320 = vst.msk [vmem:[%s2294 + $0x129] sm:$0xff] %vm224, %v2102
      %2321 = vst.msk [vmem:[%s2294 + $0x139] sm:$0xff] %vm224, %v2105
      %2322 = vst.msk [vmem:[%s2294 + $0x141] sm:$0xff] %vm224, %v2108
      %2323 = vst.msk [vmem:[%s2294 + $0x151] sm:$0xff] %vm224, %v2111
      %2324 = vst.msk [vmem:[%s2294 + $0x159] sm:$0xff] %vm224, %v2114
      %2325 = vst.msk [vmem:[%s2294 + $0x169] sm:$0xff] %vm224, %v2117
      %2326 = vst.msk [vmem:[%s2294 + $0x171] sm:$0xff] %vm224, %v2120
      %2327 = vst.msk [vmem:[%s211] sm:$0x1] %vm233, %v2191
      %2328 = vst.msk [vmem:[%s214] sm:$0x1] %vm233, %v2293
      %p2329 = scmp.lt.s32.totalorder %s16, 1
      %s2330 = scalar_select %p2329, %s16, 1
      %s2331 = smul.addr %s2330, 54
      %s2332 = smul.addr %s2331, 8
      %s2333 = scalar_lea.vmem %s2, %s2332
      %p2334 = scmp.lt.s32.totalorder %s16, 1
      %s2335 = scalar_select %p2334, %s16, 1
      %s2336 = scalar_lea.vmem %s3, %s2335
      %p2337 = scmp.lt.s32.totalorder %s16, 1
      %s2338 = scalar_select %p2337, %s16, 1
      %s2339 = scalar_lea.vmem %s4, %s2338
      // Predicated region
      $region29: #{residual_block_pallas.3} parent=27 // pred_check
        %p2340 = pneg %p81
      $region30: #{residual_block_pallas.3} parent=27 // pred_check_branch
        %2342 = sbr.rel (%p2340) target = $region32
      $region31: #{residual_block_pallas.3} parent=27 // pred_region
        _
      $region32: #{residual_block_pallas.3} parent=27 // pred_fallthru
        _
      // Predicated region
      $region33: #{residual_block_pallas.3} parent=27 // pred_check
        %p2343 = pneg %p107
      $region34: #{residual_block_pallas.3} parent=27 // pred_check_branch
        %2345 = sbr.rel (%p2343) target = $region36
      $region35: #{residual_block_pallas.3} parent=27 // pred_region
        _
      $region36: #{residual_block_pallas.3} parent=27 // pred_fallthru
        _
      // Predicated region
      $region37: #{residual_block_pallas.3} parent=27 // pred_check
        %p2346 = pneg %p133
      $region38: #{residual_block_pallas.3} parent=27 // pred_check_branch
        %2348 = sbr.rel (%p2346) target = $region40
      $region39: #{residual_block_pallas.3} parent=27 // pred_region
        _
      $region40: #{residual_block_pallas.3} parent=27 // pred_fallthru
        _
    $region28: #{residual_block_pallas.3} parent=5 // pred_fallthru
      _
    %p2349 = scmp.le.s32.totalorder 2, %s11
    // Predicated region
    $region41: #{residual_block_pallas.3} parent=5 // pred_check
      %p2350 = pneg %p2349
    $region42: #{residual_block_pallas.3} parent=5 // pred_check_branch
      %2352 = sbr.rel (%p2350) target = $region44
    $region43: #{residual_block_pallas.3} parent=5 // pred_region
      %s2353 = ssub.s32 %s11, 2
      // Predicated region
      $region45: #{residual_block_pallas.3} parent=43 // pred_check
        %p2354 = pneg %p87
      $region46: #{residual_block_pallas.3} parent=43 // pred_check_branch
        %2356 = sbr.rel (%p2354) target = $region48
      $region47: #{residual_block_pallas.3} parent=43 // pred_region
        %p2357 = scmp.lt.s32.totalorder %s17, 1
        %s2358 = scalar_select %p2357, %s17, 1
        %s2359 = smul.addr %s2358, 54
        %s2360 = smul.addr %s2359, 8
        %s2361 = scalar_lea.vmem %s2, %s2360
      $region48: #{residual_block_pallas.3} parent=43 // pred_fallthru
        _
      // Predicated region
      $region49: #{residual_block_pallas.3} parent=43 // pred_check
        %p2362 = pneg %p113
      $region50: #{residual_block_pallas.3} parent=43 // pred_check_branch
        %2364 = sbr.rel (%p2362) target = $region52
      $region51: #{residual_block_pallas.3} parent=43 // pred_region
        %p2365 = scmp.lt.s32.totalorder %s17, 1
        %s2366 = scalar_select %p2365, %s17, 1
        %s2367 = scalar_lea.vmem %s3, %s2366
      $region52: #{residual_block_pallas.3} parent=43 // pred_fallthru
        _
      // Predicated region
      $region53: #{residual_block_pallas.3} parent=43 // pred_check
        %p2368 = pneg %p139
      $region54: #{residual_block_pallas.3} parent=43 // pred_check_branch
        %2370 = sbr.rel (%p2368) target = $region56
      $region55: #{residual_block_pallas.3} parent=43 // pred_region
        %p2371 = scmp.lt.s32.totalorder %s17, 1
        %s2372 = scalar_select %p2371, %s17, 1
        %s2373 = scalar_lea.vmem %s4, %s2372
      $region56: #{residual_block_pallas.3} parent=43 // pred_fallthru
        _
    $region44: #{residual_block_pallas.3} parent=5 // pred_fallthru
      _
  $region6: #{residual_block_pallas.3} parent=0 // loop_footer
    %s15 = sadd.s32 1, %s11
  $region7: #{residual_block_pallas.3} parent=0 // loop_footer_branch
    %10 = sbr.rel target = $region3
  $region8: #{residual_block_pallas.3} parent=0 // loop_exit
    _

</llo_original>
